<compile_context>
chip_gen: v6e
topology: v6e:2x2x1
jax: 0.10.0
libtpu: 0.0.40
codegen_flags: <defaults>
</compile_context>

<pallas_src>
import functools

import jax
import jax.numpy as jnp
from jax.experimental import pallas as pl
from jax.experimental.pallas import tpu as pltpu

HIDDEN = 512


def _round_up(n, m):
    return ((n + m - 1) // m) * m


def _cdiv(a, b):
    return (a + b - 1) // b


def _default_ew_dtype():
    """bf16 elementwise math only where the VPU/EUP support it natively."""
    try:
        kind = jax.devices()[0].device_kind.lower()
        if "v6" in kind or "v7" in kind:
            return jnp.bfloat16
    except Exception:
        pass
    return jnp.float32


def _mish(z):
    """mish(z) = z*tanh(softplus(z)) = z*((1+e^z)^2-1)/((1+e^z)^2+1).

    Single exp + one approx reciprocal.  The min-clamp makes the rational
    factor round to exactly 1.0 for large z, so no extra where/select.
    """
    zc = jnp.minimum(z, 20.0)
    e = jnp.exp(zc)
    s = 1.0 + e
    s2 = s * s
    num = s2 - 1.0
    den = s2 + 1.0
    if z.dtype == jnp.float32:
        inv = pl.reciprocal(den, approx=True)
    else:
        # pl.reciprocal lowers on f32 only; keep just this one op in f32.
        inv = pl.reciprocal(den.astype(jnp.float32), approx=True).astype(z.dtype)
    return z * (num * inv)


def _mish_exact(z):
    return z * jnp.tanh(jax.nn.softplus(z))


def _td3_critic_kernel(s_ref, a_ref,
                       # fused layer-1 params (both heads)
                       w1s_ref, w1a_ref, b1_ref,
                       # head 1 params
                       w21_ref, b21_ref, w31_ref, b31_ref, w41_ref, b41_ref,
                       # head 2 params
                       w22_ref, b22_ref, w32_ref, b32_ref, w42_ref, b42_ref,
                       # output: (TB, 2) = [q1 | q2]
                       q_ref, *, ew_dtype):
    s = s_ref[...].astype(jnp.bfloat16)
    a = a_ref[...].astype(jnp.bfloat16)

    # Fused layer 1 of both heads: one pair of small-K bf16 GEMMs (f32 acc),
    # split-input projection (no concat op, no (B, obs+act) tensor).
    z1 = (jnp.dot(s, w1s_ref[...], preferred_element_type=jnp.float32)
          + jnp.dot(a, w1a_ref[...], preferred_element_type=jnp.float32)
          + b1_ref[...])                                   # (TB, 1024) f32

    def q_head(z1h, w2, b2, w3, b3, w4, b4):
        h = _mish(z1h)                                     # f32 residual carry
        t = jnp.dot(h.astype(jnp.bfloat16), w2[...],
                    preferred_element_type=jnp.float32) + b2[...]
        t = _mish(t.astype(ew_dtype))
        t = jnp.dot(t.astype(jnp.bfloat16), w3[...],
                    preferred_element_type=jnp.float32) + b3[...]
        t = _mish(t.astype(ew_dtype)).astype(jnp.float32)
        r = t + h
        # 512 -> 1 output head as a VPU multiply + lane reduce (no N=1 matmul).
        return jnp.sum(r * w4[...], axis=-1, keepdims=True) + b4[...]

    q_ref[:, 0:1] = q_head(z1[:, :HIDDEN],
                           w21_ref, b21_ref, w31_ref, b31_ref, w41_ref, b41_ref)
    q_ref[:, 1:2] = q_head(z1[:, HIDDEN:],
                           w22_ref, b22_ref, w32_ref, b32_ref, w42_ref, b42_ref)


def td3_critic_forward(state, action, params, *, tb=1024, ew_dtype=None):
    """state: (B, obs), action: (B, act) -> (q1, q2), each (B, 1) float32."""
    B, obs = state.shape
    act = action.shape[1]
    if ew_dtype is None:
        ew_dtype = _default_ew_dtype()

    state = state.astype(jnp.float32)
    action = action.astype(jnp.float32)

    # Batch tiling:
    #  * no padding blow-up: the last tile is ~= the others,
    #  * sublane multiple of 8,
    #  * tile capped at 1024 rows (v7x has only 64 MiB physical VMEM),
    #  * >= 2 grid steps for mid-size batches so v7x's two TensorCores both run.
    tb_cap = max(8, min(tb, 1024))
    num_tiles = _cdiv(B, tb_cap)
    if num_tiles == 1 and B >= 16:
        num_tiles = 2
    tb_eff = _round_up(_cdiv(B, num_tiles), 8)
    B_pad = num_tiles * tb_eff
    if B_pad != B:
        state = jnp.pad(state, ((0, B_pad - B), (0, 0)))
        action = jnp.pad(action, ((0, B_pad - B), (0, 0)))

    def row_spec(d):
        return pl.BlockSpec((tb_eff, d), lambda i: (i, 0))

    def const_spec(arr):
        # Whole array as one block, constant index -> DMA'd once, VMEM-resident.
        return pl.BlockSpec(arr.shape, lambda i: (0, 0))

    h1, h2 = params["heads"]
    weight_args = (params["w1s"], params["w1a"], params["b1"],
                   h1["w2"], h1["b2"], h1["w3"], h1["b3"], h1["w4"], h1["b4"],
                   h2["w2"], h2["b2"], h2["w3"], h2["b3"], h2["w4"], h2["b4"])

    in_specs = ([row_spec(obs), row_spec(act)]
                + [const_spec(w) for w in weight_args])
    out_specs = pl.BlockSpec((tb_eff, 2), lambda i: (i, 0))

    flops = 2 * B_pad * (2 * (obs + act) * HIDDEN
                         + 2 * 2 * HIDDEN * HIDDEN + 2 * HIDDEN)
    transcendentals = 2 * B_pad * 3 * HIDDEN * 2        # exp + reciprocal
    bytes_accessed = (sum(int(w.size) * w.dtype.itemsize for w in weight_args)
                      + B_pad * (obs + act + 2) * 4)

    q = pl.pallas_call(
        functools.partial(_td3_critic_kernel, ew_dtype=ew_dtype),
        out_shape=jax.ShapeDtypeStruct((B_pad, 2), jnp.float32),
        grid=(num_tiles,),
        in_specs=in_specs,
        out_specs=out_specs,
        compiler_params=pltpu.CompilerParams(
            dimension_semantics=("parallel",),
            vmem_limit_bytes=48 * 1024 * 1024),
        cost_estimate=pl.CostEstimate(flops=flops,
                                      transcendentals=transcendentals,
                                      bytes_accessed=bytes_accessed),
    )(state, action, *weight_args)

    return q[:B, 0:1], q[:B, 1:2]


def _init_linear(key, fan_in, fan_out):
    """PyTorch nn.Linear default init: U(-1/sqrt(fan_in), 1/sqrt(fan_in))."""
    kw, kb = jax.random.split(key)
    bound = 1.0 / (fan_in ** 0.5)
    w = jax.random.uniform(kw, (fan_in, fan_out), jnp.float32, -bound, bound)
    b = jax.random.uniform(kb, (1, fan_out), jnp.float32, -bound, bound)
    return w, b


def _init_head(key, obs_size, n_actions):
    k1, k2, k3, k4 = jax.random.split(key, 4)
    w1, b1 = _init_linear(k1, obs_size + n_actions, HIDDEN)
    w2, b2 = _init_linear(k2, HIDDEN, HIDDEN)
    w3, b3 = _init_linear(k3, HIDDEN, HIDDEN)
    w4, b4 = _init_linear(k4, HIDDEN, 1)
    return {
        "w1s": w1[:obs_size].astype(jnp.bfloat16),   # (obs, 512) bf16 (MXU)
        "w1a": w1[obs_size:].astype(jnp.bfloat16),   # (act, 512) bf16 (MXU)
        "b1": b1,                                    # (1, 512)   f32
        "w2": w2.astype(jnp.bfloat16),               # (512, 512) bf16 (MXU)
        "b2": b2,
        "w3": w3.astype(jnp.bfloat16),               # (512, 512) bf16 (MXU)
        "b3": b3,
        "w4": w4.T,                                  # (1, 512)   f32 (VPU reduce)
        "b4": b4,                                    # (1, 1)     f32
    }


def init_params(key, obs_size, n_actions):
    k1, k2 = jax.random.split(key)
    h1 = _init_head(k1, obs_size, n_actions)
    h2 = _init_head(k2, obs_size, n_actions)
    # Fuse both heads' layer-1 projections along the output dim (shared LHS).
    return {
        "w1s": jnp.concatenate([h1.pop("w1s"), h2.pop("w1s")], axis=1),  # (obs, 1024)
        "w1a": jnp.concatenate([h1.pop("w1a"), h2.pop("w1a")], axis=1),  # (act, 1024)
        "b1": jnp.concatenate([h1.pop("b1"), h2.pop("b1")], axis=1),     # (1, 1024)
        "heads": (h1, h2),
    }


def _reference_forward(state, action, params):
    """Pure-JAX f32 reference with exact Mish (same stored weights)."""
    w1s = params["w1s"].astype(jnp.float32)
    w1a = params["w1a"].astype(jnp.float32)
    b1 = params["b1"]

    def head(idx, h):
        sl = slice(idx * HIDDEN, (idx + 1) * HIDDEN)
        x = _mish_exact(state @ w1s[:, sl] + action @ w1a[:, sl] + b1[:, sl])
        w2 = h["w2"].astype(jnp.float32)
        w3 = h["w3"].astype(jnp.float32)
        t = _mish_exact(_mish_exact(x @ w2 + h["b2"]) @ w3 + h["b3"]) + x
        return t @ h["w4"].T + h["b4"]

    h1, h2 = params["heads"]
    return head(0, h1), head(1, h2)


if __name__ == "__main__":
    B, OBS, ACT = 2, 16, 4

    key = jax.random.PRNGKey(0)
    k_state, k_action, k_params = jax.random.split(key, 3)

    state = jax.random.normal(k_state, (B, OBS), jnp.float32)
    action = jax.random.normal(k_action, (B, ACT), jnp.float32)
    params = init_params(k_params, OBS, ACT)

    q1, q2 = td3_critic_forward(state, action, params)
    q1, q2 = jax.block_until_ready((q1, q2))

    r1, r2 = _reference_forward(state, action, params)
    assert q1.shape == (B, 1) and q2.shape == (B, 1)
    assert jnp.allclose(q1, r1, atol=4e-2, rtol=4e-2)
    assert jnp.allclose(q2, r2, atol=4e-2, rtol=4e-2)

    print("KERNEL_OK")
</pallas_src>

<mosaic_0001>
module attributes {stable_mosaic.version = 11 : i64} {
  func.func @_td3_critic_kernel(%arg0: i32, %arg1: memref<8x16xf32, #tpu.memory_space<vmem>>, %arg2: memref<8x4xf32, #tpu.memory_space<vmem>>, %arg3: memref<16x1024xbf16, #tpu.memory_space<vmem>>, %arg4: memref<4x1024xbf16, #tpu.memory_space<vmem>>, %arg5: memref<1x1024xf32, #tpu.memory_space<vmem>>, %arg6: memref<512x512xbf16, #tpu.memory_space<vmem>>, %arg7: memref<1x512xf32, #tpu.memory_space<vmem>>, %arg8: memref<512x512xbf16, #tpu.memory_space<vmem>>, %arg9: memref<1x512xf32, #tpu.memory_space<vmem>>, %arg10: memref<1x512xf32, #tpu.memory_space<vmem>>, %arg11: memref<1x1xf32, #tpu.memory_space<vmem>>, %arg12: memref<512x512xbf16, #tpu.memory_space<vmem>>, %arg13: memref<1x512xf32, #tpu.memory_space<vmem>>, %arg14: memref<512x512xbf16, #tpu.memory_space<vmem>>, %arg15: memref<1x512xf32, #tpu.memory_space<vmem>>, %arg16: memref<1x512xf32, #tpu.memory_space<vmem>>, %arg17: memref<1x1xf32, #tpu.memory_space<vmem>>, %arg18: memref<8x2xf32, #tpu.memory_space<vmem>>) attributes {dimension_semantics = [#tpu.dimension_semantics<parallel>], iteration_bounds = array<i64: 1>, scalar_prefetch = 0 : i64, scratch_operands = 0 : i64, tpu.core_type = #tpu.core_type<tc>, window_params = [{transform_indices = @transform_0, window_bounds = array<i64: 8, 16>}, {transform_indices = @transform_1, window_bounds = array<i64: 8, 4>}, {pipeline_mode = #tpu.pipeline_mode<synchronous>, transform_indices = @transform_2, window_bounds = array<i64: 16, 1024>}, {pipeline_mode = #tpu.pipeline_mode<synchronous>, transform_indices = @transform_3, window_bounds = array<i64: 4, 1024>}, {pipeline_mode = #tpu.pipeline_mode<synchronous>, transform_indices = @transform_4, window_bounds = array<i64: 1, 1024>}, {pipeline_mode = #tpu.pipeline_mode<synchronous>, transform_indices = @transform_5, window_bounds = array<i64: 512, 512>}, {pipeline_mode = #tpu.pipeline_mode<synchronous>, transform_indices = @transform_6, window_bounds = array<i64: 1, 512>}, {pipeline_mode = #tpu.pipeline_mode<synchronous>, transform_indices = @transform_7, window_bounds = array<i64: 512, 512>}, {pipeline_mode = #tpu.pipeline_mode<synchronous>, transform_indices = @transform_8, window_bounds = array<i64: 1, 512>}, {pipeline_mode = #tpu.pipeline_mode<synchronous>, transform_indices = @transform_9, window_bounds = array<i64: 1, 512>}, {pipeline_mode = #tpu.pipeline_mode<synchronous>, transform_indices = @transform_10, window_bounds = array<i64: 1, 1>}, {pipeline_mode = #tpu.pipeline_mode<synchronous>, transform_indices = @transform_11, window_bounds = array<i64: 512, 512>}, {pipeline_mode = #tpu.pipeline_mode<synchronous>, transform_indices = @transform_12, window_bounds = array<i64: 1, 512>}, {pipeline_mode = #tpu.pipeline_mode<synchronous>, transform_indices = @transform_13, window_bounds = array<i64: 512, 512>}, {pipeline_mode = #tpu.pipeline_mode<synchronous>, transform_indices = @transform_14, window_bounds = array<i64: 1, 512>}, {pipeline_mode = #tpu.pipeline_mode<synchronous>, transform_indices = @transform_15, window_bounds = array<i64: 1, 512>}, {pipeline_mode = #tpu.pipeline_mode<synchronous>, transform_indices = @transform_16, window_bounds = array<i64: 1, 1>}, {transform_indices = @transform_17, window_bounds = array<i64: 8, 2>}]} {
    %c0 = arith.constant 0 : index
    %c0_0 = arith.constant 0 : index
    %0 = vector.load %arg1[%c0, %c0_0] : memref<8x16xf32, #tpu.memory_space<vmem>>, vector<8x16xf32>
    %1 = arith.truncf %0 : vector<8x16xf32> to vector<8x16xbf16>
    %c0_1 = arith.constant 0 : index
    %c0_2 = arith.constant 0 : index
    %2 = vector.load %arg2[%c0_1, %c0_2] : memref<8x4xf32, #tpu.memory_space<vmem>>, vector<8x4xf32>
    %3 = arith.truncf %2 : vector<8x4xf32> to vector<8x4xbf16>
    %c0_3 = arith.constant 0 : index
    %c0_4 = arith.constant 0 : index
    %4 = vector.load %arg3[%c0_3, %c0_4] : memref<16x1024xbf16, #tpu.memory_space<vmem>>, vector<16x1024xbf16>
    %cst = arith.constant dense<0.000000e+00> : vector<8x1024xf32>
    %5 = tpu.matmul %1, %4, %cst {dimension_numbers = #tpu.dot_dimension_numbers<[1], [0], [0], [1], [0, 0, 1, 1], [], []>} : vector<8x16xbf16>, vector<16x1024xbf16>, vector<8x1024xf32> -> vector<8x1024xf32>
    %c0_5 = arith.constant 0 : index
    %c0_6 = arith.constant 0 : index
    %6 = vector.load %arg4[%c0_5, %c0_6] : memref<4x1024xbf16, #tpu.memory_space<vmem>>, vector<4x1024xbf16>
    %cst_7 = arith.constant dense<0.000000e+00> : vector<8x1024xf32>
    %7 = tpu.matmul %3, %6, %cst_7 {dimension_numbers = #tpu.dot_dimension_numbers<[1], [0], [0], [1], [0, 0, 1, 1], [], []>} : vector<8x4xbf16>, vector<4x1024xbf16>, vector<8x1024xf32> -> vector<8x1024xf32>
    %8 = arith.addf %5, %7 : vector<8x1024xf32>
    %c0_8 = arith.constant 0 : index
    %c0_9 = arith.constant 0 : index
    %9 = vector.load %arg5[%c0_8, %c0_9] : memref<1x1024xf32, #tpu.memory_space<vmem>>, vector<1x1024xf32>
    %10 = vector.broadcast %9 : vector<1x1024xf32> to vector<8x1024xf32>
    %11 = arith.addf %8, %10 : vector<8x1024xf32>
    %12 = vector.extract_strided_slice %11 {offsets = [0, 0], sizes = [8, 512], strides = [1, 1]} : vector<8x1024xf32> to vector<8x512xf32>
    %cst_10 = arith.constant 2.000000e+01 : f32
    %13 = vector.broadcast %cst_10 : f32 to vector<8x512xf32>
    %14 = arith.minimumf %12, %13 : vector<8x512xf32>
    %15 = math.exp %14 : vector<8x512xf32>
    %cst_11 = arith.constant 1.000000e+00 : f32
    %16 = vector.broadcast %cst_11 : f32 to vector<8x512xf32>
    %17 = arith.addf %16, %15 : vector<8x512xf32>
    %18 = arith.mulf %17, %17 : vector<8x512xf32>
    %cst_12 = arith.constant 1.000000e+00 : f32
    %19 = vector.broadcast %cst_12 : f32 to vector<8x512xf32>
    %20 = arith.subf %18, %19 : vector<8x512xf32>
    %cst_13 = arith.constant 1.000000e+00 : f32
    %21 = vector.broadcast %cst_13 : f32 to vector<8x512xf32>
    %22 = arith.addf %18, %21 : vector<8x512xf32>
    %23 = tpu.reciprocal %22 {approx = true} : vector<8x512xf32> -> vector<8x512xf32>
    %24 = arith.mulf %20, %23 : vector<8x512xf32>
    %25 = arith.mulf %12, %24 : vector<8x512xf32>
    %26 = arith.truncf %25 : vector<8x512xf32> to vector<8x512xbf16>
    %c0_14 = arith.constant 0 : index
    %c0_15 = arith.constant 0 : index
    %27 = vector.load %arg6[%c0_14, %c0_15] : memref<512x512xbf16, #tpu.memory_space<vmem>>, vector<512x512xbf16>
    %cst_16 = arith.constant dense<0.000000e+00> : vector<8x512xf32>
    %28 = tpu.matmul %26, %27, %cst_16 {dimension_numbers = #tpu.dot_dimension_numbers<[1], [0], [0], [1], [0, 0, 1, 1], [], []>} : vector<8x512xbf16>, vector<512x512xbf16>, vector<8x512xf32> -> vector<8x512xf32>
    %c0_17 = arith.constant 0 : index
    %c0_18 = arith.constant 0 : index
    %29 = vector.load %arg7[%c0_17, %c0_18] : memref<1x512xf32, #tpu.memory_space<vmem>>, vector<1x512xf32>
    %30 = vector.broadcast %29 : vector<1x512xf32> to vector<8x512xf32>
    %31 = arith.addf %28, %30 : vector<8x512xf32>
    %cst_19 = arith.constant 2.000000e+01 : f32
    %32 = vector.broadcast %cst_19 : f32 to vector<8x512xf32>
    %33 = arith.minimumf %31, %32 : vector<8x512xf32>
    %34 = math.exp %33 : vector<8x512xf32>
    %cst_20 = arith.constant 1.000000e+00 : f32
    %35 = vector.broadcast %cst_20 : f32 to vector<8x512xf32>
    %36 = arith.addf %35, %34 : vector<8x512xf32>
    %37 = arith.mulf %36, %36 : vector<8x512xf32>
    %cst_21 = arith.constant 1.000000e+00 : f32
    %38 = vector.broadcast %cst_21 : f32 to vector<8x512xf32>
    %39 = arith.subf %37, %38 : vector<8x512xf32>
    %cst_22 = arith.constant 1.000000e+00 : f32
    %40 = vector.broadcast %cst_22 : f32 to vector<8x512xf32>
    %41 = arith.addf %37, %40 : vector<8x512xf32>
    %42 = tpu.reciprocal %41 {approx = true} : vector<8x512xf32> -> vector<8x512xf32>
    %43 = arith.mulf %39, %42 : vector<8x512xf32>
    %44 = arith.mulf %31, %43 : vector<8x512xf32>
    %45 = arith.truncf %44 : vector<8x512xf32> to vector<8x512xbf16>
    %c0_23 = arith.constant 0 : index
    %c0_24 = arith.constant 0 : index
    %46 = vector.load %arg8[%c0_23, %c0_24] : memref<512x512xbf16, #tpu.memory_space<vmem>>, vector<512x512xbf16>
    %cst_25 = arith.constant dense<0.000000e+00> : vector<8x512xf32>
    %47 = tpu.matmul %45, %46, %cst_25 {dimension_numbers = #tpu.dot_dimension_numbers<[1], [0], [0], [1], [0, 0, 1, 1], [], []>} : vector<8x512xbf16>, vector<512x512xbf16>, vector<8x512xf32> -> vector<8x512xf32>
    %c0_26 = arith.constant 0 : index
    %c0_27 = arith.constant 0 : index
    %48 = vector.load %arg9[%c0_26, %c0_27] : memref<1x512xf32, #tpu.memory_space<vmem>>, vector<1x512xf32>
    %49 = vector.broadcast %48 : vector<1x512xf32> to vector<8x512xf32>
    %50 = arith.addf %47, %49 : vector<8x512xf32>
    %cst_28 = arith.constant 2.000000e+01 : f32
    %51 = vector.broadcast %cst_28 : f32 to vector<8x512xf32>
    %52 = arith.minimumf %50, %51 : vector<8x512xf32>
    %53 = math.exp %52 : vector<8x512xf32>
    %cst_29 = arith.constant 1.000000e+00 : f32
    %54 = vector.broadcast %cst_29 : f32 to vector<8x512xf32>
    %55 = arith.addf %54, %53 : vector<8x512xf32>
    %56 = arith.mulf %55, %55 : vector<8x512xf32>
    %cst_30 = arith.constant 1.000000e+00 : f32
    %57 = vector.broadcast %cst_30 : f32 to vector<8x512xf32>
    %58 = arith.subf %56, %57 : vector<8x512xf32>
    %cst_31 = arith.constant 1.000000e+00 : f32
    %59 = vector.broadcast %cst_31 : f32 to vector<8x512xf32>
    %60 = arith.addf %56, %59 : vector<8x512xf32>
    %61 = tpu.reciprocal %60 {approx = true} : vector<8x512xf32> -> vector<8x512xf32>
    %62 = arith.mulf %58, %61 : vector<8x512xf32>
    %63 = arith.mulf %50, %62 : vector<8x512xf32>
    %64 = arith.addf %63, %25 : vector<8x512xf32>
    %c0_32 = arith.constant 0 : index
    %c0_33 = arith.constant 0 : index
    %65 = vector.load %arg10[%c0_32, %c0_33] : memref<1x512xf32, #tpu.memory_space<vmem>>, vector<1x512xf32>
    %66 = vector.broadcast %65 : vector<1x512xf32> to vector<8x512xf32>
    %67 = arith.mulf %64, %66 : vector<8x512xf32>
    %cst_34 = arith.constant dense<0.000000e+00> : vector<8xf32>
    %68 = vector.multi_reduction <add>, %67, %cst_34 [1] : vector<8x512xf32> to vector<8xf32>
    %69 = vector.shape_cast %68 : vector<8xf32> to vector<8x1xf32>
    %c0_35 = arith.constant 0 : index
    %c0_36 = arith.constant 0 : index
    %70 = vector.load %arg11[%c0_35, %c0_36] : memref<1x1xf32, #tpu.memory_space<vmem>>, vector<1x1xf32>
    %71 = vector.broadcast %70 : vector<1x1xf32> to vector<8x1xf32>
    %72 = arith.addf %69, %71 : vector<8x1xf32>
    %c0_37 = arith.constant 0 : index
    %c0_38 = arith.constant 0 : index
    %73 = vector.load %arg18[%c0_37, %c0_38] : memref<8x2xf32, #tpu.memory_space<vmem>>, vector<8x1xf32>
    tpu.vector_store %arg18[%c0_37, %c0_38], %72 {strides = array<i32>} : memref<8x2xf32, #tpu.memory_space<vmem>>, vector<8x1xf32>,
    %74 = vector.extract_strided_slice %11 {offsets = [0, 512], sizes = [8, 512], strides = [1, 1]} : vector<8x1024xf32> to vector<8x512xf32>
    %cst_39 = arith.constant 2.000000e+01 : f32
    %75 = vector.broadcast %cst_39 : f32 to vector<8x512xf32>
    %76 = arith.minimumf %74, %75 : vector<8x512xf32>
    %77 = math.exp %76 : vector<8x512xf32>
    %cst_40 = arith.constant 1.000000e+00 : f32
    %78 = vector.broadcast %cst_40 : f32 to vector<8x512xf32>
    %79 = arith.addf %78, %77 : vector<8x512xf32>
    %80 = arith.mulf %79, %79 : vector<8x512xf32>
    %cst_41 = arith.constant 1.000000e+00 : f32
    %81 = vector.broadcast %cst_41 : f32 to vector<8x512xf32>
    %82 = arith.subf %80, %81 : vector<8x512xf32>
    %cst_42 = arith.constant 1.000000e+00 : f32
    %83 = vector.broadcast %cst_42 : f32 to vector<8x512xf32>
    %84 = arith.addf %80, %83 : vector<8x512xf32>
    %85 = tpu.reciprocal %84 {approx = true} : vector<8x512xf32> -> vector<8x512xf32>
    %86 = arith.mulf %82, %85 : vector<8x512xf32>
    %87 = arith.mulf %74, %86 : vector<8x512xf32>
    %88 = arith.truncf %87 : vector<8x512xf32> to vector<8x512xbf16>
    %c0_43 = arith.constant 0 : index
    %c0_44 = arith.constant 0 : index
    %89 = vector.load %arg12[%c0_43, %c0_44] : memref<512x512xbf16, #tpu.memory_space<vmem>>, vector<512x512xbf16>
    %cst_45 = arith.constant dense<0.000000e+00> : vector<8x512xf32>
    %90 = tpu.matmul %88, %89, %cst_45 {dimension_numbers = #tpu.dot_dimension_numbers<[1], [0], [0], [1], [0, 0, 1, 1], [], []>} : vector<8x512xbf16>, vector<512x512xbf16>, vector<8x512xf32> -> vector<8x512xf32>
    %c0_46 = arith.constant 0 : index
    %c0_47 = arith.constant 0 : index
    %91 = vector.load %arg13[%c0_46, %c0_47] : memref<1x512xf32, #tpu.memory_space<vmem>>, vector<1x512xf32>
    %92 = vector.broadcast %91 : vector<1x512xf32> to vector<8x512xf32>
    %93 = arith.addf %90, %92 : vector<8x512xf32>
    %cst_48 = arith.constant 2.000000e+01 : f32
    %94 = vector.broadcast %cst_48 : f32 to vector<8x512xf32>
    %95 = arith.minimumf %93, %94 : vector<8x512xf32>
    %96 = math.exp %95 : vector<8x512xf32>
    %cst_49 = arith.constant 1.000000e+00 : f32
    %97 = vector.broadcast %cst_49 : f32 to vector<8x512xf32>
    %98 = arith.addf %97, %96 : vector<8x512xf32>
    %99 = arith.mulf %98, %98 : vector<8x512xf32>
    %cst_50 = arith.constant 1.000000e+00 : f32
    %100 = vector.broadcast %cst_50 : f32 to vector<8x512xf32>
    %101 = arith.subf %99, %100 : vector<8x512xf32>
    %cst_51 = arith.constant 1.000000e+00 : f32
    %102 = vector.broadcast %cst_51 : f32 to vector<8x512xf32>
    %103 = arith.addf %99, %102 : vector<8x512xf32>
    %104 = tpu.reciprocal %103 {approx = true} : vector<8x512xf32> -> vector<8x512xf32>
    %105 = arith.mulf %101, %104 : vector<8x512xf32>
    %106 = arith.mulf %93, %105 : vector<8x512xf32>
    %107 = arith.truncf %106 : vector<8x512xf32> to vector<8x512xbf16>
    %c0_52 = arith.constant 0 : index
    %c0_53 = arith.constant 0 : index
    %108 = vector.load %arg14[%c0_52, %c0_53] : memref<512x512xbf16, #tpu.memory_space<vmem>>, vector<512x512xbf16>
    %cst_54 = arith.constant dense<0.000000e+00> : vector<8x512xf32>
    %109 = tpu.matmul %107, %108, %cst_54 {dimension_numbers = #tpu.dot_dimension_numbers<[1], [0], [0], [1], [0, 0, 1, 1], [], []>} : vector<8x512xbf16>, vector<512x512xbf16>, vector<8x512xf32> -> vector<8x512xf32>
    %c0_55 = arith.constant 0 : index
    %c0_56 = arith.constant 0 : index
    %110 = vector.load %arg15[%c0_55, %c0_56] : memref<1x512xf32, #tpu.memory_space<vmem>>, vector<1x512xf32>
    %111 = vector.broadcast %110 : vector<1x512xf32> to vector<8x512xf32>
    %112 = arith.addf %109, %111 : vector<8x512xf32>
    %cst_57 = arith.constant 2.000000e+01 : f32
    %113 = vector.broadcast %cst_57 : f32 to vector<8x512xf32>
    %114 = arith.minimumf %112, %113 : vector<8x512xf32>
    %115 = math.exp %114 : vector<8x512xf32>
    %cst_58 = arith.constant 1.000000e+00 : f32
    %116 = vector.broadcast %cst_58 : f32 to vector<8x512xf32>
    %117 = arith.addf %116, %115 : vector<8x512xf32>
    %118 = arith.mulf %117, %117 : vector<8x512xf32>
    %cst_59 = arith.constant 1.000000e+00 : f32
    %119 = vector.broadcast %cst_59 : f32 to vector<8x512xf32>
    %120 = arith.subf %118, %119 : vector<8x512xf32>
    %cst_60 = arith.constant 1.000000e+00 : f32
    %121 = vector.broadcast %cst_60 : f32 to vector<8x512xf32>
    %122 = arith.addf %118, %121 : vector<8x512xf32>
    %123 = tpu.reciprocal %122 {approx = true} : vector<8x512xf32> -> vector<8x512xf32>
    %124 = arith.mulf %120, %123 : vector<8x512xf32>
    %125 = arith.mulf %112, %124 : vector<8x512xf32>
    %126 = arith.addf %125, %87 : vector<8x512xf32>
    %c0_61 = arith.constant 0 : index
    %c0_62 = arith.constant 0 : index
    %127 = vector.load %arg16[%c0_61, %c0_62] : memref<1x512xf32, #tpu.memory_space<vmem>>, vector<1x512xf32>
    %128 = vector.broadcast %127 : vector<1x512xf32> to vector<8x512xf32>
    %129 = arith.mulf %126, %128 : vector<8x512xf32>
    %cst_63 = arith.constant dense<0.000000e+00> : vector<8xf32>
    %130 = vector.multi_reduction <add>, %129, %cst_63 [1] : vector<8x512xf32> to vector<8xf32>
    %131 = vector.shape_cast %130 : vector<8xf32> to vector<8x1xf32>
    %c0_64 = arith.constant 0 : index
    %c0_65 = arith.constant 0 : index
    %132 = vector.load %arg17[%c0_64, %c0_65] : memref<1x1xf32, #tpu.memory_space<vmem>>, vector<1x1xf32>
    %133 = vector.broadcast %132 : vector<1x1xf32> to vector<8x1xf32>
    %134 = arith.addf %131, %133 : vector<8x1xf32>
    %c0_66 = arith.constant 0 : index
    %c1 = arith.constant 1 : index
    %135 = vector.load %arg18[%c0_66, %c1] : memref<8x2xf32, #tpu.memory_space<vmem>>, vector<8x1xf32>
    tpu.vector_store %arg18[%c0_66, %c1], %134 {strides = array<i32>} : memref<8x2xf32, #tpu.memory_space<vmem>>, vector<8x1xf32>,
    return
  }
  func.func @transform_0(%arg0: i32) -> (i32, i32) {
    %c0_i32 = arith.constant 0 : i32
    %c0_i32_0 = arith.constant 0 : i32
    return %arg0, %c0_i32 : i32, i32
  }
  func.func @transform_1(%arg0: i32) -> (i32, i32) {
    %c0_i32 = arith.constant 0 : i32
    %c0_i32_0 = arith.constant 0 : i32
    return %arg0, %c0_i32 : i32, i32
  }
  func.func @transform_2(%arg0: i32) -> (i32, i32) {
    %c0_i32 = arith.constant 0 : i32
    %c0_i32_0 = arith.constant 0 : i32
    %c0_i32_1 = arith.constant 0 : i32
    return %c0_i32, %c0_i32_0 : i32, i32
  }
  func.func @transform_3(%arg0: i32) -> (i32, i32) {
    %c0_i32 = arith.constant 0 : i32
    %c0_i32_0 = arith.constant 0 : i32
    %c0_i32_1 = arith.constant 0 : i32
    return %c0_i32, %c0_i32_0 : i32, i32
  }
  func.func @transform_4(%arg0: i32) -> (i32, i32) {
    %c0_i32 = arith.constant 0 : i32
    %c0_i32_0 = arith.constant 0 : i32
    %c0_i32_1 = arith.constant 0 : i32
    return %c0_i32, %c0_i32_0 : i32, i32
  }
  func.func @transform_5(%arg0: i32) -> (i32, i32) {
    %c0_i32 = arith.constant 0 : i32
    %c0_i32_0 = arith.constant 0 : i32
    %c0_i32_1 = arith.constant 0 : i32
    return %c0_i32, %c0_i32_0 : i32, i32
  }
  func.func @transform_6(%arg0: i32) -> (i32, i32) {
    %c0_i32 = arith.constant 0 : i32
    %c0_i32_0 = arith.constant 0 : i32
    %c0_i32_1 = arith.constant 0 : i32
    return %c0_i32, %c0_i32_0 : i32, i32
  }
  func.func @transform_7(%arg0: i32) -> (i32, i32) {
    %c0_i32 = arith.constant 0 : i32
    %c0_i32_0 = arith.constant 0 : i32
    %c0_i32_1 = arith.constant 0 : i32
    return %c0_i32, %c0_i32_0 : i32, i32
  }
  func.func @transform_8(%arg0: i32) -> (i32, i32) {
    %c0_i32 = arith.constant 0 : i32
    %c0_i32_0 = arith.constant 0 : i32
    %c0_i32_1 = arith.constant 0 : i32
    return %c0_i32, %c0_i32_0 : i32, i32
  }
  func.func @transform_9(%arg0: i32) -> (i32, i32) {
    %c0_i32 = arith.constant 0 : i32
    %c0_i32_0 = arith.constant 0 : i32
    %c0_i32_1 = arith.constant 0 : i32
    return %c0_i32, %c0_i32_0 : i32, i32
  }
  func.func @transform_10(%arg0: i32) -> (i32, i32) {
    %c0_i32 = arith.constant 0 : i32
    %c0_i32_0 = arith.constant 0 : i32
    %c0_i32_1 = arith.constant 0 : i32
    return %c0_i32, %c0_i32_0 : i32, i32
  }
  func.func @transform_11(%arg0: i32) -> (i32, i32) {
    %c0_i32 = arith.constant 0 : i32
    %c0_i32_0 = arith.constant 0 : i32
    %c0_i32_1 = arith.constant 0 : i32
    return %c0_i32, %c0_i32_0 : i32, i32
  }
  func.func @transform_12(%arg0: i32) -> (i32, i32) {
    %c0_i32 = arith.constant 0 : i32
    %c0_i32_0 = arith.constant 0 : i32
    %c0_i32_1 = arith.constant 0 : i32
    return %c0_i32, %c0_i32_0 : i32, i32
  }
  func.func @transform_13(%arg0: i32) -> (i32, i32) {
    %c0_i32 = arith.constant 0 : i32
    %c0_i32_0 = arith.constant 0 : i32
    %c0_i32_1 = arith.constant 0 : i32
    return %c0_i32, %c0_i32_0 : i32, i32
  }
  func.func @transform_14(%arg0: i32) -> (i32, i32) {
    %c0_i32 = arith.constant 0 : i32
    %c0_i32_0 = arith.constant 0 : i32
    %c0_i32_1 = arith.constant 0 : i32
    return %c0_i32, %c0_i32_0 : i32, i32
  }
  func.func @transform_15(%arg0: i32) -> (i32, i32) {
    %c0_i32 = arith.constant 0 : i32
    %c0_i32_0 = arith.constant 0 : i32
    %c0_i32_1 = arith.constant 0 : i32
    return %c0_i32, %c0_i32_0 : i32, i32
  }
  func.func @transform_16(%arg0: i32) -> (i32, i32) {
    %c0_i32 = arith.constant 0 : i32
    %c0_i32_0 = arith.constant 0 : i32
    %c0_i32_1 = arith.constant 0 : i32
    return %c0_i32, %c0_i32_0 : i32, i32
  }
  func.func @transform_17(%arg0: i32) -> (i32, i32) {
    %c0_i32 = arith.constant 0 : i32
    %c0_i32_0 = arith.constant 0 : i32
    return %arg0, %c0_i32 : i32, i32
  }
}

</mosaic_0001>

<llo_original>
// kernel: tpu_custom_call.1
$region0: #{tpu_custom_call.1}
  #allocation0 [shape = 'u32[]', space=smem, size = 0x4, offset = 0x4, fixed_abs, tag = 'smem constant byte address 0x4 - core index']
  #allocation1 [shape = 'u32[144,128]{1,0:T(1,128)}', space=vmem, size = 0x12000, scoped, tag = 'internal scratch']
  #allocation2 [shape = 'f32[1,1]{1,0:T(1,128)S(1)}', space=vmem, size = 0x200, scoped, tag = 'scoped memory for tpu_custom_call.1']
  #allocation3 [shape = 'f32[1,1]{1,0:T(1,128)S(1)}', space=vmem, size = 0x200, scoped, tag = 'scoped memory for tpu_custom_call.1']
  %s0 = inlined_call_operand.hbm [shape: f32[8,16], index: 0, kind: input, shape index: {}]
  %s1 = inlined_call_operand.vmem [shape: f32[8,4], index: 1, kind: input, shape index: {}]
  %s2 = inlined_call_operand.hbm [shape: bf16[16,1024], index: 2, kind: input, shape index: {}]
  %s3 = inlined_call_operand.vmem [shape: bf16[4,1024], index: 3, kind: input, shape index: {}]
  %s4 = inlined_call_operand.hbm [shape: f32[1,1024], index: 4, kind: input, shape index: {}]
  %s5 = inlined_call_operand.hbm [shape: bf16[512,512], index: 5, kind: input, shape index: {}]
  %s6 = inlined_call_operand.vmem [shape: f32[1,512], index: 6, kind: input, shape index: {}]
  %s7 = inlined_call_operand.hbm [shape: bf16[512,512], index: 7, kind: input, shape index: {}]
  %s8 = inlined_call_operand.vmem [shape: f32[1,512], index: 8, kind: input, shape index: {}]
  %s9 = inlined_call_operand.vmem [shape: f32[1,512], index: 9, kind: input, shape index: {}]
  %s10 = inlined_call_operand.<no memory space> [shape: f32[1,1], index: 10, kind: input, shape index: {}]
  %s11 = inlined_call_operand.hbm [shape: bf16[512,512], index: 11, kind: input, shape index: {}]
  %s12 = inlined_call_operand.vmem [shape: f32[1,512], index: 12, kind: input, shape index: {}]
  %s13 = inlined_call_operand.hbm [shape: bf16[512,512], index: 13, kind: input, shape index: {}]
  %s14 = inlined_call_operand.vmem [shape: f32[1,512], index: 14, kind: input, shape index: {}]
  %s15 = inlined_call_operand.vmem [shape: f32[1,512], index: 15, kind: input, shape index: {}]
  %s16 = inlined_call_operand.<no memory space> [shape: f32[1,1], index: 16, kind: input, shape index: {}]
  %s17 = inlined_call_operand.vmem [shape: f32[8,2], index: 17, kind: output, shape index: {}]
  %s18 = sld [smem:[#allocation0]]
  $region106: #{tpu_custom_call.1} parent=0
    _
  %s20 = ssub.s32 1, %s18
  %s21 = scalar_select 0, %s20, %s18
  %v22 = vstv %s10
  %23 = vst [vmem:[#allocation2] sm:$0x1] %v22
  %v24 = vstv %s16
  %25 = vst [vmem:[#allocation3] sm:$0x1] %v24
  $region1: #{tpu_custom_call.1} parent=0
    #allocation4 [shape = 'u8[4096]{0}', space=vmem, size = 0x1000, scoped, tag = 'input window, operand 0, single buffered']
    #allocation5 [shape = 's32[1]{0}', space=sflag, size = 0x4, scoped, tag = 'scoped memory for tpu_custom_call.1']
    #allocation6 [shape = 'u8[32768]{0}', space=vmem, size = 0x8000, scoped, tag = 'input window, operand 2, single buffered']
    #allocation7 [shape = 's32[1]{0}', space=sflag, size = 0x4, scoped, tag = 'scoped memory for tpu_custom_call.1']
    #allocation8 [shape = 'u8[4096]{0}', space=vmem, size = 0x1000, scoped, tag = 'input window, operand 4, single buffered']
    #allocation9 [shape = 'u8[524288]{0}', space=vmem, size = 0x80000, scoped, tag = 'input window, operand 5, single buffered']
    #allocation10 [shape = 's32[1]{0}', space=sflag, size = 0x4, scoped, tag = 'scoped memory for tpu_custom_call.1']
    #allocation11 [shape = 'u8[524288]{0}', space=vmem, size = 0x80000, scoped, tag = 'input window, operand 7, single buffered']
    #allocation12 [shape = 'u8[524288]{0}', space=vmem, size = 0x80000, scoped, tag = 'input window, operand 11, single buffered']
    #allocation13 [shape = 's32[1]{0}', space=sflag, size = 0x4, scoped, tag = 'scoped memory for tpu_custom_call.1']
    #allocation14 [shape = 'u8[524288]{0}', space=vmem, size = 0x80000, scoped, tag = 'input window, operand 13, single buffered']
    %26 = vsyncpa [#allocation5], 0
    %27 = vsyncpa [#allocation7], 0
    %28 = vsyncpa [#allocation10], 0
    %29 = vsyncpa [#allocation13], 0
    // Predicated region
    $region2: #{tpu_custom_call.1} parent=1 // pred_check
      _
    $region3: #{tpu_custom_call.1} parent=1 // pred_check_branch
      %31 = sbr.rel (0) target = $region5
    $region4: #{tpu_custom_call.1} parent=1 // pred_region
      %s33 = ssub.s32 128, 128
      %34 = vsyncadd [#allocation5], %s33
      %s36 = sshll.u32 [#allocation4], 4
      %s37 = int_to_ptr.vmem [resolvable:$true] %s36
      %39 = dma.hbm_to_vmem [thread:$0]  %s0, 128, %s37, [#allocation5]
    $region5: #{tpu_custom_call.1} parent=1 // pred_fallthru
      _
    // Predicated region
    $region6: #{tpu_custom_call.1} parent=1 // pred_check
      _
    $region7: #{tpu_custom_call.1} parent=1 // pred_check_branch
      %41 = sbr.rel (0) target = $region9
    $region8: #{tpu_custom_call.1} parent=1 // pred_region
      _
    $region9: #{tpu_custom_call.1} parent=1 // pred_fallthru
      _
    // Predicated region
    $region10: #{tpu_custom_call.1} parent=1 // pred_check
      _
    $region11: #{tpu_custom_call.1} parent=1 // pred_check_branch
      %43 = sbr.rel (0) target = $region13
    $region12: #{tpu_custom_call.1} parent=1 // pred_region
      %s45 = ssub.s32 1024, 1024
      %46 = vsyncadd [#allocation7], %s45
      %s47 = sshll.u32 [#allocation6], 4
      %s48 = int_to_ptr.vmem [resolvable:$true] %s47
      %53 = dma.hbm_to_vmem [thread:$0]  %s2, 1024, %s48, [#allocation7], 512, 512, 32
    $region13: #{tpu_custom_call.1} parent=1 // pred_fallthru
      _
    // Predicated region
    $region14: #{tpu_custom_call.1} parent=1 // pred_check
      _
    $region15: #{tpu_custom_call.1} parent=1 // pred_check_branch
      %55 = sbr.rel (0) target = $region17
    $region16: #{tpu_custom_call.1} parent=1 // pred_region
      _
    $region17: #{tpu_custom_call.1} parent=1 // pred_fallthru
      _
    // Predicated region
    $region18: #{tpu_custom_call.1} parent=1 // pred_check
      _
    $region19: #{tpu_custom_call.1} parent=1 // pred_check_branch
      %57 = sbr.rel (0) target = $region21
    $region20: #{tpu_custom_call.1} parent=1 // pred_region
      %s59 = ssub.s32 128, 128
      %60 = vsyncadd [#allocation7], %s59
      %s62 = sshll.u32 [#allocation8], 4
      %s63 = int_to_ptr.vmem [resolvable:$true] %s62
      %65 = dma.hbm_to_vmem [thread:$0]  %s4, 128, %s63, [#allocation7]
    $region21: #{tpu_custom_call.1} parent=1 // pred_fallthru
      _
    // Predicated region
    $region22: #{tpu_custom_call.1} parent=1 // pred_check
      _
    $region23: #{tpu_custom_call.1} parent=1 // pred_check_branch
      %67 = sbr.rel (0) target = $region25
    $region24: #{tpu_custom_call.1} parent=1 // pred_region
      %s69 = ssub.s32 16384, 16384
      %70 = vsyncadd [#allocation10], %s69
      %s71 = sshll.u32 [#allocation9], 4
      %s72 = int_to_ptr.vmem [resolvable:$true] %s71
      %77 = dma.hbm_to_vmem [thread:$0]  %s5, 16384, %s72, [#allocation10], 256, 256, 16
    $region25: #{tpu_custom_call.1} parent=1 // pred_fallthru
      _
    // Predicated region
    $region26: #{tpu_custom_call.1} parent=1 // pred_check
      _
    $region27: #{tpu_custom_call.1} parent=1 // pred_check_branch
      %79 = sbr.rel (0) target = $region29
    $region28: #{tpu_custom_call.1} parent=1 // pred_region
      _
    $region29: #{tpu_custom_call.1} parent=1 // pred_fallthru
      _
    // Predicated region
    $region30: #{tpu_custom_call.1} parent=1 // pred_check
      _
    $region31: #{tpu_custom_call.1} parent=1 // pred_check_branch
      %81 = sbr.rel (0) target = $region33
    $region32: #{tpu_custom_call.1} parent=1 // pred_region
      %s83 = ssub.s32 16384, 16384
      %84 = vsyncadd [#allocation10], %s83
      %s85 = sshll.u32 [#allocation11], 4
      %s86 = int_to_ptr.vmem [resolvable:$true] %s85
      %91 = dma.hbm_to_vmem [thread:$0]  %s7, 16384, %s86, [#allocation10], 256, 256, 16
    $region33: #{tpu_custom_call.1} parent=1 // pred_fallthru
      _
    // Predicated region
    $region34: #{tpu_custom_call.1} parent=1 // pred_check
      _
    $region35: #{tpu_custom_call.1} parent=1 // pred_check_branch
      %93 = sbr.rel (0) target = $region37
    $region36: #{tpu_custom_call.1} parent=1 // pred_region
      _
    $region37: #{tpu_custom_call.1} parent=1 // pred_fallthru
      _
    // Predicated region
    $region38: #{tpu_custom_call.1} parent=1 // pred_check
      _
    $region39: #{tpu_custom_call.1} parent=1 // pred_check_branch
      %95 = sbr.rel (0) target = $region41
    $region40: #{tpu_custom_call.1} parent=1 // pred_region
      _
    $region41: #{tpu_custom_call.1} parent=1 // pred_fallthru
      _
    // Predicated region
    $region42: #{tpu_custom_call.1} parent=1 // pred_check
      _
    $region43: #{tpu_custom_call.1} parent=1 // pred_check_branch
      %97 = sbr.rel (0) target = $region45
    $region44: #{tpu_custom_call.1} parent=1 // pred_region
      _
    $region45: #{tpu_custom_call.1} parent=1 // pred_fallthru
      _
    // Predicated region
    $region46: #{tpu_custom_call.1} parent=1 // pred_check
      _
    $region47: #{tpu_custom_call.1} parent=1 // pred_check_branch
      %99 = sbr.rel (0) target = $region49
    $region48: #{tpu_custom_call.1} parent=1 // pred_region
      %s101 = ssub.s32 16384, 16384
      %102 = vsyncadd [#allocation13], %s101
      %s103 = sshll.u32 [#allocation12], 4
      %s104 = int_to_ptr.vmem [resolvable:$true] %s103
      %109 = dma.hbm_to_vmem [thread:$0]  %s11, 16384, %s104, [#allocation13], 256, 256, 16
    $region49: #{tpu_custom_call.1} parent=1 // pred_fallthru
      _
    // Predicated region
    $region50: #{tpu_custom_call.1} parent=1 // pred_check
      _
    $region51: #{tpu_custom_call.1} parent=1 // pred_check_branch
      %111 = sbr.rel (0) target = $region53
    $region52: #{tpu_custom_call.1} parent=1 // pred_region
      _
    $region53: #{tpu_custom_call.1} parent=1 // pred_fallthru
      _
    // Predicated region
    $region54: #{tpu_custom_call.1} parent=1 // pred_check
      _
    $region55: #{tpu_custom_call.1} parent=1 // pred_check_branch
      %113 = sbr.rel (0) target = $region57
    $region56: #{tpu_custom_call.1} parent=1 // pred_region
      %s115 = ssub.s32 16384, 16384
      %116 = vsyncadd [#allocation13], %s115
      %s117 = sshll.u32 [#allocation14], 4
      %s118 = int_to_ptr.vmem [resolvable:$true] %s117
      %123 = dma.hbm_to_vmem [thread:$0]  %s13, 16384, %s118, [#allocation13], 256, 256, 16
    $region57: #{tpu_custom_call.1} parent=1 // pred_fallthru
      _
    // Predicated region
    $region58: #{tpu_custom_call.1} parent=1 // pred_check
      _
    $region59: #{tpu_custom_call.1} parent=1 // pred_check_branch
      %125 = sbr.rel (0) target = $region61
    $region60: #{tpu_custom_call.1} parent=1 // pred_region
      _
    $region61: #{tpu_custom_call.1} parent=1 // pred_fallthru
      _
    // Predicated region
    $region62: #{tpu_custom_call.1} parent=1 // pred_check
      _
    $region63: #{tpu_custom_call.1} parent=1 // pred_check_branch
      %127 = sbr.rel (0) target = $region65
    $region64: #{tpu_custom_call.1} parent=1 // pred_region
      _
    $region65: #{tpu_custom_call.1} parent=1 // pred_fallthru
      _
    // Predicated region
    $region66: #{tpu_custom_call.1} parent=1 // pred_check
      _
    $region67: #{tpu_custom_call.1} parent=1 // pred_check_branch
      %129 = sbr.rel (0) target = $region69
    $region68: #{tpu_custom_call.1} parent=1 // pred_region
      _
    $region69: #{tpu_custom_call.1} parent=1 // pred_fallthru
      _
    // Predicated region
    $region70: #{tpu_custom_call.1} parent=1 // pred_check
      _
    $region71: #{tpu_custom_call.1} parent=1 // pred_check_branch
      %131 = sbr.rel (0) target = $region73
    $region72: #{tpu_custom_call.1} parent=1 // pred_region
      %132 = dma.done [#allocation5], 128
    $region73: #{tpu_custom_call.1} parent=1 // pred_fallthru
      _
    // Predicated region
    $region74: #{tpu_custom_call.1} parent=1 // pred_check
      _
    $region75: #{tpu_custom_call.1} parent=1 // pred_check_branch
      %134 = sbr.rel (0) target = $region77
    $region76: #{tpu_custom_call.1} parent=1 // pred_region
      %135 = dma.done [#allocation7], 1024
    $region77: #{tpu_custom_call.1} parent=1 // pred_fallthru
      _
    // Predicated region
    $region78: #{tpu_custom_call.1} parent=1 // pred_check
      _
    $region79: #{tpu_custom_call.1} parent=1 // pred_check_branch
      %137 = sbr.rel (0) target = $region81
    $region80: #{tpu_custom_call.1} parent=1 // pred_region
      %138 = dma.done [#allocation7], 128
    $region81: #{tpu_custom_call.1} parent=1 // pred_fallthru
      _
    // Predicated region
    $region82: #{tpu_custom_call.1} parent=1 // pred_check
      _
    $region83: #{tpu_custom_call.1} parent=1 // pred_check_branch
      %140 = sbr.rel (0) target = $region85
    $region84: #{tpu_custom_call.1} parent=1 // pred_region
      %141 = dma.done [#allocation10], 16384
    $region85: #{tpu_custom_call.1} parent=1 // pred_fallthru
      _
    // Predicated region
    $region86: #{tpu_custom_call.1} parent=1 // pred_check
      _
    $region87: #{tpu_custom_call.1} parent=1 // pred_check_branch
      %143 = sbr.rel (0) target = $region89
    $region88: #{tpu_custom_call.1} parent=1 // pred_region
      %144 = dma.done [#allocation10], 16384
    $region89: #{tpu_custom_call.1} parent=1 // pred_fallthru
      _
    // Predicated region
    $region90: #{tpu_custom_call.1} parent=1 // pred_check
      _
    $region91: #{tpu_custom_call.1} parent=1 // pred_check_branch
      %146 = sbr.rel (0) target = $region93
    $region92: #{tpu_custom_call.1} parent=1 // pred_region
      %147 = dma.done [#allocation13], 16384
    $region93: #{tpu_custom_call.1} parent=1 // pred_fallthru
      _
    // Predicated region
    $region94: #{tpu_custom_call.1} parent=1 // pred_check
      _
    $region95: #{tpu_custom_call.1} parent=1 // pred_check_branch
      %149 = sbr.rel (0) target = $region97
    $region96: #{tpu_custom_call.1} parent=1 // pred_region
      %150 = dma.done [#allocation13], 16384
    $region97: #{tpu_custom_call.1} parent=1 // pred_fallthru
      _
    %v152 = vld [vmem:[#allocation4] sm:$0xff]
    %v153 = vpack.c.bf16 %v152, %v152
    %v154 = vld [vmem:[%s1] sm:$0xff]
    %v155 = vpack.c.bf16 %v154, %v154
    %v156 = vld [vmem:[#allocation6] sm:$0xff]
    %v157 = vld [vmem:[#allocation6 + $0x8] sm:$0xff]
    %v158 = vld [vmem:[#allocation6 + $0x10] sm:$0xff]
    %v159 = vld [vmem:[#allocation6 + $0x18] sm:$0xff]
    %v160 = vld [vmem:[#allocation6 + $0x20] sm:$0xff]
    %v161 = vld [vmem:[#allocation6 + $0x28] sm:$0xff]
    %v162 = vld [vmem:[#allocation6 + $0x30] sm:$0xff]
    %v163 = vld [vmem:[#allocation6 + $0x38] sm:$0xff]
    %v164 = vld [vmem:[%s3] sm:$0xff]
    %v165 = vld [vmem:[%s3 + $0x8] sm:$0xff]
    %v168 = vcombine.high %v164, %v164
    %v170 = vunpack.c.l.s4 1983009808
    %v171 = vunpack.c.0.s8 %v170
    %v172 = vlaneseq
    %v173 = vshrl.u32 %v172, 7
    %v174 = vsub.s32 %v171, %v173
    %v175 = vrot.slane %v164, %v174
    %v177 = vunpack.c.l.s4 1983009808
    %v178 = vunpack.c.0.s8 %v177
    %v179 = vlaneseq
    %v180 = vshrl.u32 %v179, 7
    %v181 = vsub.s32 %v178, %v180
    %v182 = vrot.slane %v168, %v181
    %v183 = vcombine.high %v175, %v175
    %v184 = vcombine.high %v182, %v182
    %v185 = vcombine.high %v165, %v165
    %v187 = vunpack.c.l.s4 1983009808
    %v188 = vunpack.c.0.s8 %v187
    %v189 = vlaneseq
    %v190 = vshrl.u32 %v189, 7
    %v191 = vsub.s32 %v188, %v190
    %v192 = vrot.slane %v165, %v191
    %v194 = vunpack.c.l.s4 1983009808
    %v195 = vunpack.c.0.s8 %v194
    %v196 = vlaneseq
    %v197 = vshrl.u32 %v196, 7
    %v198 = vsub.s32 %v195, %v197
    %v199 = vrot.slane %v185, %v198
    %v200 = vcombine.high %v192, %v192
    %v201 = vcombine.high %v199, %v199
    %vm202 = vcmask 31744
    %v204 = vsel %vm202, %v155, 0
    %vm206 = vcmask 1041408
    %v208 = vsel %vm206, %v175, 0
    %v211 = vsel %vm206, %v183, 0
    %v214 = vsel %vm206, %v182, 0
    %v217 = vsel %vm206, %v184, 0
    %v220 = vsel %vm206, %v192, 0
    %v223 = vsel %vm206, %v200, 0
    %v226 = vsel %vm206, %v199, 0
    %v229 = vsel %vm206, %v201, 0
    %231 = vmatprep.subr.bf16.mxu0 0
    %232 = vmatpush1.bf16.msra.mxu0 0
    %233 = vmatprep.subr.bf16.mxu0 0
    %234 = vmatpush1.bf16.msra.mxu0 0
    %235 = vmatprep.subr.bf16.mxu0 0
    %236 = vmatpush1.bf16.msra.mxu0 0
    %237 = vmatprep.subr.bf16.mxu0 0
    %238 = vmatpush1.bf16.msra.mxu0 0
    %239 = vmatprep.subr.bf16.mxu0 0
    %240 = vmatpush1.bf16.msra.mxu0 0
    %241 = vmatprep.subr.bf16.mxu0 0
    %242 = vmatpush1.bf16.msra.mxu0 0
    %243 = vmatprep.subr.bf16.mxu0 0
    %244 = vmatpush1.bf16.msra.mxu0 0
    %245 = vmatprep.subr.bf16.mxu0 %v211
    %246 = vmatpush1.bf16.msra.mxu0 %v208
    %247 = vmatprep.subr.bf16.mxu0 0
    %248 = vmatpush2.bf16.msra.mxu0 0
    %249 = vmatprep.subr.bf16.mxu0 0
    %250 = vmatpush2.bf16.msra.mxu0 0
    %251 = vmatprep.subr.bf16.mxu0 0
    %252 = vmatpush2.bf16.msra.mxu0 0
    %253 = vmatprep.subr.bf16.mxu0 0
    %254 = vmatpush2.bf16.msra.mxu0 0
    %255 = vmatprep.subr.bf16.mxu0 0
    %256 = vmatpush2.bf16.msra.mxu0 0
    %257 = vmatprep.subr.bf16.mxu0 0
    %258 = vmatpush2.bf16.msra.mxu0 0
    %259 = vmatprep.subr.bf16.mxu0 0
    %260 = vmatpush2.bf16.msra.mxu0 0
    %261 = vmatprep.subr.bf16.mxu0 0
    %262 = vmatpush2.bf16.msra.mxu0 0
    %263 = vmatprep.mubr.bf16.mxu0 0
    %264 = vmatmul.mubr.bf16.gmra.mxu0 %v204
    %v265 = vpop.f32.mrf.mxu0
    %v266 = vadd.f32 0.0, %v265
    %v267 = vpop.f32.mrf.mxu0
    %v268 = vadd.f32 0.0, %v267
    %v269 = vpop.f32.mrf.mxu0
    %v270 = vpop.f32.mrf.mxu0
    %271 = vdwg.mxu0
    %272 = vmatprep.subr.bf16.mxu0 0
    %273 = vmatpush1.bf16.msra.mxu0 0
    %274 = vmatprep.subr.bf16.mxu0 0
    %275 = vmatpush1.bf16.msra.mxu0 0
    %276 = vmatprep.subr.bf16.mxu0 0
    %277 = vmatpush1.bf16.msra.mxu0 0
    %278 = vmatprep.subr.bf16.mxu0 0
    %279 = vmatpush1.bf16.msra.mxu0 0
    %280 = vmatprep.subr.bf16.mxu0 0
    %281 = vmatpush1.bf16.msra.mxu0 0
    %282 = vmatprep.subr.bf16.mxu0 0
    %283 = vmatpush1.bf16.msra.mxu0 0
    %284 = vmatprep.subr.bf16.mxu0 0
    %285 = vmatpush1.bf16.msra.mxu0 0
    %286 = vmatprep.subr.bf16.mxu0 %v217
    %287 = vmatpush1.bf16.msra.mxu0 %v214
    %288 = vmatprep.subr.bf16.mxu0 0
    %289 = vmatpush2.bf16.msra.mxu0 0
    %290 = vmatprep.subr.bf16.mxu0 0
    %291 = vmatpush2.bf16.msra.mxu0 0
    %292 = vmatprep.subr.bf16.mxu0 0
    %293 = vmatpush2.bf16.msra.mxu0 0
    %294 = vmatprep.subr.bf16.mxu0 0
    %295 = vmatpush2.bf16.msra.mxu0 0
    %296 = vmatprep.subr.bf16.mxu0 0
    %297 = vmatpush2.bf16.msra.mxu0 0
    %298 = vmatprep.subr.bf16.mxu0 0
    %299 = vmatpush2.bf16.msra.mxu0 0
    %300 = vmatprep.subr.bf16.mxu0 0
    %301 = vmatpush2.bf16.msra.mxu0 0
    %302 = vmatprep.subr.bf16.mxu0 0
    %303 = vmatpush2.bf16.msra.mxu0 0
    %304 = vmatprep.mubr.bf16.mxu0 0
    %305 = vmatmul.mubr.bf16.gmra.mxu0 %v204
    %v306 = vpop.f32.mrf.mxu0
    %v307 = vadd.f32 0.0, %v306
    %v308 = vpop.f32.mrf.mxu0
    %v309 = vadd.f32 0.0, %v308
    %v310 = vpop.f32.mrf.mxu0
    %v311 = vpop.f32.mrf.mxu0
    %312 = vdwg.mxu0
    %313 = vmatprep.subr.bf16.mxu0 0
    %314 = vmatpush1.bf16.msra.mxu0 0
    %315 = vmatprep.subr.bf16.mxu0 0
    %316 = vmatpush1.bf16.msra.mxu0 0
    %317 = vmatprep.subr.bf16.mxu0 0
    %318 = vmatpush1.bf16.msra.mxu0 0
    %319 = vmatprep.subr.bf16.mxu0 0
    %320 = vmatpush1.bf16.msra.mxu0 0
    %321 = vmatprep.subr.bf16.mxu0 0
    %322 = vmatpush1.bf16.msra.mxu0 0
    %323 = vmatprep.subr.bf16.mxu0 0
    %324 = vmatpush1.bf16.msra.mxu0 0
    %325 = vmatprep.subr.bf16.mxu0 0
    %326 = vmatpush1.bf16.msra.mxu0 0
    %327 = vmatprep.subr.bf16.mxu0 %v223
    %328 = vmatpush1.bf16.msra.mxu0 %v220
    %329 = vmatprep.subr.bf16.mxu0 0
    %330 = vmatpush2.bf16.msra.mxu0 0
    %331 = vmatprep.subr.bf16.mxu0 0
    %332 = vmatpush2.bf16.msra.mxu0 0
    %333 = vmatprep.subr.bf16.mxu0 0
    %334 = vmatpush2.bf16.msra.mxu0 0
    %335 = vmatprep.subr.bf16.mxu0 0
    %336 = vmatpush2.bf16.msra.mxu0 0
    %337 = vmatprep.subr.bf16.mxu0 0
    %338 = vmatpush2.bf16.msra.mxu0 0
    %339 = vmatprep.subr.bf16.mxu0 0
    %340 = vmatpush2.bf16.msra.mxu0 0
    %341 = vmatprep.subr.bf16.mxu0 0
    %342 = vmatpush2.bf16.msra.mxu0 0
    %343 = vmatprep.subr.bf16.mxu0 0
    %344 = vmatpush2.bf16.msra.mxu0 0
    %345 = vmatprep.mubr.bf16.mxu0 0
    %346 = vmatmul.mubr.bf16.gmra.mxu0 %v204
    %v347 = vpop.f32.mrf.mxu0
    %v348 = vadd.f32 0.0, %v347
    %v349 = vpop.f32.mrf.mxu0
    %v350 = vadd.f32 0.0, %v349
    %v351 = vpop.f32.mrf.mxu0
    %v352 = vpop.f32.mrf.mxu0
    %353 = vdwg.mxu0
    %354 = vmatprep.subr.bf16.mxu0 0
    %355 = vmatpush1.bf16.msra.mxu0 0
    %356 = vmatprep.subr.bf16.mxu0 0
    %357 = vmatpush1.bf16.msra.mxu0 0
    %358 = vmatprep.subr.bf16.mxu0 0
    %359 = vmatpush1.bf16.msra.mxu0 0
    %360 = vmatprep.subr.bf16.mxu0 0
    %361 = vmatpush1.bf16.msra.mxu0 0
    %362 = vmatprep.subr.bf16.mxu0 0
    %363 = vmatpush1.bf16.msra.mxu0 0
    %364 = vmatprep.subr.bf16.mxu0 0
    %365 = vmatpush1.bf16.msra.mxu0 0
    %366 = vmatprep.subr.bf16.mxu0 0
    %367 = vmatpush1.bf16.msra.mxu0 0
    %368 = vmatprep.subr.bf16.mxu0 %v229
    %369 = vmatpush1.bf16.msra.mxu0 %v226
    %370 = vmatprep.subr.bf16.mxu0 0
    %371 = vmatpush2.bf16.msra.mxu0 0
    %372 = vmatprep.subr.bf16.mxu0 0
    %373 = vmatpush2.bf16.msra.mxu0 0
    %374 = vmatprep.subr.bf16.mxu0 0
    %375 = vmatpush2.bf16.msra.mxu0 0
    %376 = vmatprep.subr.bf16.mxu0 0
    %377 = vmatpush2.bf16.msra.mxu0 0
    %378 = vmatprep.subr.bf16.mxu0 0
    %379 = vmatpush2.bf16.msra.mxu0 0
    %380 = vmatprep.subr.bf16.mxu0 0
    %381 = vmatpush2.bf16.msra.mxu0 0
    %382 = vmatprep.subr.bf16.mxu0 0
    %383 = vmatpush2.bf16.msra.mxu0 0
    %384 = vmatprep.subr.bf16.mxu0 0
    %385 = vmatpush2.bf16.msra.mxu0 0
    %386 = vmatprep.mubr.bf16.mxu0 0
    %387 = vmatmul.mubr.bf16.gmra.mxu0 %v204
    %v388 = vpop.f32.mrf.mxu0
    %v389 = vadd.f32 0.0, %v388
    %v390 = vpop.f32.mrf.mxu0
    %v391 = vadd.f32 0.0, %v390
    %v392 = vpop.f32.mrf.mxu0
    %v393 = vpop.f32.mrf.mxu0
    %394 = vdwg.mxu0
    %v403 = vunpack.c.l.b16 %v156
    %v404 = vunpack.c.h.b16 %v156
    %v405 = vunpack.c.l.b16 %v157
    %v406 = vunpack.c.h.b16 %v157
    %v407 = vunpack.c.l.b16 %v158
    %v408 = vunpack.c.h.b16 %v158
    %v409 = vunpack.c.l.b16 %v159
    %v410 = vunpack.c.h.b16 %v159
    %v411 = vunpack.c.l.b16 %v160
    %v412 = vunpack.c.h.b16 %v160
    %v413 = vunpack.c.l.b16 %v161
    %v414 = vunpack.c.h.b16 %v161
    %v415 = vunpack.c.l.b16 %v162
    %v416 = vunpack.c.h.b16 %v162
    %v417 = vunpack.c.l.b16 %v163
    %v418 = vunpack.c.h.b16 %v163
    %v419 = vpack.c.b16 %v411, %v403
    %v420 = vpack.c.b16 %v412, %v404
    %v421 = vpack.c.b16 %v413, %v405
    %v422 = vpack.c.b16 %v414, %v406
    %v423 = vpack.c.b16 %v415, %v407
    %v424 = vpack.c.b16 %v416, %v408
    %v425 = vpack.c.b16 %v417, %v409
    %v426 = vpack.c.b16 %v418, %v410
    %vm435 = vcmask 130048
    %v437 = vsel %vm435, %v153, 0
    %439 = vmatprep.subr.bf16.mxu0 0
    %440 = vmatpush1.bf16.msra.mxu0 0
    %441 = vmatprep.subr.bf16.mxu0 0
    %442 = vmatpush1.bf16.msra.mxu0 0
    %443 = vmatprep.subr.bf16.mxu0 0
    %444 = vmatpush1.bf16.msra.mxu0 0
    %445 = vmatprep.subr.bf16.mxu0 0
    %446 = vmatpush1.bf16.msra.mxu0 0
    %447 = vmatprep.subr.bf16.mxu0 0
    %448 = vmatpush1.bf16.msra.mxu0 0
    %449 = vmatprep.subr.bf16.mxu0 0
    %450 = vmatpush1.bf16.msra.mxu0 0
    %451 = vmatprep.subr.bf16.mxu0 0
    %452 = vmatpush1.bf16.msra.mxu0 0
    %453 = vmatprep.subr.bf16.mxu0 %v420
    %454 = vmatpush1.bf16.msra.mxu0 %v419
    %455 = vmatprep.subr.bf16.mxu0 0
    %456 = vmatpush2.bf16.msra.mxu0 0
    %457 = vmatprep.subr.bf16.mxu0 0
    %458 = vmatpush2.bf16.msra.mxu0 0
    %459 = vmatprep.subr.bf16.mxu0 0
    %460 = vmatpush2.bf16.msra.mxu0 0
    %461 = vmatprep.subr.bf16.mxu0 0
    %462 = vmatpush2.bf16.msra.mxu0 0
    %463 = vmatprep.subr.bf16.mxu0 0
    %464 = vmatpush2.bf16.msra.mxu0 0
    %465 = vmatprep.subr.bf16.mxu0 0
    %466 = vmatpush2.bf16.msra.mxu0 0
    %467 = vmatprep.subr.bf16.mxu0 0
    %468 = vmatpush2.bf16.msra.mxu0 0
    %469 = vmatprep.subr.bf16.mxu0 0
    %470 = vmatpush2.bf16.msra.mxu0 0
    %471 = vmatprep.mubr.bf16.mxu0 0
    %472 = vmatmul.mubr.bf16.gmra.mxu0 %v437
    %v473 = vpop.f32.mrf.mxu0
    %v474 = vadd.f32 %v266, %v473
    %v475 = vpop.f32.mrf.mxu0
    %v476 = vadd.f32 %v268, %v475
    %v477 = vpop.f32.mrf.mxu0
    %v478 = vpop.f32.mrf.mxu0
    %479 = vdwg.mxu0
    %480 = vmatprep.subr.bf16.mxu0 0
    %481 = vmatpush1.bf16.msra.mxu0 0
    %482 = vmatprep.subr.bf16.mxu0 0
    %483 = vmatpush1.bf16.msra.mxu0 0
    %484 = vmatprep.subr.bf16.mxu0 0
    %485 = vmatpush1.bf16.msra.mxu0 0
    %486 = vmatprep.subr.bf16.mxu0 0
    %487 = vmatpush1.bf16.msra.mxu0 0
    %488 = vmatprep.subr.bf16.mxu0 0
    %489 = vmatpush1.bf16.msra.mxu0 0
    %490 = vmatprep.subr.bf16.mxu0 0
    %491 = vmatpush1.bf16.msra.mxu0 0
    %492 = vmatprep.subr.bf16.mxu0 0
    %493 = vmatpush1.bf16.msra.mxu0 0
    %494 = vmatprep.subr.bf16.mxu0 %v422
    %495 = vmatpush1.bf16.msra.mxu0 %v421
    %496 = vmatprep.subr.bf16.mxu0 0
    %497 = vmatpush2.bf16.msra.mxu0 0
    %498 = vmatprep.subr.bf16.mxu0 0
    %499 = vmatpush2.bf16.msra.mxu0 0
    %500 = vmatprep.subr.bf16.mxu0 0
    %501 = vmatpush2.bf16.msra.mxu0 0
    %502 = vmatprep.subr.bf16.mxu0 0
    %503 = vmatpush2.bf16.msra.mxu0 0
    %504 = vmatprep.subr.bf16.mxu0 0
    %505 = vmatpush2.bf16.msra.mxu0 0
    %506 = vmatprep.subr.bf16.mxu0 0
    %507 = vmatpush2.bf16.msra.mxu0 0
    %508 = vmatprep.subr.bf16.mxu0 0
    %509 = vmatpush2.bf16.msra.mxu0 0
    %510 = vmatprep.subr.bf16.mxu0 0
    %511 = vmatpush2.bf16.msra.mxu0 0
    %512 = vmatprep.mubr.bf16.mxu0 0
    %513 = vmatmul.mubr.bf16.gmra.mxu0 %v437
    %v514 = vpop.f32.mrf.mxu0
    %v515 = vadd.f32 %v307, %v514
    %v516 = vpop.f32.mrf.mxu0
    %v517 = vadd.f32 %v309, %v516
    %v518 = vpop.f32.mrf.mxu0
    %v519 = vpop.f32.mrf.mxu0
    %520 = vdwg.mxu0
    %521 = vmatprep.subr.bf16.mxu0 0
    %522 = vmatpush1.bf16.msra.mxu0 0
    %523 = vmatprep.subr.bf16.mxu0 0
    %524 = vmatpush1.bf16.msra.mxu0 0
    %525 = vmatprep.subr.bf16.mxu0 0
    %526 = vmatpush1.bf16.msra.mxu0 0
    %527 = vmatprep.subr.bf16.mxu0 0
    %528 = vmatpush1.bf16.msra.mxu0 0
    %529 = vmatprep.subr.bf16.mxu0 0
    %530 = vmatpush1.bf16.msra.mxu0 0
    %531 = vmatprep.subr.bf16.mxu0 0
    %532 = vmatpush1.bf16.msra.mxu0 0
    %533 = vmatprep.subr.bf16.mxu0 0
    %534 = vmatpush1.bf16.msra.mxu0 0
    %535 = vmatprep.subr.bf16.mxu0 %v424
    %536 = vmatpush1.bf16.msra.mxu0 %v423
    %537 = vmatprep.subr.bf16.mxu0 0
    %538 = vmatpush2.bf16.msra.mxu0 0
    %539 = vmatprep.subr.bf16.mxu0 0
    %540 = vmatpush2.bf16.msra.mxu0 0
    %541 = vmatprep.subr.bf16.mxu0 0
    %542 = vmatpush2.bf16.msra.mxu0 0
    %543 = vmatprep.subr.bf16.mxu0 0
    %544 = vmatpush2.bf16.msra.mxu0 0
    %545 = vmatprep.subr.bf16.mxu0 0
    %546 = vmatpush2.bf16.msra.mxu0 0
    %547 = vmatprep.subr.bf16.mxu0 0
    %548 = vmatpush2.bf16.msra.mxu0 0
    %549 = vmatprep.subr.bf16.mxu0 0
    %550 = vmatpush2.bf16.msra.mxu0 0
    %551 = vmatprep.subr.bf16.mxu0 0
    %552 = vmatpush2.bf16.msra.mxu0 0
    %553 = vmatprep.mubr.bf16.mxu0 0
    %554 = vmatmul.mubr.bf16.gmra.mxu0 %v437
    %v555 = vpop.f32.mrf.mxu0
    %v556 = vadd.f32 %v348, %v555
    %v557 = vpop.f32.mrf.mxu0
    %v558 = vadd.f32 %v350, %v557
    %v559 = vpop.f32.mrf.mxu0
    %v560 = vpop.f32.mrf.mxu0
    %561 = vdwg.mxu0
    %562 = vmatprep.subr.bf16.mxu0 0
    %563 = vmatpush1.bf16.msra.mxu0 0
    %564 = vmatprep.subr.bf16.mxu0 0
    %565 = vmatpush1.bf16.msra.mxu0 0
    %566 = vmatprep.subr.bf16.mxu0 0
    %567 = vmatpush1.bf16.msra.mxu0 0
    %568 = vmatprep.subr.bf16.mxu0 0
    %569 = vmatpush1.bf16.msra.mxu0 0
    %570 = vmatprep.subr.bf16.mxu0 0
    %571 = vmatpush1.bf16.msra.mxu0 0
    %572 = vmatprep.subr.bf16.mxu0 0
    %573 = vmatpush1.bf16.msra.mxu0 0
    %574 = vmatprep.subr.bf16.mxu0 0
    %575 = vmatpush1.bf16.msra.mxu0 0
    %576 = vmatprep.subr.bf16.mxu0 %v426
    %577 = vmatpush1.bf16.msra.mxu0 %v425
    %578 = vmatprep.subr.bf16.mxu0 0
    %579 = vmatpush2.bf16.msra.mxu0 0
    %580 = vmatprep.subr.bf16.mxu0 0
    %581 = vmatpush2.bf16.msra.mxu0 0
    %582 = vmatprep.subr.bf16.mxu0 0
    %583 = vmatpush2.bf16.msra.mxu0 0
    %584 = vmatprep.subr.bf16.mxu0 0
    %585 = vmatpush2.bf16.msra.mxu0 0
    %586 = vmatprep.subr.bf16.mxu0 0
    %587 = vmatpush2.bf16.msra.mxu0 0
    %588 = vmatprep.subr.bf16.mxu0 0
    %589 = vmatpush2.bf16.msra.mxu0 0
    %590 = vmatprep.subr.bf16.mxu0 0
    %591 = vmatpush2.bf16.msra.mxu0 0
    %592 = vmatprep.subr.bf16.mxu0 0
    %593 = vmatpush2.bf16.msra.mxu0 0
    %594 = vmatprep.mubr.bf16.mxu0 0
    %595 = vmatmul.mubr.bf16.gmra.mxu0 %v437
    %v596 = vpop.f32.mrf.mxu0
    %v597 = vadd.f32 %v389, %v596
    %v598 = vpop.f32.mrf.mxu0
    %v599 = vadd.f32 %v391, %v598
    %v600 = vpop.f32.mrf.mxu0
    %v601 = vpop.f32.mrf.mxu0
    %602 = vdwg.mxu0
    %v603 = vld [vmem:[#allocation8] sm:$0xff]
    %v605 = vlaneseq
    %v606 = vshrl.u32 %v605, 7
    %v607 = vsub.s32 0, %v606
    %v608 = vrot.slane %v603, %v607
    %v609 = vlaneseq
    %v610 = vshrl.u32 %v609, 7
    %v611 = vsub.s32 1, %v610
    %v612 = vrot.slane %v603, %v611
    %v613 = vlaneseq
    %v614 = vshrl.u32 %v613, 7
    %v615 = vsub.s32 2, %v614
    %v616 = vrot.slane %v603, %v615
    %v617 = vlaneseq
    %v618 = vshrl.u32 %v617, 7
    %v619 = vsub.s32 3, %v618
    %v620 = vrot.slane %v603, %v619
    %v621 = vlaneseq
    %v622 = vshrl.u32 %v621, 7
    %v623 = vsub.s32 4, %v622
    %v624 = vrot.slane %v603, %v623
    %v625 = vlaneseq
    %v626 = vshrl.u32 %v625, 7
    %v627 = vsub.s32 5, %v626
    %v628 = vrot.slane %v603, %v627
    %v629 = vlaneseq
    %v630 = vshrl.u32 %v629, 7
    %v631 = vsub.s32 6, %v630
    %v632 = vrot.slane %v603, %v631
    %v633 = vlaneseq
    %v634 = vshrl.u32 %v633, 7
    %v635 = vsub.s32 7, %v634
    %v636 = vrot.slane %v603, %v635
    %v645 = vadd.f32 %v474, %v608
    %v646 = vadd.f32 %v476, %v612
    %v647 = vadd.f32 %v515, %v616
    %v648 = vadd.f32 %v517, %v620
    %v649 = vadd.f32 %v556, %v624
    %v650 = vadd.f32 %v558, %v628
    %v651 = vadd.f32 %v597, %v632
    %v652 = vadd.f32 %v599, %v636
    %v653 = vmin.f32 %v645, 20.0
    %v654 = vmin.f32 %v646, 20.0
    %v655 = vmin.f32 %v647, 20.0
    %v656 = vmin.f32 %v648, 20.0
    %v657 = vmul.f32 %v653, 1.442695
    %v658 = vpow.pop %v657
    %v659 = vmul.f32 %v654, 1.442695
    %v660 = vpow.pop %v659
    %v661 = vmul.f32 %v655, 1.442695
    %v662 = vpow.pop %v661
    %v663 = vmul.f32 %v656, 1.442695
    %v664 = vpow.pop %v663
    %v665 = vadd.f32 %v658, 1.0
    %v666 = vadd.f32 %v660, 1.0
    %v667 = vadd.f32 %v662, 1.0
    %v668 = vadd.f32 %v664, 1.0
    %v669 = vmul.f32 %v665, %v665
    %v670 = vmul.f32 %v666, %v666
    %v671 = vmul.f32 %v667, %v667
    %v672 = vmul.f32 %v668, %v668
    %v673 = vsub.f32 %v669, 1.0
    %v674 = vsub.f32 %v670, 1.0
    %v675 = vsub.f32 %v671, 1.0
    %v676 = vsub.f32 %v672, 1.0
    %v677 = vadd.f32 %v669, 1.0
    %v678 = vadd.f32 %v670, 1.0
    %v679 = vadd.f32 %v671, 1.0
    %v680 = vadd.f32 %v672, 1.0
    %v681 = vrcp.pop %v677
    %v682 = vrcp.pop %v678
    %v683 = vrcp.pop %v679
    %v684 = vrcp.pop %v680
    %v685 = vmul.f32 %v673, %v681
    %v686 = vmul.f32 %v674, %v682
    %v687 = vmul.f32 %v675, %v683
    %v688 = vmul.f32 %v676, %v684
    %v689 = vmul.f32 %v645, %v685
    %v690 = vmul.f32 %v646, %v686
    %v691 = vmul.f32 %v647, %v687
    %v692 = vmul.f32 %v648, %v688
    %v693 = vpack.c.bf16 %v689, %v689
    %v694 = vpack.c.bf16 %v690, %v690
    %v695 = vpack.c.bf16 %v691, %v691
    %v696 = vpack.c.bf16 %v692, %v692
    %v697 = vld [vmem:[#allocation9] sm:$0xff]
    %v698 = vld [vmem:[#allocation9 + $0x8] sm:$0xff]
    %v699 = vld [vmem:[#allocation9 + $0x10] sm:$0xff]
    %v700 = vld [vmem:[#allocation9 + $0x18] sm:$0xff]
    %v701 = vld [vmem:[#allocation9 + $0x20] sm:$0xff]
    %v702 = vld [vmem:[#allocation9 + $0x28] sm:$0xff]
    %v703 = vld [vmem:[#allocation9 + $0x30] sm:$0xff]
    %v704 = vld [vmem:[#allocation9 + $0x38] sm:$0xff]
    %v705 = vld [vmem:[#allocation9 + $0x40] sm:$0xff]
    %v706 = vld [vmem:[#allocation9 + $0x48] sm:$0xff]
    %v707 = vld [vmem:[#allocation9 + $0x50] sm:$0xff]
    %v708 = vld [vmem:[#allocation9 + $0x58] sm:$0xff]
    %v709 = vld [vmem:[#allocation9 + $0x60] sm:$0xff]
    %v710 = vld [vmem:[#allocation9 + $0x68] sm:$0xff]
    %v711 = vld [vmem:[#allocation9 + $0x70] sm:$0xff]
    %v712 = vld [vmem:[#allocation9 + $0x78] sm:$0xff]
    %v713 = vld [vmem:[#allocation9 + $0x80] sm:$0xff]
    %v714 = vld [vmem:[#allocation9 + $0x88] sm:$0xff]
    %v715 = vld [vmem:[#allocation9 + $0x90] sm:$0xff]
    %v716 = vld [vmem:[#allocation9 + $0x98] sm:$0xff]
    %v717 = vld [vmem:[#allocation9 + $0xa0] sm:$0xff]
    %v718 = vld [vmem:[#allocation9 + $0xa8] sm:$0xff]
    %v719 = vld [vmem:[#allocation9 + $0xb0] sm:$0xff]
    %v720 = vld [vmem:[#allocation9 + $0xb8] sm:$0xff]
    %v721 = vld [vmem:[#allocation9 + $0xc0] sm:$0xff]
    %v722 = vld [vmem:[#allocation9 + $0xc8] sm:$0xff]
    %v723 = vld [vmem:[#allocation9 + $0xd0] sm:$0xff]
    %v724 = vld [vmem:[#allocation9 + $0xd8] sm:$0xff]
    %v725 = vld [vmem:[#allocation9 + $0xe0] sm:$0xff]
    %v726 = vld [vmem:[#allocation9 + $0xe8] sm:$0xff]
    %v727 = vld [vmem:[#allocation9 + $0xf0] sm:$0xff]
    %v728 = vld [vmem:[#allocation9 + $0xf8] sm:$0xff]
    %v729 = vld [vmem:[#allocation9 + $0x100] sm:$0xff]
    %v730 = vld [vmem:[#allocation9 + $0x108] sm:$0xff]
    %v731 = vld [vmem:[#allocation9 + $0x110] sm:$0xff]
    %v732 = vld [vmem:[#allocation9 + $0x118] sm:$0xff]
    %v733 = vld [vmem:[#allocation9 + $0x120] sm:$0xff]
    %v734 = vld [vmem:[#allocation9 + $0x128] sm:$0xff]
    %v735 = vld [vmem:[#allocation9 + $0x130] sm:$0xff]
    %v736 = vld [vmem:[#allocation9 + $0x138] sm:$0xff]
    %v737 = vld [vmem:[#allocation9 + $0x140] sm:$0xff]
    %v738 = vld [vmem:[#allocation9 + $0x148] sm:$0xff]
    %v739 = vld [vmem:[#allocation9 + $0x150] sm:$0xff]
    %v740 = vld [vmem:[#allocation9 + $0x158] sm:$0xff]
    %v741 = vld [vmem:[#allocation9 + $0x160] sm:$0xff]
    %v742 = vld [vmem:[#allocation9 + $0x168] sm:$0xff]
    %v743 = vld [vmem:[#allocation9 + $0x170] sm:$0xff]
    %v744 = vld [vmem:[#allocation9 + $0x178] sm:$0xff]
    %v745 = vld [vmem:[#allocation9 + $0x180] sm:$0xff]
    %v746 = vld [vmem:[#allocation9 + $0x188] sm:$0xff]
    %v747 = vld [vmem:[#allocation9 + $0x190] sm:$0xff]
    %v748 = vld [vmem:[#allocation9 + $0x198] sm:$0xff]
    %v749 = vld [vmem:[#allocation9 + $0x1a0] sm:$0xff]
    %v750 = vld [vmem:[#allocation9 + $0x1a8] sm:$0xff]
    %v751 = vld [vmem:[#allocation9 + $0x1b0] sm:$0xff]
    %v752 = vld [vmem:[#allocation9 + $0x1b8] sm:$0xff]
    %v753 = vld [vmem:[#allocation9 + $0x1c0] sm:$0xff]
    %v754 = vld [vmem:[#allocation9 + $0x1c8] sm:$0xff]
    %v755 = vld [vmem:[#allocation9 + $0x1d0] sm:$0xff]
    %v756 = vld [vmem:[#allocation9 + $0x1d8] sm:$0xff]
    %v757 = vld [vmem:[#allocation9 + $0x1e0] sm:$0xff]
    %v758 = vld [vmem:[#allocation9 + $0x1e8] sm:$0xff]
    %v759 = vld [vmem:[#allocation9 + $0x1f0] sm:$0xff]
    %v760 = vld [vmem:[#allocation9 + $0x1f8] sm:$0xff]
    %v761 = vld [vmem:[#allocation9 + $0x200] sm:$0xff]
    %v762 = vld [vmem:[#allocation9 + $0x208] sm:$0xff]
    %v763 = vld [vmem:[#allocation9 + $0x210] sm:$0xff]
    %v764 = vld [vmem:[#allocation9 + $0x218] sm:$0xff]
    %v765 = vld [vmem:[#allocation9 + $0x220] sm:$0xff]
    %v766 = vld [vmem:[#allocation9 + $0x228] sm:$0xff]
    %v767 = vld [vmem:[#allocation9 + $0x230] sm:$0xff]
    %v768 = vld [vmem:[#allocation9 + $0x238] sm:$0xff]
    %v769 = vld [vmem:[#allocation9 + $0x240] sm:$0xff]
    %v770 = vld [vmem:[#allocation9 + $0x248] sm:$0xff]
    %v771 = vld [vmem:[#allocation9 + $0x250] sm:$0xff]
    %v772 = vld [vmem:[#allocation9 + $0x258] sm:$0xff]
    %v773 = vld [vmem:[#allocation9 + $0x260] sm:$0xff]
    %v774 = vld [vmem:[#allocation9 + $0x268] sm:$0xff]
    %v775 = vld [vmem:[#allocation9 + $0x270] sm:$0xff]
    %v776 = vld [vmem:[#allocation9 + $0x278] sm:$0xff]
    %v777 = vld [vmem:[#allocation9 + $0x280] sm:$0xff]
    %v778 = vld [vmem:[#allocation9 + $0x288] sm:$0xff]
    %v779 = vld [vmem:[#allocation9 + $0x290] sm:$0xff]
    %v780 = vld [vmem:[#allocation9 + $0x298] sm:$0xff]
    %v781 = vld [vmem:[#allocation9 + $0x2a0] sm:$0xff]
    %v782 = vld [vmem:[#allocation9 + $0x2a8] sm:$0xff]
    %v783 = vld [vmem:[#allocation9 + $0x2b0] sm:$0xff]
    %v784 = vld [vmem:[#allocation9 + $0x2b8] sm:$0xff]
    %v785 = vld [vmem:[#allocation9 + $0x2c0] sm:$0xff]
    %v786 = vld [vmem:[#allocation9 + $0x2c8] sm:$0xff]
    %v787 = vld [vmem:[#allocation9 + $0x2d0] sm:$0xff]
    %v788 = vld [vmem:[#allocation9 + $0x2d8] sm:$0xff]
    %v789 = vld [vmem:[#allocation9 + $0x2e0] sm:$0xff]
    %v790 = vld [vmem:[#allocation9 + $0x2e8] sm:$0xff]
    %v791 = vld [vmem:[#allocation9 + $0x2f0] sm:$0xff]
    %v792 = vld [vmem:[#allocation9 + $0x2f8] sm:$0xff]
    %v793 = vld [vmem:[#allocation9 + $0x300] sm:$0xff]
    %v794 = vld [vmem:[#allocation9 + $0x308] sm:$0xff]
    %v795 = vld [vmem:[#allocation9 + $0x310] sm:$0xff]
    %v796 = vld [vmem:[#allocation9 + $0x318] sm:$0xff]
    %v797 = vld [vmem:[#allocation9 + $0x320] sm:$0xff]
    %v798 = vld [vmem:[#allocation9 + $0x328] sm:$0xff]
    %v799 = vld [vmem:[#allocation9 + $0x330] sm:$0xff]
    %v800 = vld [vmem:[#allocation9 + $0x338] sm:$0xff]
    %v801 = vld [vmem:[#allocation9 + $0x340] sm:$0xff]
    %v802 = vld [vmem:[#allocation9 + $0x348] sm:$0xff]
    %v803 = vld [vmem:[#allocation9 + $0x350] sm:$0xff]
    %v804 = vld [vmem:[#allocation9 + $0x358] sm:$0xff]
    %v805 = vld [vmem:[#allocation9 + $0x360] sm:$0xff]
    %v806 = vld [vmem:[#allocation9 + $0x368] sm:$0xff]
    %v807 = vld [vmem:[#allocation9 + $0x370] sm:$0xff]
    %v808 = vld [vmem:[#allocation9 + $0x378] sm:$0xff]
    %v809 = vld [vmem:[#allocation9 + $0x380] sm:$0xff]
    %v810 = vld [vmem:[#allocation9 + $0x388] sm:$0xff]
    %v811 = vld [vmem:[#allocation9 + $0x390] sm:$0xff]
    %v812 = vld [vmem:[#allocation9 + $0x398] sm:$0xff]
    %v813 = vld [vmem:[#allocation9 + $0x3a0] sm:$0xff]
    %v814 = vld [vmem:[#allocation9 + $0x3a8] sm:$0xff]
    %v815 = vld [vmem:[#allocation9 + $0x3b0] sm:$0xff]
    %v816 = vld [vmem:[#allocation9 + $0x3b8] sm:$0xff]
    %v817 = vld [vmem:[#allocation9 + $0x3c0] sm:$0xff]
    %v818 = vld [vmem:[#allocation9 + $0x3c8] sm:$0xff]
    %v819 = vld [vmem:[#allocation9 + $0x3d0] sm:$0xff]
    %v820 = vld [vmem:[#allocation9 + $0x3d8] sm:$0xff]
    %v821 = vld [vmem:[#allocation9 + $0x3e0] sm:$0xff]
    %v822 = vld [vmem:[#allocation9 + $0x3e8] sm:$0xff]
    %v823 = vld [vmem:[#allocation9 + $0x3f0] sm:$0xff]
    %v824 = vld [vmem:[#allocation9 + $0x3f8] sm:$0xff]
    %v825 = vld [vmem:[%s6] sm:$0xf]
    %v827 = vlaneseq
    %v828 = vshrl.u32 %v827, 7
    %v829 = vsub.s32 0, %v828
    %v830 = vrot.slane %v825, %v829
    %v831 = vlaneseq
    %v832 = vshrl.u32 %v831, 7
    %v833 = vsub.s32 1, %v832
    %v834 = vrot.slane %v825, %v833
    %v835 = vlaneseq
    %v836 = vshrl.u32 %v835, 7
    %v837 = vsub.s32 2, %v836
    %v838 = vrot.slane %v825, %v837
    %v839 = vlaneseq
    %v840 = vshrl.u32 %v839, 7
    %v841 = vsub.s32 3, %v840
    %v842 = vrot.slane %v825, %v841
    %v975 = vunpack.c.l.b16 %v697
    %v976 = vunpack.c.h.b16 %v697
    %v977 = vunpack.c.l.b16 %v698
    %v978 = vunpack.c.h.b16 %v698
    %v979 = vunpack.c.l.b16 %v699
    %v980 = vunpack.c.h.b16 %v699
    %v981 = vunpack.c.l.b16 %v700
    %v982 = vunpack.c.h.b16 %v700
    %v983 = vunpack.c.l.b16 %v701
    %v984 = vunpack.c.h.b16 %v701
    %v985 = vunpack.c.l.b16 %v702
    %v986 = vunpack.c.h.b16 %v702
    %v987 = vunpack.c.l.b16 %v703
    %v988 = vunpack.c.h.b16 %v703
    %v989 = vunpack.c.l.b16 %v704
    %v990 = vunpack.c.h.b16 %v704
    %v991 = vunpack.c.l.b16 %v705
    %v992 = vunpack.c.h.b16 %v705
    %v993 = vunpack.c.l.b16 %v706
    %v994 = vunpack.c.h.b16 %v706
    %v995 = vunpack.c.l.b16 %v707
    %v996 = vunpack.c.h.b16 %v707
    %v997 = vunpack.c.l.b16 %v708
    %v998 = vunpack.c.h.b16 %v708
    %v999 = vunpack.c.l.b16 %v709
    %v1000 = vunpack.c.h.b16 %v709
    %v1001 = vunpack.c.l.b16 %v710
    %v1002 = vunpack.c.h.b16 %v710
    %v1003 = vunpack.c.l.b16 %v711
    %v1004 = vunpack.c.h.b16 %v711
    %v1005 = vunpack.c.l.b16 %v712
    %v1006 = vunpack.c.h.b16 %v712
    %v1007 = vunpack.c.l.b16 %v713
    %v1008 = vunpack.c.h.b16 %v713
    %v1009 = vunpack.c.l.b16 %v714
    %v1010 = vunpack.c.h.b16 %v714
    %v1011 = vunpack.c.l.b16 %v715
    %v1012 = vunpack.c.h.b16 %v715
    %v1013 = vunpack.c.l.b16 %v716
    %v1014 = vunpack.c.h.b16 %v716
    %v1015 = vunpack.c.l.b16 %v717
    %v1016 = vunpack.c.h.b16 %v717
    %v1017 = vunpack.c.l.b16 %v718
    %v1018 = vunpack.c.h.b16 %v718
    %v1019 = vunpack.c.l.b16 %v719
    %v1020 = vunpack.c.h.b16 %v719
    %v1021 = vunpack.c.l.b16 %v720
    %v1022 = vunpack.c.h.b16 %v720
    %v1023 = vunpack.c.l.b16 %v721
    %v1024 = vunpack.c.h.b16 %v721
    %v1025 = vunpack.c.l.b16 %v722
    %v1026 = vunpack.c.h.b16 %v722
    %v1027 = vunpack.c.l.b16 %v723
    %v1028 = vunpack.c.h.b16 %v723
    %v1029 = vunpack.c.l.b16 %v724
    %v1030 = vunpack.c.h.b16 %v724
    %v1031 = vunpack.c.l.b16 %v725
    %v1032 = vunpack.c.h.b16 %v725
    %v1033 = vunpack.c.l.b16 %v726
    %v1034 = vunpack.c.h.b16 %v726
    %v1035 = vunpack.c.l.b16 %v727
    %v1036 = vunpack.c.h.b16 %v727
    %v1037 = vunpack.c.l.b16 %v728
    %v1038 = vunpack.c.h.b16 %v728
    %v1039 = vunpack.c.l.b16 %v729
    %v1040 = vunpack.c.h.b16 %v729
    %v1041 = vunpack.c.l.b16 %v730
    %v1042 = vunpack.c.h.b16 %v730
    %v1043 = vunpack.c.l.b16 %v731
    %v1044 = vunpack.c.h.b16 %v731
    %v1045 = vunpack.c.l.b16 %v732
    %v1046 = vunpack.c.h.b16 %v732
    %v1047 = vunpack.c.l.b16 %v733
    %v1048 = vunpack.c.h.b16 %v733
    %v1049 = vunpack.c.l.b16 %v734
    %v1050 = vunpack.c.h.b16 %v734
    %v1051 = vunpack.c.l.b16 %v735
    %v1052 = vunpack.c.h.b16 %v735
    %v1053 = vunpack.c.l.b16 %v736
    %v1054 = vunpack.c.h.b16 %v736
    %v1055 = vunpack.c.l.b16 %v737
    %v1056 = vunpack.c.h.b16 %v737
    %v1057 = vunpack.c.l.b16 %v738
    %v1058 = vunpack.c.h.b16 %v738
    %v1059 = vunpack.c.l.b16 %v739
    %v1060 = vunpack.c.h.b16 %v739
    %v1061 = vunpack.c.l.b16 %v740
    %v1062 = vunpack.c.h.b16 %v740
    %v1063 = vunpack.c.l.b16 %v741
    %v1064 = vunpack.c.h.b16 %v741
    %v1065 = vunpack.c.l.b16 %v742
    %v1066 = vunpack.c.h.b16 %v742
    %v1067 = vunpack.c.l.b16 %v743
    %v1068 = vunpack.c.h.b16 %v743
    %v1069 = vunpack.c.l.b16 %v744
    %v1070 = vunpack.c.h.b16 %v744
    %v1071 = vunpack.c.l.b16 %v745
    %v1072 = vunpack.c.h.b16 %v745
    %v1073 = vunpack.c.l.b16 %v746
    %v1074 = vunpack.c.h.b16 %v746
    %v1075 = vunpack.c.l.b16 %v747
    %v1076 = vunpack.c.h.b16 %v747
    %v1077 = vunpack.c.l.b16 %v748
    %v1078 = vunpack.c.h.b16 %v748
    %v1079 = vunpack.c.l.b16 %v749
    %v1080 = vunpack.c.h.b16 %v749
    %v1081 = vunpack.c.l.b16 %v750
    %v1082 = vunpack.c.h.b16 %v750
    %v1083 = vunpack.c.l.b16 %v751
    %v1084 = vunpack.c.h.b16 %v751
    %v1085 = vunpack.c.l.b16 %v752
    %v1086 = vunpack.c.h.b16 %v752
    %v1087 = vunpack.c.l.b16 %v753
    %v1088 = vunpack.c.h.b16 %v753
    %v1089 = vunpack.c.l.b16 %v754
    %v1090 = vunpack.c.h.b16 %v754
    %v1091 = vunpack.c.l.b16 %v755
    %v1092 = vunpack.c.h.b16 %v755
    %v1093 = vunpack.c.l.b16 %v756
    %v1094 = vunpack.c.h.b16 %v756
    %v1095 = vunpack.c.l.b16 %v757
    %v1096 = vunpack.c.h.b16 %v757
    %v1097 = vunpack.c.l.b16 %v758
    %v1098 = vunpack.c.h.b16 %v758
    %v1099 = vunpack.c.l.b16 %v759
    %v1100 = vunpack.c.h.b16 %v759
    %v1101 = vunpack.c.l.b16 %v760
    %v1102 = vunpack.c.h.b16 %v760
    %v1103 = vunpack.c.l.b16 %v761
    %v1104 = vunpack.c.h.b16 %v761
    %v1105 = vunpack.c.l.b16 %v762
    %v1106 = vunpack.c.h.b16 %v762
    %v1107 = vunpack.c.l.b16 %v763
    %v1108 = vunpack.c.h.b16 %v763
    %v1109 = vunpack.c.l.b16 %v764
    %v1110 = vunpack.c.h.b16 %v764
    %v1111 = vunpack.c.l.b16 %v765
    %v1112 = vunpack.c.h.b16 %v765
    %v1113 = vunpack.c.l.b16 %v766
    %v1114 = vunpack.c.h.b16 %v766
    %v1115 = vunpack.c.l.b16 %v767
    %v1116 = vunpack.c.h.b16 %v767
    %v1117 = vunpack.c.l.b16 %v768
    %v1118 = vunpack.c.h.b16 %v768
    %v1119 = vunpack.c.l.b16 %v769
    %v1120 = vunpack.c.h.b16 %v769
    %v1121 = vunpack.c.l.b16 %v770
    %v1122 = vunpack.c.h.b16 %v770
    %v1123 = vunpack.c.l.b16 %v771
    %v1124 = vunpack.c.h.b16 %v771
    %v1125 = vunpack.c.l.b16 %v772
    %v1126 = vunpack.c.h.b16 %v772
    %v1127 = vunpack.c.l.b16 %v773
    %v1128 = vunpack.c.h.b16 %v773
    %v1129 = vunpack.c.l.b16 %v774
    %v1130 = vunpack.c.h.b16 %v774
    %v1131 = vunpack.c.l.b16 %v775
    %v1132 = vunpack.c.h.b16 %v775
    %v1133 = vunpack.c.l.b16 %v776
    %v1134 = vunpack.c.h.b16 %v776
    %v1135 = vunpack.c.l.b16 %v777
    %v1136 = vunpack.c.h.b16 %v777
    %v1137 = vunpack.c.l.b16 %v778
    %v1138 = vunpack.c.h.b16 %v778
    %v1139 = vunpack.c.l.b16 %v779
    %v1140 = vunpack.c.h.b16 %v779
    %v1141 = vunpack.c.l.b16 %v780
    %v1142 = vunpack.c.h.b16 %v780
    %v1143 = vunpack.c.l.b16 %v781
    %v1144 = vunpack.c.h.b16 %v781
    %v1145 = vunpack.c.l.b16 %v782
    %v1146 = vunpack.c.h.b16 %v782
    %v1147 = vunpack.c.l.b16 %v783
    %v1148 = vunpack.c.h.b16 %v783
    %v1149 = vunpack.c.l.b16 %v784
    %v1150 = vunpack.c.h.b16 %v784
    %v1151 = vunpack.c.l.b16 %v785
    %v1152 = vunpack.c.h.b16 %v785
    %v1153 = vunpack.c.l.b16 %v786
    %v1154 = vunpack.c.h.b16 %v786
    %v1155 = vunpack.c.l.b16 %v787
    %v1156 = vunpack.c.h.b16 %v787
    %v1157 = vunpack.c.l.b16 %v788
    %v1158 = vunpack.c.h.b16 %v788
    %v1159 = vunpack.c.l.b16 %v789
    %v1160 = vunpack.c.h.b16 %v789
    %v1161 = vunpack.c.l.b16 %v790
    %v1162 = vunpack.c.h.b16 %v790
    %v1163 = vunpack.c.l.b16 %v791
    %v1164 = vunpack.c.h.b16 %v791
    %v1165 = vunpack.c.l.b16 %v792
    %v1166 = vunpack.c.h.b16 %v792
    %v1167 = vunpack.c.l.b16 %v793
    %v1168 = vunpack.c.h.b16 %v793
    %v1169 = vunpack.c.l.b16 %v794
    %v1170 = vunpack.c.h.b16 %v794
    %v1171 = vunpack.c.l.b16 %v795
    %v1172 = vunpack.c.h.b16 %v795
    %v1173 = vunpack.c.l.b16 %v796
    %v1174 = vunpack.c.h.b16 %v796
    %v1175 = vunpack.c.l.b16 %v797
    %v1176 = vunpack.c.h.b16 %v797
    %v1177 = vunpack.c.l.b16 %v798
    %v1178 = vunpack.c.h.b16 %v798
    %v1179 = vunpack.c.l.b16 %v799
    %v1180 = vunpack.c.h.b16 %v799
    %v1181 = vunpack.c.l.b16 %v800
    %v1182 = vunpack.c.h.b16 %v800
    %v1183 = vunpack.c.l.b16 %v801
    %v1184 = vunpack.c.h.b16 %v801
    %v1185 = vunpack.c.l.b16 %v802
    %v1186 = vunpack.c.h.b16 %v802
    %v1187 = vunpack.c.l.b16 %v803
    %v1188 = vunpack.c.h.b16 %v803
    %v1189 = vunpack.c.l.b16 %v804
    %v1190 = vunpack.c.h.b16 %v804
    %v1191 = vunpack.c.l.b16 %v805
    %v1192 = vunpack.c.h.b16 %v805
    %v1193 = vunpack.c.l.b16 %v806
    %v1194 = vunpack.c.h.b16 %v806
    %v1195 = vunpack.c.l.b16 %v807
    %v1196 = vunpack.c.h.b16 %v807
    %v1197 = vunpack.c.l.b16 %v808
    %v1198 = vunpack.c.h.b16 %v808
    %v1199 = vunpack.c.l.b16 %v809
    %v1200 = vunpack.c.h.b16 %v809
    %v1201 = vunpack.c.l.b16 %v810
    %v1202 = vunpack.c.h.b16 %v810
    %v1203 = vunpack.c.l.b16 %v811
    %v1204 = vunpack.c.h.b16 %v811
    %v1205 = vunpack.c.l.b16 %v812
    %v1206 = vunpack.c.h.b16 %v812
    %v1207 = vunpack.c.l.b16 %v813
    %v1208 = vunpack.c.h.b16 %v813
    %v1209 = vunpack.c.l.b16 %v814
    %v1210 = vunpack.c.h.b16 %v814
    %v1211 = vunpack.c.l.b16 %v815
    %v1212 = vunpack.c.h.b16 %v815
    %v1213 = vunpack.c.l.b16 %v816
    %v1214 = vunpack.c.h.b16 %v816
    %v1215 = vunpack.c.l.b16 %v817
    %v1216 = vunpack.c.h.b16 %v817
    %v1217 = vunpack.c.l.b16 %v818
    %v1218 = vunpack.c.h.b16 %v818
    %v1219 = vunpack.c.l.b16 %v819
    %v1220 = vunpack.c.h.b16 %v819
    %v1221 = vunpack.c.l.b16 %v820
    %v1222 = vunpack.c.h.b16 %v820
    %v1223 = vunpack.c.l.b16 %v821
    %v1224 = vunpack.c.h.b16 %v821
    %v1225 = vunpack.c.l.b16 %v822
    %v1226 = vunpack.c.h.b16 %v822
    %v1227 = vunpack.c.l.b16 %v823
    %v1228 = vunpack.c.h.b16 %v823
    %v1229 = vunpack.c.l.b16 %v824
    %v1230 = vunpack.c.h.b16 %v824
    %v1231 = vpack.c.b16 %v979, %v975
    %v1232 = vpack.c.b16 %v980, %v976
    %v1233 = vpack.c.b16 %v981, %v977
    %v1234 = vpack.c.b16 %v982, %v978
    %v1235 = vpack.c.b16 %v987, %v983
    %v1236 = vpack.c.b16 %v988, %v984
    %v1237 = vpack.c.b16 %v989, %v985
    %v1238 = vpack.c.b16 %v990, %v986
    %v1239 = vpack.c.b16 %v995, %v991
    %v1240 = vpack.c.b16 %v996, %v992
    %v1241 = vpack.c.b16 %v997, %v993
    %v1242 = vpack.c.b16 %v998, %v994
    %v1243 = vpack.c.b16 %v1003, %v999
    %v1244 = vpack.c.b16 %v1004, %v1000
    %v1245 = vpack.c.b16 %v1005, %v1001
    %v1246 = vpack.c.b16 %v1006, %v1002
    %v1247 = vpack.c.b16 %v1011, %v1007
    %v1248 = vpack.c.b16 %v1012, %v1008
    %v1249 = vpack.c.b16 %v1013, %v1009
    %v1250 = vpack.c.b16 %v1014, %v1010
    %v1251 = vpack.c.b16 %v1019, %v1015
    %v1252 = vpack.c.b16 %v1020, %v1016
    %v1253 = vpack.c.b16 %v1021, %v1017
    %v1254 = vpack.c.b16 %v1022, %v1018
    %v1255 = vpack.c.b16 %v1027, %v1023
    %v1256 = vpack.c.b16 %v1028, %v1024
    %v1257 = vpack.c.b16 %v1029, %v1025
    %v1258 = vpack.c.b16 %v1030, %v1026
    %v1259 = vpack.c.b16 %v1035, %v1031
    %v1260 = vpack.c.b16 %v1036, %v1032
    %v1261 = vpack.c.b16 %v1037, %v1033
    %v1262 = vpack.c.b16 %v1038, %v1034
    %v1263 = vpack.c.b16 %v1043, %v1039
    %v1264 = vpack.c.b16 %v1044, %v1040
    %v1265 = vpack.c.b16 %v1045, %v1041
    %v1266 = vpack.c.b16 %v1046, %v1042
    %v1267 = vpack.c.b16 %v1051, %v1047
    %v1268 = vpack.c.b16 %v1052, %v1048
    %v1269 = vpack.c.b16 %v1053, %v1049
    %v1270 = vpack.c.b16 %v1054, %v1050
    %v1271 = vpack.c.b16 %v1059, %v1055
    %v1272 = vpack.c.b16 %v1060, %v1056
    %v1273 = vpack.c.b16 %v1061, %v1057
    %v1274 = vpack.c.b16 %v1062, %v1058
    %v1275 = vpack.c.b16 %v1067, %v1063
    %v1276 = vpack.c.b16 %v1068, %v1064
    %v1277 = vpack.c.b16 %v1069, %v1065
    %v1278 = vpack.c.b16 %v1070, %v1066
    %v1279 = vpack.c.b16 %v1075, %v1071
    %v1280 = vpack.c.b16 %v1076, %v1072
    %v1281 = vpack.c.b16 %v1077, %v1073
    %v1282 = vpack.c.b16 %v1078, %v1074
    %v1283 = vpack.c.b16 %v1083, %v1079
    %v1284 = vpack.c.b16 %v1084, %v1080
    %v1285 = vpack.c.b16 %v1085, %v1081
    %v1286 = vpack.c.b16 %v1086, %v1082
    %v1287 = vpack.c.b16 %v1091, %v1087
    %v1288 = vpack.c.b16 %v1092, %v1088
    %v1289 = vpack.c.b16 %v1093, %v1089
    %v1290 = vpack.c.b16 %v1094, %v1090
    %v1291 = vpack.c.b16 %v1099, %v1095
    %v1292 = vpack.c.b16 %v1100, %v1096
    %v1293 = vpack.c.b16 %v1101, %v1097
    %v1294 = vpack.c.b16 %v1102, %v1098
    %v1295 = vpack.c.b16 %v1107, %v1103
    %v1296 = vpack.c.b16 %v1108, %v1104
    %v1297 = vpack.c.b16 %v1109, %v1105
    %v1298 = vpack.c.b16 %v1110, %v1106
    %v1299 = vpack.c.b16 %v1115, %v1111
    %v1300 = vpack.c.b16 %v1116, %v1112
    %v1301 = vpack.c.b16 %v1117, %v1113
    %v1302 = vpack.c.b16 %v1118, %v1114
    %v1303 = vpack.c.b16 %v1123, %v1119
    %v1304 = vpack.c.b16 %v1124, %v1120
    %v1305 = vpack.c.b16 %v1125, %v1121
    %v1306 = vpack.c.b16 %v1126, %v1122
    %v1307 = vpack.c.b16 %v1131, %v1127
    %v1308 = vpack.c.b16 %v1132, %v1128
    %v1309 = vpack.c.b16 %v1133, %v1129
    %v1310 = vpack.c.b16 %v1134, %v1130
    %v1311 = vpack.c.b16 %v1139, %v1135
    %v1312 = vpack.c.b16 %v1140, %v1136
    %v1313 = vpack.c.b16 %v1141, %v1137
    %v1314 = vpack.c.b16 %v1142, %v1138
    %v1315 = vpack.c.b16 %v1147, %v1143
    %v1316 = vpack.c.b16 %v1148, %v1144
    %v1317 = vpack.c.b16 %v1149, %v1145
    %v1318 = vpack.c.b16 %v1150, %v1146
    %v1319 = vpack.c.b16 %v1155, %v1151
    %v1320 = vpack.c.b16 %v1156, %v1152
    %v1321 = vpack.c.b16 %v1157, %v1153
    %v1322 = vpack.c.b16 %v1158, %v1154
    %v1323 = vpack.c.b16 %v1163, %v1159
    %v1324 = vpack.c.b16 %v1164, %v1160
    %v1325 = vpack.c.b16 %v1165, %v1161
    %v1326 = vpack.c.b16 %v1166, %v1162
    %v1327 = vpack.c.b16 %v1171, %v1167
    %v1328 = vpack.c.b16 %v1172, %v1168
    %v1329 = vpack.c.b16 %v1173, %v1169
    %v1330 = vpack.c.b16 %v1174, %v1170
    %v1331 = vpack.c.b16 %v1179, %v1175
    %v1332 = vpack.c.b16 %v1180, %v1176
    %v1333 = vpack.c.b16 %v1181, %v1177
    %v1334 = vpack.c.b16 %v1182, %v1178
    %v1335 = vpack.c.b16 %v1187, %v1183
    %v1336 = vpack.c.b16 %v1188, %v1184
    %v1337 = vpack.c.b16 %v1189, %v1185
    %v1338 = vpack.c.b16 %v1190, %v1186
    %v1339 = vpack.c.b16 %v1195, %v1191
    %v1340 = vpack.c.b16 %v1196, %v1192
    %v1341 = vpack.c.b16 %v1197, %v1193
    %v1342 = vpack.c.b16 %v1198, %v1194
    %v1343 = vpack.c.b16 %v1203, %v1199
    %v1344 = vpack.c.b16 %v1204, %v1200
    %v1345 = vpack.c.b16 %v1205, %v1201
    %v1346 = vpack.c.b16 %v1206, %v1202
    %v1347 = vpack.c.b16 %v1211, %v1207
    %v1348 = vpack.c.b16 %v1212, %v1208
    %v1349 = vpack.c.b16 %v1213, %v1209
    %v1350 = vpack.c.b16 %v1214, %v1210
    %v1351 = vpack.c.b16 %v1219, %v1215
    %v1352 = vpack.c.b16 %v1220, %v1216
    %v1353 = vpack.c.b16 %v1221, %v1217
    %v1354 = vpack.c.b16 %v1222, %v1218
    %v1355 = vpack.c.b16 %v1227, %v1223
    %v1356 = vpack.c.b16 %v1228, %v1224
    %v1357 = vpack.c.b16 %v1229, %v1225
    %v1358 = vpack.c.b16 %v1230, %v1226
    %1487 = vmatprep.subr.bf16.mxu0 %v1260
    %1488 = vmatpush1.bf16.msra.mxu0 %v1259
    %1489 = vmatprep.subr.bf16.mxu0 %v1256
    %1490 = vmatpush1.bf16.msra.mxu0 %v1255
    %1491 = vmatprep.subr.bf16.mxu0 %v1252
    %1492 = vmatpush1.bf16.msra.mxu0 %v1251
    %1493 = vmatprep.subr.bf16.mxu0 %v1248
    %1494 = vmatpush1.bf16.msra.mxu0 %v1247
    %1495 = vmatprep.subr.bf16.mxu0 %v1244
    %1496 = vmatpush1.bf16.msra.mxu0 %v1243
    %1497 = vmatprep.subr.bf16.mxu0 %v1240
    %1498 = vmatpush1.bf16.msra.mxu0 %v1239
    %1499 = vmatprep.subr.bf16.mxu0 %v1236
    %1500 = vmatpush1.bf16.msra.mxu0 %v1235
    %1501 = vmatprep.subr.bf16.mxu0 %v1232
    %1502 = vmatpush1.bf16.msra.mxu0 %v1231
    %1503 = vmatprep.subr.bf16.mxu0 %v1292
    %1504 = vmatpush2.bf16.msra.mxu0 %v1291
    %1505 = vmatprep.subr.bf16.mxu0 %v1288
    %1506 = vmatpush2.bf16.msra.mxu0 %v1287
    %1507 = vmatprep.subr.bf16.mxu0 %v1284
    %1508 = vmatpush2.bf16.msra.mxu0 %v1283
    %1509 = vmatprep.subr.bf16.mxu0 %v1280
    %1510 = vmatpush2.bf16.msra.mxu0 %v1279
    %1511 = vmatprep.subr.bf16.mxu0 %v1276
    %1512 = vmatpush2.bf16.msra.mxu0 %v1275
    %1513 = vmatprep.subr.bf16.mxu0 %v1272
    %1514 = vmatpush2.bf16.msra.mxu0 %v1271
    %1515 = vmatprep.subr.bf16.mxu0 %v1268
    %1516 = vmatpush2.bf16.msra.mxu0 %v1267
    %1517 = vmatprep.subr.bf16.mxu0 %v1264
    %1518 = vmatpush2.bf16.msra.mxu0 %v1263
    %1519 = vmatprep.mubr.bf16.mxu0 %v694
    %1520 = vmatmul.mubr.bf16.gmra.mxu0 %v693
    %v1521 = vpop.f32.mrf.mxu0
    %v1522 = vadd.f32 %v830, %v1521
    %v1523 = vpop.f32.mrf.mxu0
    %v1524 = vadd.f32 %v834, %v1523
    %v1525 = vpop.f32.mrf.mxu0
    %v1526 = vpop.f32.mrf.mxu0
    %1527 = vdwg.mxu0
    %1528 = vmatprep.subr.bf16.mxu0 %v1324
    %1529 = vmatpush1.bf16.msra.mxu0 %v1323
    %1530 = vmatprep.subr.bf16.mxu0 %v1320
    %1531 = vmatpush1.bf16.msra.mxu0 %v1319
    %1532 = vmatprep.subr.bf16.mxu0 %v1316
    %1533 = vmatpush1.bf16.msra.mxu0 %v1315
    %1534 = vmatprep.subr.bf16.mxu0 %v1312
    %1535 = vmatpush1.bf16.msra.mxu0 %v1311
    %1536 = vmatprep.subr.bf16.mxu0 %v1308
    %1537 = vmatpush1.bf16.msra.mxu0 %v1307
    %1538 = vmatprep.subr.bf16.mxu0 %v1304
    %1539 = vmatpush1.bf16.msra.mxu0 %v1303
    %1540 = vmatprep.subr.bf16.mxu0 %v1300
    %1541 = vmatpush1.bf16.msra.mxu0 %v1299
    %1542 = vmatprep.subr.bf16.mxu0 %v1296
    %1543 = vmatpush1.bf16.msra.mxu0 %v1295
    %1544 = vmatprep.subr.bf16.mxu0 %v1356
    %1545 = vmatpush2.bf16.msra.mxu0 %v1355
    %1546 = vmatprep.subr.bf16.mxu0 %v1352
    %1547 = vmatpush2.bf16.msra.mxu0 %v1351
    %1548 = vmatprep.subr.bf16.mxu0 %v1348
    %1549 = vmatpush2.bf16.msra.mxu0 %v1347
    %1550 = vmatprep.subr.bf16.mxu0 %v1344
    %1551 = vmatpush2.bf16.msra.mxu0 %v1343
    %1552 = vmatprep.subr.bf16.mxu0 %v1340
    %1553 = vmatpush2.bf16.msra.mxu0 %v1339
    %1554 = vmatprep.subr.bf16.mxu0 %v1336
    %1555 = vmatpush2.bf16.msra.mxu0 %v1335
    %1556 = vmatprep.subr.bf16.mxu0 %v1332
    %1557 = vmatpush2.bf16.msra.mxu0 %v1331
    %1558 = vmatprep.subr.bf16.mxu0 %v1328
    %1559 = vmatpush2.bf16.msra.mxu0 %v1327
    %1560 = vmatprep.mubr.bf16.mxu0 %v696
    %1561 = vmatmul.mubr.bf16.gmra.mxu0 %v695
    %v1562 = vpop.f32.mrf.mxu0
    %v1563 = vadd.f32 %v1522, %v1562
    %v1564 = vpop.f32.mrf.mxu0
    %v1565 = vadd.f32 %v1524, %v1564
    %v1566 = vpop.f32.mrf.mxu0
    %v1567 = vpop.f32.mrf.mxu0
    %1568 = vdwg.mxu0
    %1569 = vmatprep.subr.bf16.mxu0 %v1262
    %1570 = vmatpush1.bf16.msra.mxu0 %v1261
    %1571 = vmatprep.subr.bf16.mxu0 %v1258
    %1572 = vmatpush1.bf16.msra.mxu0 %v1257
    %1573 = vmatprep.subr.bf16.mxu0 %v1254
    %1574 = vmatpush1.bf16.msra.mxu0 %v1253
    %1575 = vmatprep.subr.bf16.mxu0 %v1250
    %1576 = vmatpush1.bf16.msra.mxu0 %v1249
    %1577 = vmatprep.subr.bf16.mxu0 %v1246
    %1578 = vmatpush1.bf16.msra.mxu0 %v1245
    %1579 = vmatprep.subr.bf16.mxu0 %v1242
    %1580 = vmatpush1.bf16.msra.mxu0 %v1241
    %1581 = vmatprep.subr.bf16.mxu0 %v1238
    %1582 = vmatpush1.bf16.msra.mxu0 %v1237
    %1583 = vmatprep.subr.bf16.mxu0 %v1234
    %1584 = vmatpush1.bf16.msra.mxu0 %v1233
    %1585 = vmatprep.subr.bf16.mxu0 %v1294
    %1586 = vmatpush2.bf16.msra.mxu0 %v1293
    %1587 = vmatprep.subr.bf16.mxu0 %v1290
    %1588 = vmatpush2.bf16.msra.mxu0 %v1289
    %1589 = vmatprep.subr.bf16.mxu0 %v1286
    %1590 = vmatpush2.bf16.msra.mxu0 %v1285
    %1591 = vmatprep.subr.bf16.mxu0 %v1282
    %1592 = vmatpush2.bf16.msra.mxu0 %v1281
    %1593 = vmatprep.subr.bf16.mxu0 %v1278
    %1594 = vmatpush2.bf16.msra.mxu0 %v1277
    %1595 = vmatprep.subr.bf16.mxu0 %v1274
    %1596 = vmatpush2.bf16.msra.mxu0 %v1273
    %1597 = vmatprep.subr.bf16.mxu0 %v1270
    %1598 = vmatpush2.bf16.msra.mxu0 %v1269
    %1599 = vmatprep.subr.bf16.mxu0 %v1266
    %1600 = vmatpush2.bf16.msra.mxu0 %v1265
    %1601 = vmatprep.mubr.bf16.mxu0 %v694
    %1602 = vmatmul.mubr.bf16.gmra.mxu0 %v693
    %v1603 = vpop.f32.mrf.mxu0
    %v1604 = vadd.f32 %v838, %v1603
    %v1605 = vpop.f32.mrf.mxu0
    %v1606 = vadd.f32 %v842, %v1605
    %v1607 = vpop.f32.mrf.mxu0
    %v1608 = vpop.f32.mrf.mxu0
    %1609 = vdwg.mxu0
    %1610 = vmatprep.subr.bf16.mxu0 %v1326
    %1611 = vmatpush1.bf16.msra.mxu0 %v1325
    %1612 = vmatprep.subr.bf16.mxu0 %v1322
    %1613 = vmatpush1.bf16.msra.mxu0 %v1321
    %1614 = vmatprep.subr.bf16.mxu0 %v1318
    %1615 = vmatpush1.bf16.msra.mxu0 %v1317
    %1616 = vmatprep.subr.bf16.mxu0 %v1314
    %1617 = vmatpush1.bf16.msra.mxu0 %v1313
    %1618 = vmatprep.subr.bf16.mxu0 %v1310
    %1619 = vmatpush1.bf16.msra.mxu0 %v1309
    %1620 = vmatprep.subr.bf16.mxu0 %v1306
    %1621 = vmatpush1.bf16.msra.mxu0 %v1305
    %1622 = vmatprep.subr.bf16.mxu0 %v1302
    %1623 = vmatpush1.bf16.msra.mxu0 %v1301
    %1624 = vmatprep.subr.bf16.mxu0 %v1298
    %1625 = vmatpush1.bf16.msra.mxu0 %v1297
    %1626 = vmatprep.subr.bf16.mxu0 %v1358
    %1627 = vmatpush2.bf16.msra.mxu0 %v1357
    %1628 = vmatprep.subr.bf16.mxu0 %v1354
    %1629 = vmatpush2.bf16.msra.mxu0 %v1353
    %1630 = vmatprep.subr.bf16.mxu0 %v1350
    %1631 = vmatpush2.bf16.msra.mxu0 %v1349
    %1632 = vmatprep.subr.bf16.mxu0 %v1346
    %1633 = vmatpush2.bf16.msra.mxu0 %v1345
    %1634 = vmatprep.subr.bf16.mxu0 %v1342
    %1635 = vmatpush2.bf16.msra.mxu0 %v1341
    %1636 = vmatprep.subr.bf16.mxu0 %v1338
    %1637 = vmatpush2.bf16.msra.mxu0 %v1337
    %1638 = vmatprep.subr.bf16.mxu0 %v1334
    %1639 = vmatpush2.bf16.msra.mxu0 %v1333
    %1640 = vmatprep.subr.bf16.mxu0 %v1330
    %1641 = vmatpush2.bf16.msra.mxu0 %v1329
    %1642 = vmatprep.mubr.bf16.mxu0 %v696
    %1643 = vmatmul.mubr.bf16.gmra.mxu0 %v695
    %v1644 = vpop.f32.mrf.mxu0
    %v1645 = vadd.f32 %v1604, %v1644
    %v1646 = vpop.f32.mrf.mxu0
    %v1647 = vadd.f32 %v1606, %v1646
    %v1648 = vpop.f32.mrf.mxu0
    %v1649 = vpop.f32.mrf.mxu0
    %1650 = vdwg.mxu0
    %v1651 = vmin.f32 %v1563, 20.0
    %v1652 = vmin.f32 %v1565, 20.0
    %v1653 = vmin.f32 %v1645, 20.0
    %v1654 = vmin.f32 %v1647, 20.0
    %v1655 = vmul.f32 %v1651, 1.442695
    %v1656 = vpow.pop %v1655
    %v1657 = vmul.f32 %v1652, 1.442695
    %v1658 = vpow.pop %v1657
    %v1659 = vmul.f32 %v1653, 1.442695
    %v1660 = vpow.pop %v1659
    %v1661 = vmul.f32 %v1654, 1.442695
    %v1662 = vpow.pop %v1661
    %v1663 = vadd.f32 %v1656, 1.0
    %v1664 = vadd.f32 %v1658, 1.0
    %v1665 = vadd.f32 %v1660, 1.0
    %v1666 = vadd.f32 %v1662, 1.0
    %v1667 = vmul.f32 %v1663, %v1663
    %v1668 = vmul.f32 %v1664, %v1664
    %v1669 = vmul.f32 %v1665, %v1665
    %v1670 = vmul.f32 %v1666, %v1666
    %v1671 = vsub.f32 %v1667, 1.0
    %v1672 = vsub.f32 %v1668, 1.0
    %v1673 = vsub.f32 %v1669, 1.0
    %v1674 = vsub.f32 %v1670, 1.0
    %v1675 = vadd.f32 %v1667, 1.0
    %v1676 = vadd.f32 %v1668, 1.0
    %v1677 = vadd.f32 %v1669, 1.0
    %v1678 = vadd.f32 %v1670, 1.0
    %v1679 = vrcp.pop %v1675
    %v1680 = vrcp.pop %v1676
    %v1681 = vrcp.pop %v1677
    %v1682 = vrcp.pop %v1678
    %v1683 = vmul.f32 %v1671, %v1679
    %v1684 = vmul.f32 %v1672, %v1680
    %v1685 = vmul.f32 %v1673, %v1681
    %v1686 = vmul.f32 %v1674, %v1682
    %v1687 = vmul.f32 %v1563, %v1683
    %v1688 = vmul.f32 %v1565, %v1684
    %v1689 = vmul.f32 %v1645, %v1685
    %v1690 = vmul.f32 %v1647, %v1686
    %v1691 = vpack.c.bf16 %v1687, %v1687
    %v1692 = vpack.c.bf16 %v1688, %v1688
    %v1693 = vpack.c.bf16 %v1689, %v1689
    %v1694 = vpack.c.bf16 %v1690, %v1690
    %v1695 = vld [vmem:[#allocation11] sm:$0xff]
    %v1696 = vld [vmem:[#allocation11 + $0x8] sm:$0xff]
    %v1697 = vld [vmem:[#allocation11 + $0x10] sm:$0xff]
    %v1698 = vld [vmem:[#allocation11 + $0x18] sm:$0xff]
    %v1699 = vld [vmem:[#allocation11 + $0x20] sm:$0xff]
    %v1700 = vld [vmem:[#allocation11 + $0x28] sm:$0xff]
    %v1701 = vld [vmem:[#allocation11 + $0x30] sm:$0xff]
    %v1702 = vld [vmem:[#allocation11 + $0x38] sm:$0xff]
    %v1703 = vld [vmem:[#allocation11 + $0x40] sm:$0xff]
    %v1704 = vld [vmem:[#allocation11 + $0x48] sm:$0xff]
    %v1705 = vld [vmem:[#allocation11 + $0x50] sm:$0xff]
    %v1706 = vld [vmem:[#allocation11 + $0x58] sm:$0xff]
    %v1707 = vld [vmem:[#allocation11 + $0x60] sm:$0xff]
    %v1708 = vld [vmem:[#allocation11 + $0x68] sm:$0xff]
    %v1709 = vld [vmem:[#allocation11 + $0x70] sm:$0xff]
    %v1710 = vld [vmem:[#allocation11 + $0x78] sm:$0xff]
    %v1711 = vld [vmem:[#allocation11 + $0x80] sm:$0xff]
    %v1712 = vld [vmem:[#allocation11 + $0x88] sm:$0xff]
    %v1713 = vld [vmem:[#allocation11 + $0x90] sm:$0xff]
    %v1714 = vld [vmem:[#allocation11 + $0x98] sm:$0xff]
    %v1715 = vld [vmem:[#allocation11 + $0xa0] sm:$0xff]
    %v1716 = vld [vmem:[#allocation11 + $0xa8] sm:$0xff]
    %v1717 = vld [vmem:[#allocation11 + $0xb0] sm:$0xff]
    %v1718 = vld [vmem:[#allocation11 + $0xb8] sm:$0xff]
    %v1719 = vld [vmem:[#allocation11 + $0xc0] sm:$0xff]
    %v1720 = vld [vmem:[#allocation11 + $0xc8] sm:$0xff]
    %v1721 = vld [vmem:[#allocation11 + $0xd0] sm:$0xff]
    %v1722 = vld [vmem:[#allocation11 + $0xd8] sm:$0xff]
    %v1723 = vld [vmem:[#allocation11 + $0xe0] sm:$0xff]
    %v1724 = vld [vmem:[#allocation11 + $0xe8] sm:$0xff]
    %v1725 = vld [vmem:[#allocation11 + $0xf0] sm:$0xff]
    %v1726 = vld [vmem:[#allocation11 + $0xf8] sm:$0xff]
    %v1727 = vld [vmem:[#allocation11 + $0x100] sm:$0xff]
    %v1728 = vld [vmem:[#allocation11 + $0x108] sm:$0xff]
    %v1729 = vld [vmem:[#allocation11 + $0x110] sm:$0xff]
    %v1730 = vld [vmem:[#allocation11 + $0x118] sm:$0xff]
    %v1731 = vld [vmem:[#allocation11 + $0x120] sm:$0xff]
    %v1732 = vld [vmem:[#allocation11 + $0x128] sm:$0xff]
    %v1733 = vld [vmem:[#allocation11 + $0x130] sm:$0xff]
    %v1734 = vld [vmem:[#allocation11 + $0x138] sm:$0xff]
    %v1735 = vld [vmem:[#allocation11 + $0x140] sm:$0xff]
    %v1736 = vld [vmem:[#allocation11 + $0x148] sm:$0xff]
    %v1737 = vld [vmem:[#allocation11 + $0x150] sm:$0xff]
    %v1738 = vld [vmem:[#allocation11 + $0x158] sm:$0xff]
    %v1739 = vld [vmem:[#allocation11 + $0x160] sm:$0xff]
    %v1740 = vld [vmem:[#allocation11 + $0x168] sm:$0xff]
    %v1741 = vld [vmem:[#allocation11 + $0x170] sm:$0xff]
    %v1742 = vld [vmem:[#allocation11 + $0x178] sm:$0xff]
    %v1743 = vld [vmem:[#allocation11 + $0x180] sm:$0xff]
    %v1744 = vld [vmem:[#allocation11 + $0x188] sm:$0xff]
    %v1745 = vld [vmem:[#allocation11 + $0x190] sm:$0xff]
    %v1746 = vld [vmem:[#allocation11 + $0x198] sm:$0xff]
    %v1747 = vld [vmem:[#allocation11 + $0x1a0] sm:$0xff]
    %v1748 = vld [vmem:[#allocation11 + $0x1a8] sm:$0xff]
    %v1749 = vld [vmem:[#allocation11 + $0x1b0] sm:$0xff]
    %v1750 = vld [vmem:[#allocation11 + $0x1b8] sm:$0xff]
    %v1751 = vld [vmem:[#allocation11 + $0x1c0] sm:$0xff]
    %v1752 = vld [vmem:[#allocation11 + $0x1c8] sm:$0xff]
    %v1753 = vld [vmem:[#allocation11 + $0x1d0] sm:$0xff]
    %v1754 = vld [vmem:[#allocation11 + $0x1d8] sm:$0xff]
    %v1755 = vld [vmem:[#allocation11 + $0x1e0] sm:$0xff]
    %v1756 = vld [vmem:[#allocation11 + $0x1e8] sm:$0xff]
    %v1757 = vld [vmem:[#allocation11 + $0x1f0] sm:$0xff]
    %v1758 = vld [vmem:[#allocation11 + $0x1f8] sm:$0xff]
    %v1759 = vld [vmem:[#allocation11 + $0x200] sm:$0xff]
    %v1760 = vld [vmem:[#allocation11 + $0x208] sm:$0xff]
    %v1761 = vld [vmem:[#allocation11 + $0x210] sm:$0xff]
    %v1762 = vld [vmem:[#allocation11 + $0x218] sm:$0xff]
    %v1763 = vld [vmem:[#allocation11 + $0x220] sm:$0xff]
    %v1764 = vld [vmem:[#allocation11 + $0x228] sm:$0xff]
    %v1765 = vld [vmem:[#allocation11 + $0x230] sm:$0xff]
    %v1766 = vld [vmem:[#allocation11 + $0x238] sm:$0xff]
    %v1767 = vld [vmem:[#allocation11 + $0x240] sm:$0xff]
    %v1768 = vld [vmem:[#allocation11 + $0x248] sm:$0xff]
    %v1769 = vld [vmem:[#allocation11 + $0x250] sm:$0xff]
    %v1770 = vld [vmem:[#allocation11 + $0x258] sm:$0xff]
    %v1771 = vld [vmem:[#allocation11 + $0x260] sm:$0xff]
    %v1772 = vld [vmem:[#allocation11 + $0x268] sm:$0xff]
    %v1773 = vld [vmem:[#allocation11 + $0x270] sm:$0xff]
    %v1774 = vld [vmem:[#allocation11 + $0x278] sm:$0xff]
    %v1775 = vld [vmem:[#allocation11 + $0x280] sm:$0xff]
    %v1776 = vld [vmem:[#allocation11 + $0x288] sm:$0xff]
    %v1777 = vld [vmem:[#allocation11 + $0x290] sm:$0xff]
    %v1778 = vld [vmem:[#allocation11 + $0x298] sm:$0xff]
    %v1779 = vld [vmem:[#allocation11 + $0x2a0] sm:$0xff]
    %v1780 = vld [vmem:[#allocation11 + $0x2a8] sm:$0xff]
    %v1781 = vld [vmem:[#allocation11 + $0x2b0] sm:$0xff]
    %v1782 = vld [vmem:[#allocation11 + $0x2b8] sm:$0xff]
    %v1783 = vld [vmem:[#allocation11 + $0x2c0] sm:$0xff]
    %v1784 = vld [vmem:[#allocation11 + $0x2c8] sm:$0xff]
    %v1785 = vld [vmem:[#allocation11 + $0x2d0] sm:$0xff]
    %v1786 = vld [vmem:[#allocation11 + $0x2d8] sm:$0xff]
    %v1787 = vld [vmem:[#allocation11 + $0x2e0] sm:$0xff]
    %v1788 = vld [vmem:[#allocation11 + $0x2e8] sm:$0xff]
    %v1789 = vld [vmem:[#allocation11 + $0x2f0] sm:$0xff]
    %v1790 = vld [vmem:[#allocation11 + $0x2f8] sm:$0xff]
    %v1791 = vld [vmem:[#allocation11 + $0x300] sm:$0xff]
    %v1792 = vld [vmem:[#allocation11 + $0x308] sm:$0xff]
    %v1793 = vld [vmem:[#allocation11 + $0x310] sm:$0xff]
    %v1794 = vld [vmem:[#allocation11 + $0x318] sm:$0xff]
    %v1795 = vld [vmem:[#allocation11 + $0x320] sm:$0xff]
    %v1796 = vld [vmem:[#allocation11 + $0x328] sm:$0xff]
    %v1797 = vld [vmem:[#allocation11 + $0x330] sm:$0xff]
    %v1798 = vld [vmem:[#allocation11 + $0x338] sm:$0xff]
    %v1799 = vld [vmem:[#allocation11 + $0x340] sm:$0xff]
    %v1800 = vld [vmem:[#allocation11 + $0x348] sm:$0xff]
    %v1801 = vld [vmem:[#allocation11 + $0x350] sm:$0xff]
    %v1802 = vld [vmem:[#allocation11 + $0x358] sm:$0xff]
    %v1803 = vld [vmem:[#allocation11 + $0x360] sm:$0xff]
    %v1804 = vld [vmem:[#allocation11 + $0x368] sm:$0xff]
    %v1805 = vld [vmem:[#allocation11 + $0x370] sm:$0xff]
    %v1806 = vld [vmem:[#allocation11 + $0x378] sm:$0xff]
    %v1807 = vld [vmem:[#allocation11 + $0x380] sm:$0xff]
    %v1808 = vld [vmem:[#allocation11 + $0x388] sm:$0xff]
    %v1809 = vld [vmem:[#allocation11 + $0x390] sm:$0xff]
    %v1810 = vld [vmem:[#allocation11 + $0x398] sm:$0xff]
    %v1811 = vld [vmem:[#allocation11 + $0x3a0] sm:$0xff]
    %v1812 = vld [vmem:[#allocation11 + $0x3a8] sm:$0xff]
    %v1813 = vld [vmem:[#allocation11 + $0x3b0] sm:$0xff]
    %v1814 = vld [vmem:[#allocation11 + $0x3b8] sm:$0xff]
    %v1815 = vld [vmem:[#allocation11 + $0x3c0] sm:$0xff]
    %v1816 = vld [vmem:[#allocation11 + $0x3c8] sm:$0xff]
    %v1817 = vld [vmem:[#allocation11 + $0x3d0] sm:$0xff]
    %v1818 = vld [vmem:[#allocation11 + $0x3d8] sm:$0xff]
    %v1819 = vld [vmem:[#allocation11 + $0x3e0] sm:$0xff]
    %v1820 = vld [vmem:[#allocation11 + $0x3e8] sm:$0xff]
    %v1821 = vld [vmem:[#allocation11 + $0x3f0] sm:$0xff]
    %v1822 = vld [vmem:[#allocation11 + $0x3f8] sm:$0xff]
    %v1823 = vld [vmem:[%s8] sm:$0xf]
    %v1825 = vlaneseq
    %v1826 = vshrl.u32 %v1825, 7
    %v1827 = vsub.s32 0, %v1826
    %v1828 = vrot.slane %v1823, %v1827
    %v1829 = vlaneseq
    %v1830 = vshrl.u32 %v1829, 7
    %v1831 = vsub.s32 1, %v1830
    %v1832 = vrot.slane %v1823, %v1831
    %v1833 = vlaneseq
    %v1834 = vshrl.u32 %v1833, 7
    %v1835 = vsub.s32 2, %v1834
    %v1836 = vrot.slane %v1823, %v1835
    %v1837 = vlaneseq
    %v1838 = vshrl.u32 %v1837, 7
    %v1839 = vsub.s32 3, %v1838
    %v1840 = vrot.slane %v1823, %v1839
    %v1973 = vunpack.c.l.b16 %v1695
    %v1974 = vunpack.c.h.b16 %v1695
    %v1975 = vunpack.c.l.b16 %v1696
    %v1976 = vunpack.c.h.b16 %v1696
    %v1977 = vunpack.c.l.b16 %v1697
    %v1978 = vunpack.c.h.b16 %v1697
    %v1979 = vunpack.c.l.b16 %v1698
    %v1980 = vunpack.c.h.b16 %v1698
    %v1981 = vunpack.c.l.b16 %v1699
    %v1982 = vunpack.c.h.b16 %v1699
    %v1983 = vunpack.c.l.b16 %v1700
    %v1984 = vunpack.c.h.b16 %v1700
    %v1985 = vunpack.c.l.b16 %v1701
    %v1986 = vunpack.c.h.b16 %v1701
    %v1987 = vunpack.c.l.b16 %v1702
    %v1988 = vunpack.c.h.b16 %v1702
    %v1989 = vunpack.c.l.b16 %v1703
    %v1990 = vunpack.c.h.b16 %v1703
    %v1991 = vunpack.c.l.b16 %v1704
    %v1992 = vunpack.c.h.b16 %v1704
    %v1993 = vunpack.c.l.b16 %v1705
    %v1994 = vunpack.c.h.b16 %v1705
    %v1995 = vunpack.c.l.b16 %v1706
    %v1996 = vunpack.c.h.b16 %v1706
    %v1997 = vunpack.c.l.b16 %v1707
    %v1998 = vunpack.c.h.b16 %v1707
    %v1999 = vunpack.c.l.b16 %v1708
    %v2000 = vunpack.c.h.b16 %v1708
    %v2001 = vunpack.c.l.b16 %v1709
    %v2002 = vunpack.c.h.b16 %v1709
    %v2003 = vunpack.c.l.b16 %v1710
    %v2004 = vunpack.c.h.b16 %v1710
    %v2005 = vunpack.c.l.b16 %v1711
    %v2006 = vunpack.c.h.b16 %v1711
    %v2007 = vunpack.c.l.b16 %v1712
    %v2008 = vunpack.c.h.b16 %v1712
    %v2009 = vunpack.c.l.b16 %v1713
    %v2010 = vunpack.c.h.b16 %v1713
    %v2011 = vunpack.c.l.b16 %v1714
    %v2012 = vunpack.c.h.b16 %v1714
    %v2013 = vunpack.c.l.b16 %v1715
    %v2014 = vunpack.c.h.b16 %v1715
    %v2015 = vunpack.c.l.b16 %v1716
    %v2016 = vunpack.c.h.b16 %v1716
    %v2017 = vunpack.c.l.b16 %v1717
    %v2018 = vunpack.c.h.b16 %v1717
    %v2019 = vunpack.c.l.b16 %v1718
    %v2020 = vunpack.c.h.b16 %v1718
    %v2021 = vunpack.c.l.b16 %v1719
    %v2022 = vunpack.c.h.b16 %v1719
    %v2023 = vunpack.c.l.b16 %v1720
    %v2024 = vunpack.c.h.b16 %v1720
    %v2025 = vunpack.c.l.b16 %v1721
    %v2026 = vunpack.c.h.b16 %v1721
    %v2027 = vunpack.c.l.b16 %v1722
    %v2028 = vunpack.c.h.b16 %v1722
    %v2029 = vunpack.c.l.b16 %v1723
    %v2030 = vunpack.c.h.b16 %v1723
    %v2031 = vunpack.c.l.b16 %v1724
    %v2032 = vunpack.c.h.b16 %v1724
    %v2033 = vunpack.c.l.b16 %v1725
    %v2034 = vunpack.c.h.b16 %v1725
    %v2035 = vunpack.c.l.b16 %v1726
    %v2036 = vunpack.c.h.b16 %v1726
    %v2037 = vunpack.c.l.b16 %v1727
    %v2038 = vunpack.c.h.b16 %v1727
    %v2039 = vunpack.c.l.b16 %v1728
    %v2040 = vunpack.c.h.b16 %v1728
    %v2041 = vunpack.c.l.b16 %v1729
    %v2042 = vunpack.c.h.b16 %v1729
    %v2043 = vunpack.c.l.b16 %v1730
    %v2044 = vunpack.c.h.b16 %v1730
    %v2045 = vunpack.c.l.b16 %v1731
    %v2046 = vunpack.c.h.b16 %v1731
    %v2047 = vunpack.c.l.b16 %v1732
    %v2048 = vunpack.c.h.b16 %v1732
    %v2049 = vunpack.c.l.b16 %v1733
    %v2050 = vunpack.c.h.b16 %v1733
    %v2051 = vunpack.c.l.b16 %v1734
    %v2052 = vunpack.c.h.b16 %v1734
    %v2053 = vunpack.c.l.b16 %v1735
    %v2054 = vunpack.c.h.b16 %v1735
    %v2055 = vunpack.c.l.b16 %v1736
    %v2056 = vunpack.c.h.b16 %v1736
    %v2057 = vunpack.c.l.b16 %v1737
    %v2058 = vunpack.c.h.b16 %v1737
    %v2059 = vunpack.c.l.b16 %v1738
    %v2060 = vunpack.c.h.b16 %v1738
    %v2061 = vunpack.c.l.b16 %v1739
    %v2062 = vunpack.c.h.b16 %v1739
    %v2063 = vunpack.c.l.b16 %v1740
    %v2064 = vunpack.c.h.b16 %v1740
    %v2065 = vunpack.c.l.b16 %v1741
    %v2066 = vunpack.c.h.b16 %v1741
    %v2067 = vunpack.c.l.b16 %v1742
    %v2068 = vunpack.c.h.b16 %v1742
    %v2069 = vunpack.c.l.b16 %v1743
    %v2070 = vunpack.c.h.b16 %v1743
    %v2071 = vunpack.c.l.b16 %v1744
    %v2072 = vunpack.c.h.b16 %v1744
    %v2073 = vunpack.c.l.b16 %v1745
    %v2074 = vunpack.c.h.b16 %v1745
    %v2075 = vunpack.c.l.b16 %v1746
    %v2076 = vunpack.c.h.b16 %v1746
    %v2077 = vunpack.c.l.b16 %v1747
    %v2078 = vunpack.c.h.b16 %v1747
    %v2079 = vunpack.c.l.b16 %v1748
    %v2080 = vunpack.c.h.b16 %v1748
    %v2081 = vunpack.c.l.b16 %v1749
    %v2082 = vunpack.c.h.b16 %v1749
    %v2083 = vunpack.c.l.b16 %v1750
    %v2084 = vunpack.c.h.b16 %v1750
    %v2085 = vunpack.c.l.b16 %v1751
    %v2086 = vunpack.c.h.b16 %v1751
    %v2087 = vunpack.c.l.b16 %v1752
    %v2088 = vunpack.c.h.b16 %v1752
    %v2089 = vunpack.c.l.b16 %v1753
    %v2090 = vunpack.c.h.b16 %v1753
    %v2091 = vunpack.c.l.b16 %v1754
    %v2092 = vunpack.c.h.b16 %v1754
    %v2093 = vunpack.c.l.b16 %v1755
    %v2094 = vunpack.c.h.b16 %v1755
    %v2095 = vunpack.c.l.b16 %v1756
    %v2096 = vunpack.c.h.b16 %v1756
    %v2097 = vunpack.c.l.b16 %v1757
    %v2098 = vunpack.c.h.b16 %v1757
    %v2099 = vunpack.c.l.b16 %v1758
    %v2100 = vunpack.c.h.b16 %v1758
    %v2101 = vunpack.c.l.b16 %v1759
    %v2102 = vunpack.c.h.b16 %v1759
    %v2103 = vunpack.c.l.b16 %v1760
    %v2104 = vunpack.c.h.b16 %v1760
    %v2105 = vunpack.c.l.b16 %v1761
    %v2106 = vunpack.c.h.b16 %v1761
    %v2107 = vunpack.c.l.b16 %v1762
    %v2108 = vunpack.c.h.b16 %v1762
    %v2109 = vunpack.c.l.b16 %v1763
    %v2110 = vunpack.c.h.b16 %v1763
    %v2111 = vunpack.c.l.b16 %v1764
    %v2112 = vunpack.c.h.b16 %v1764
    %v2113 = vunpack.c.l.b16 %v1765
    %v2114 = vunpack.c.h.b16 %v1765
    %v2115 = vunpack.c.l.b16 %v1766
    %v2116 = vunpack.c.h.b16 %v1766
    %v2117 = vunpack.c.l.b16 %v1767
    %v2118 = vunpack.c.h.b16 %v1767
    %v2119 = vunpack.c.l.b16 %v1768
    %v2120 = vunpack.c.h.b16 %v1768
    %v2121 = vunpack.c.l.b16 %v1769
    %v2122 = vunpack.c.h.b16 %v1769
    %v2123 = vunpack.c.l.b16 %v1770
    %v2124 = vunpack.c.h.b16 %v1770
    %v2125 = vunpack.c.l.b16 %v1771
    %v2126 = vunpack.c.h.b16 %v1771
    %v2127 = vunpack.c.l.b16 %v1772
    %v2128 = vunpack.c.h.b16 %v1772
    %v2129 = vunpack.c.l.b16 %v1773
    %v2130 = vunpack.c.h.b16 %v1773
    %v2131 = vunpack.c.l.b16 %v1774
    %v2132 = vunpack.c.h.b16 %v1774
    %v2133 = vunpack.c.l.b16 %v1775
    %v2134 = vunpack.c.h.b16 %v1775
    %v2135 = vunpack.c.l.b16 %v1776
    %v2136 = vunpack.c.h.b16 %v1776
    %v2137 = vunpack.c.l.b16 %v1777
    %v2138 = vunpack.c.h.b16 %v1777
    %v2139 = vunpack.c.l.b16 %v1778
    %v2140 = vunpack.c.h.b16 %v1778
    %v2141 = vunpack.c.l.b16 %v1779
    %v2142 = vunpack.c.h.b16 %v1779
    %v2143 = vunpack.c.l.b16 %v1780
    %v2144 = vunpack.c.h.b16 %v1780
    %v2145 = vunpack.c.l.b16 %v1781
    %v2146 = vunpack.c.h.b16 %v1781
    %v2147 = vunpack.c.l.b16 %v1782
    %v2148 = vunpack.c.h.b16 %v1782
    %v2149 = vunpack.c.l.b16 %v1783
    %v2150 = vunpack.c.h.b16 %v1783
    %v2151 = vunpack.c.l.b16 %v1784
    %v2152 = vunpack.c.h.b16 %v1784
    %v2153 = vunpack.c.l.b16 %v1785
    %v2154 = vunpack.c.h.b16 %v1785
    %v2155 = vunpack.c.l.b16 %v1786
    %v2156 = vunpack.c.h.b16 %v1786
    %v2157 = vunpack.c.l.b16 %v1787
    %v2158 = vunpack.c.h.b16 %v1787
    %v2159 = vunpack.c.l.b16 %v1788
    %v2160 = vunpack.c.h.b16 %v1788
    %v2161 = vunpack.c.l.b16 %v1789
    %v2162 = vunpack.c.h.b16 %v1789
    %v2163 = vunpack.c.l.b16 %v1790
    %v2164 = vunpack.c.h.b16 %v1790
    %v2165 = vunpack.c.l.b16 %v1791
    %v2166 = vunpack.c.h.b16 %v1791
    %v2167 = vunpack.c.l.b16 %v1792
    %v2168 = vunpack.c.h.b16 %v1792
    %v2169 = vunpack.c.l.b16 %v1793
    %v2170 = vunpack.c.h.b16 %v1793
    %v2171 = vunpack.c.l.b16 %v1794
    %v2172 = vunpack.c.h.b16 %v1794
    %v2173 = vunpack.c.l.b16 %v1795
    %v2174 = vunpack.c.h.b16 %v1795
    %v2175 = vunpack.c.l.b16 %v1796
    %v2176 = vunpack.c.h.b16 %v1796
    %v2177 = vunpack.c.l.b16 %v1797
    %v2178 = vunpack.c.h.b16 %v1797
    %v2179 = vunpack.c.l.b16 %v1798
    %v2180 = vunpack.c.h.b16 %v1798
    %v2181 = vunpack.c.l.b16 %v1799
    %v2182 = vunpack.c.h.b16 %v1799
    %v2183 = vunpack.c.l.b16 %v1800
    %v2184 = vunpack.c.h.b16 %v1800
    %v2185 = vunpack.c.l.b16 %v1801
    %v2186 = vunpack.c.h.b16 %v1801
    %v2187 = vunpack.c.l.b16 %v1802
    %v2188 = vunpack.c.h.b16 %v1802
    %v2189 = vunpack.c.l.b16 %v1803
    %v2190 = vunpack.c.h.b16 %v1803
    %v2191 = vunpack.c.l.b16 %v1804
    %v2192 = vunpack.c.h.b16 %v1804
    %v2193 = vunpack.c.l.b16 %v1805
    %v2194 = vunpack.c.h.b16 %v1805
    %v2195 = vunpack.c.l.b16 %v1806
    %v2196 = vunpack.c.h.b16 %v1806
    %v2197 = vunpack.c.l.b16 %v1807
    %v2198 = vunpack.c.h.b16 %v1807
    %v2199 = vunpack.c.l.b16 %v1808
    %v2200 = vunpack.c.h.b16 %v1808
    %v2201 = vunpack.c.l.b16 %v1809
    %v2202 = vunpack.c.h.b16 %v1809
    %v2203 = vunpack.c.l.b16 %v1810
    %v2204 = vunpack.c.h.b16 %v1810
    %v2205 = vunpack.c.l.b16 %v1811
    %v2206 = vunpack.c.h.b16 %v1811
    %v2207 = vunpack.c.l.b16 %v1812
    %v2208 = vunpack.c.h.b16 %v1812
    %v2209 = vunpack.c.l.b16 %v1813
    %v2210 = vunpack.c.h.b16 %v1813
    %v2211 = vunpack.c.l.b16 %v1814
    %v2212 = vunpack.c.h.b16 %v1814
    %v2213 = vunpack.c.l.b16 %v1815
    %v2214 = vunpack.c.h.b16 %v1815
    %v2215 = vunpack.c.l.b16 %v1816
    %v2216 = vunpack.c.h.b16 %v1816
    %v2217 = vunpack.c.l.b16 %v1817
    %v2218 = vunpack.c.h.b16 %v1817
    %v2219 = vunpack.c.l.b16 %v1818
    %v2220 = vunpack.c.h.b16 %v1818
    %v2221 = vunpack.c.l.b16 %v1819
    %v2222 = vunpack.c.h.b16 %v1819
    %v2223 = vunpack.c.l.b16 %v1820
    %v2224 = vunpack.c.h.b16 %v1820
    %v2225 = vunpack.c.l.b16 %v1821
    %v2226 = vunpack.c.h.b16 %v1821
    %v2227 = vunpack.c.l.b16 %v1822
    %v2228 = vunpack.c.h.b16 %v1822
    %v2229 = vpack.c.b16 %v1977, %v1973
    %v2230 = vpack.c.b16 %v1978, %v1974
    %v2231 = vpack.c.b16 %v1979, %v1975
    %v2232 = vpack.c.b16 %v1980, %v1976
    %v2233 = vpack.c.b16 %v1985, %v1981
    %v2234 = vpack.c.b16 %v1986, %v1982
    %v2235 = vpack.c.b16 %v1987, %v1983
    %v2236 = vpack.c.b16 %v1988, %v1984
    %v2237 = vpack.c.b16 %v1993, %v1989
    %v2238 = vpack.c.b16 %v1994, %v1990
    %v2239 = vpack.c.b16 %v1995, %v1991
    %v2240 = vpack.c.b16 %v1996, %v1992
    %v2241 = vpack.c.b16 %v2001, %v1997
    %v2242 = vpack.c.b16 %v2002, %v1998
    %v2243 = vpack.c.b16 %v2003, %v1999
    %v2244 = vpack.c.b16 %v2004, %v2000
    %v2245 = vpack.c.b16 %v2009, %v2005
    %v2246 = vpack.c.b16 %v2010, %v2006
    %v2247 = vpack.c.b16 %v2011, %v2007
    %v2248 = vpack.c.b16 %v2012, %v2008
    %v2249 = vpack.c.b16 %v2017, %v2013
    %v2250 = vpack.c.b16 %v2018, %v2014
    %v2251 = vpack.c.b16 %v2019, %v2015
    %v2252 = vpack.c.b16 %v2020, %v2016
    %v2253 = vpack.c.b16 %v2025, %v2021
    %v2254 = vpack.c.b16 %v2026, %v2022
    %v2255 = vpack.c.b16 %v2027, %v2023
    %v2256 = vpack.c.b16 %v2028, %v2024
    %v2257 = vpack.c.b16 %v2033, %v2029
    %v2258 = vpack.c.b16 %v2034, %v2030
    %v2259 = vpack.c.b16 %v2035, %v2031
    %v2260 = vpack.c.b16 %v2036, %v2032
    %v2261 = vpack.c.b16 %v2041, %v2037
    %v2262 = vpack.c.b16 %v2042, %v2038
    %v2263 = vpack.c.b16 %v2043, %v2039
    %v2264 = vpack.c.b16 %v2044, %v2040
    %v2265 = vpack.c.b16 %v2049, %v2045
    %v2266 = vpack.c.b16 %v2050, %v2046
    %v2267 = vpack.c.b16 %v2051, %v2047
    %v2268 = vpack.c.b16 %v2052, %v2048
    %v2269 = vpack.c.b16 %v2057, %v2053
    %v2270 = vpack.c.b16 %v2058, %v2054
    %v2271 = vpack.c.b16 %v2059, %v2055
    %v2272 = vpack.c.b16 %v2060, %v2056
    %v2273 = vpack.c.b16 %v2065, %v2061
    %v2274 = vpack.c.b16 %v2066, %v2062
    %v2275 = vpack.c.b16 %v2067, %v2063
    %v2276 = vpack.c.b16 %v2068, %v2064
    %v2277 = vpack.c.b16 %v2073, %v2069
    %v2278 = vpack.c.b16 %v2074, %v2070
    %v2279 = vpack.c.b16 %v2075, %v2071
    %v2280 = vpack.c.b16 %v2076, %v2072
    %v2281 = vpack.c.b16 %v2081, %v2077
    %v2282 = vpack.c.b16 %v2082, %v2078
    %v2283 = vpack.c.b16 %v2083, %v2079
    %v2284 = vpack.c.b16 %v2084, %v2080
    %v2285 = vpack.c.b16 %v2089, %v2085
    %v2286 = vpack.c.b16 %v2090, %v2086
    %v2287 = vpack.c.b16 %v2091, %v2087
    %v2288 = vpack.c.b16 %v2092, %v2088
    %v2289 = vpack.c.b16 %v2097, %v2093
    %v2290 = vpack.c.b16 %v2098, %v2094
    %v2291 = vpack.c.b16 %v2099, %v2095
    %v2292 = vpack.c.b16 %v2100, %v2096
    %v2293 = vpack.c.b16 %v2105, %v2101
    %v2294 = vpack.c.b16 %v2106, %v2102
    %v2295 = vpack.c.b16 %v2107, %v2103
    %v2296 = vpack.c.b16 %v2108, %v2104
    %v2297 = vpack.c.b16 %v2113, %v2109
    %v2298 = vpack.c.b16 %v2114, %v2110
    %v2299 = vpack.c.b16 %v2115, %v2111
    %v2300 = vpack.c.b16 %v2116, %v2112
    %v2301 = vpack.c.b16 %v2121, %v2117
    %v2302 = vpack.c.b16 %v2122, %v2118
    %v2303 = vpack.c.b16 %v2123, %v2119
    %v2304 = vpack.c.b16 %v2124, %v2120
    %v2305 = vpack.c.b16 %v2129, %v2125
    %v2306 = vpack.c.b16 %v2130, %v2126
    %v2307 = vpack.c.b16 %v2131, %v2127
    %v2308 = vpack.c.b16 %v2132, %v2128
    %v2309 = vpack.c.b16 %v2137, %v2133
    %v2310 = vpack.c.b16 %v2138, %v2134
    %v2311 = vpack.c.b16 %v2139, %v2135
    %v2312 = vpack.c.b16 %v2140, %v2136
    %v2313 = vpack.c.b16 %v2145, %v2141
    %v2314 = vpack.c.b16 %v2146, %v2142
    %v2315 = vpack.c.b16 %v2147, %v2143
    %v2316 = vpack.c.b16 %v2148, %v2144
    %v2317 = vpack.c.b16 %v2153, %v2149
    %v2318 = vpack.c.b16 %v2154, %v2150
    %v2319 = vpack.c.b16 %v2155, %v2151
    %v2320 = vpack.c.b16 %v2156, %v2152
    %v2321 = vpack.c.b16 %v2161, %v2157
    %v2322 = vpack.c.b16 %v2162, %v2158
    %v2323 = vpack.c.b16 %v2163, %v2159
    %v2324 = vpack.c.b16 %v2164, %v2160
    %v2325 = vpack.c.b16 %v2169, %v2165
    %v2326 = vpack.c.b16 %v2170, %v2166
    %v2327 = vpack.c.b16 %v2171, %v2167
    %v2328 = vpack.c.b16 %v2172, %v2168
    %v2329 = vpack.c.b16 %v2177, %v2173
    %v2330 = vpack.c.b16 %v2178, %v2174
    %v2331 = vpack.c.b16 %v2179, %v2175
    %v2332 = vpack.c.b16 %v2180, %v2176
    %v2333 = vpack.c.b16 %v2185, %v2181
    %v2334 = vpack.c.b16 %v2186, %v2182
    %v2335 = vpack.c.b16 %v2187, %v2183
    %v2336 = vpack.c.b16 %v2188, %v2184
    %v2337 = vpack.c.b16 %v2193, %v2189
    %v2338 = vpack.c.b16 %v2194, %v2190
    %v2339 = vpack.c.b16 %v2195, %v2191
    %v2340 = vpack.c.b16 %v2196, %v2192
    %v2341 = vpack.c.b16 %v2201, %v2197
    %v2342 = vpack.c.b16 %v2202, %v2198
    %v2343 = vpack.c.b16 %v2203, %v2199
    %v2344 = vpack.c.b16 %v2204, %v2200
    %v2345 = vpack.c.b16 %v2209, %v2205
    %v2346 = vpack.c.b16 %v2210, %v2206
    %v2347 = vpack.c.b16 %v2211, %v2207
    %v2348 = vpack.c.b16 %v2212, %v2208
    %v2349 = vpack.c.b16 %v2217, %v2213
    %v2350 = vpack.c.b16 %v2218, %v2214
    %v2351 = vpack.c.b16 %v2219, %v2215
    %v2352 = vpack.c.b16 %v2220, %v2216
    %v2353 = vpack.c.b16 %v2225, %v2221
    %v2354 = vpack.c.b16 %v2226, %v2222
    %v2355 = vpack.c.b16 %v2227, %v2223
    %v2356 = vpack.c.b16 %v2228, %v2224
    %2485 = vmatprep.subr.bf16.mxu0 %v2258
    %2486 = vmatpush1.bf16.msra.mxu0 %v2257
    %2487 = vmatprep.subr.bf16.mxu0 %v2254
    %2488 = vmatpush1.bf16.msra.mxu0 %v2253
    %2489 = vmatprep.subr.bf16.mxu0 %v2250
    %2490 = vmatpush1.bf16.msra.mxu0 %v2249
    %2491 = vmatprep.subr.bf16.mxu0 %v2246
    %2492 = vmatpush1.bf16.msra.mxu0 %v2245
    %2493 = vmatprep.subr.bf16.mxu0 %v2242
    %2494 = vmatpush1.bf16.msra.mxu0 %v2241
    %2495 = vmatprep.subr.bf16.mxu0 %v2238
    %2496 = vmatpush1.bf16.msra.mxu0 %v2237
    %2497 = vmatprep.subr.bf16.mxu0 %v2234
    %2498 = vmatpush1.bf16.msra.mxu0 %v2233
    %2499 = vmatprep.subr.bf16.mxu0 %v2230
    %2500 = vmatpush1.bf16.msra.mxu0 %v2229
    %2501 = vmatprep.subr.bf16.mxu0 %v2290
    %2502 = vmatpush2.bf16.msra.mxu0 %v2289
    %2503 = vmatprep.subr.bf16.mxu0 %v2286
    %2504 = vmatpush2.bf16.msra.mxu0 %v2285
    %2505 = vmatprep.subr.bf16.mxu0 %v2282
    %2506 = vmatpush2.bf16.msra.mxu0 %v2281
    %2507 = vmatprep.subr.bf16.mxu0 %v2278
    %2508 = vmatpush2.bf16.msra.mxu0 %v2277
    %2509 = vmatprep.subr.bf16.mxu0 %v2274
    %2510 = vmatpush2.bf16.msra.mxu0 %v2273
    %2511 = vmatprep.subr.bf16.mxu0 %v2270
    %2512 = vmatpush2.bf16.msra.mxu0 %v2269
    %2513 = vmatprep.subr.bf16.mxu0 %v2266
    %2514 = vmatpush2.bf16.msra.mxu0 %v2265
    %2515 = vmatprep.subr.bf16.mxu0 %v2262
    %2516 = vmatpush2.bf16.msra.mxu0 %v2261
    %2517 = vmatprep.mubr.bf16.mxu0 %v1692
    %2518 = vmatmul.mubr.bf16.gmra.mxu0 %v1691
    %v2519 = vpop.f32.mrf.mxu0
    %v2520 = vadd.f32 %v1828, %v2519
    %v2521 = vpop.f32.mrf.mxu0
    %v2522 = vadd.f32 %v1832, %v2521
    %v2523 = vpop.f32.mrf.mxu0
    %v2524 = vpop.f32.mrf.mxu0
    %2525 = vdwg.mxu0
    %2526 = vmatprep.subr.bf16.mxu0 %v2322
    %2527 = vmatpush1.bf16.msra.mxu0 %v2321
    %2528 = vmatprep.subr.bf16.mxu0 %v2318
    %2529 = vmatpush1.bf16.msra.mxu0 %v2317
    %2530 = vmatprep.subr.bf16.mxu0 %v2314
    %2531 = vmatpush1.bf16.msra.mxu0 %v2313
    %2532 = vmatprep.subr.bf16.mxu0 %v2310
    %2533 = vmatpush1.bf16.msra.mxu0 %v2309
    %2534 = vmatprep.subr.bf16.mxu0 %v2306
    %2535 = vmatpush1.bf16.msra.mxu0 %v2305
    %2536 = vmatprep.subr.bf16.mxu0 %v2302
    %2537 = vmatpush1.bf16.msra.mxu0 %v2301
    %2538 = vmatprep.subr.bf16.mxu0 %v2298
    %2539 = vmatpush1.bf16.msra.mxu0 %v2297
    %2540 = vmatprep.subr.bf16.mxu0 %v2294
    %2541 = vmatpush1.bf16.msra.mxu0 %v2293
    %2542 = vmatprep.subr.bf16.mxu0 %v2354
    %2543 = vmatpush2.bf16.msra.mxu0 %v2353
    %2544 = vmatprep.subr.bf16.mxu0 %v2350
    %2545 = vmatpush2.bf16.msra.mxu0 %v2349
    %2546 = vmatprep.subr.bf16.mxu0 %v2346
    %2547 = vmatpush2.bf16.msra.mxu0 %v2345
    %2548 = vmatprep.subr.bf16.mxu0 %v2342
    %2549 = vmatpush2.bf16.msra.mxu0 %v2341
    %2550 = vmatprep.subr.bf16.mxu0 %v2338
    %2551 = vmatpush2.bf16.msra.mxu0 %v2337
    %2552 = vmatprep.subr.bf16.mxu0 %v2334
    %2553 = vmatpush2.bf16.msra.mxu0 %v2333
    %2554 = vmatprep.subr.bf16.mxu0 %v2330
    %2555 = vmatpush2.bf16.msra.mxu0 %v2329
    %2556 = vmatprep.subr.bf16.mxu0 %v2326
    %2557 = vmatpush2.bf16.msra.mxu0 %v2325
    %2558 = vmatprep.mubr.bf16.mxu0 %v1694
    %2559 = vmatmul.mubr.bf16.gmra.mxu0 %v1693
    %v2560 = vpop.f32.mrf.mxu0
    %v2561 = vadd.f32 %v2520, %v2560
    %v2562 = vpop.f32.mrf.mxu0
    %v2563 = vadd.f32 %v2522, %v2562
    %v2564 = vpop.f32.mrf.mxu0
    %v2565 = vpop.f32.mrf.mxu0
    %2566 = vdwg.mxu0
    %2567 = vmatprep.subr.bf16.mxu0 %v2260
    %2568 = vmatpush1.bf16.msra.mxu0 %v2259
    %2569 = vmatprep.subr.bf16.mxu0 %v2256
    %2570 = vmatpush1.bf16.msra.mxu0 %v2255
    %2571 = vmatprep.subr.bf16.mxu0 %v2252
    %2572 = vmatpush1.bf16.msra.mxu0 %v2251
    %2573 = vmatprep.subr.bf16.mxu0 %v2248
    %2574 = vmatpush1.bf16.msra.mxu0 %v2247
    %2575 = vmatprep.subr.bf16.mxu0 %v2244
    %2576 = vmatpush1.bf16.msra.mxu0 %v2243
    %2577 = vmatprep.subr.bf16.mxu0 %v2240
    %2578 = vmatpush1.bf16.msra.mxu0 %v2239
    %2579 = vmatprep.subr.bf16.mxu0 %v2236
    %2580 = vmatpush1.bf16.msra.mxu0 %v2235
    %2581 = vmatprep.subr.bf16.mxu0 %v2232
    %2582 = vmatpush1.bf16.msra.mxu0 %v2231
    %2583 = vmatprep.subr.bf16.mxu0 %v2292
    %2584 = vmatpush2.bf16.msra.mxu0 %v2291
    %2585 = vmatprep.subr.bf16.mxu0 %v2288
    %2586 = vmatpush2.bf16.msra.mxu0 %v2287
    %2587 = vmatprep.subr.bf16.mxu0 %v2284
    %2588 = vmatpush2.bf16.msra.mxu0 %v2283
    %2589 = vmatprep.subr.bf16.mxu0 %v2280
    %2590 = vmatpush2.bf16.msra.mxu0 %v2279
    %2591 = vmatprep.subr.bf16.mxu0 %v2276
    %2592 = vmatpush2.bf16.msra.mxu0 %v2275
    %2593 = vmatprep.subr.bf16.mxu0 %v2272
    %2594 = vmatpush2.bf16.msra.mxu0 %v2271
    %2595 = vmatprep.subr.bf16.mxu0 %v2268
    %2596 = vmatpush2.bf16.msra.mxu0 %v2267
    %2597 = vmatprep.subr.bf16.mxu0 %v2264
    %2598 = vmatpush2.bf16.msra.mxu0 %v2263
    %2599 = vmatprep.mubr.bf16.mxu0 %v1692
    %2600 = vmatmul.mubr.bf16.gmra.mxu0 %v1691
    %v2601 = vpop.f32.mrf.mxu0
    %v2602 = vadd.f32 %v1836, %v2601
    %v2603 = vpop.f32.mrf.mxu0
    %v2604 = vadd.f32 %v1840, %v2603
    %v2605 = vpop.f32.mrf.mxu0
    %v2606 = vpop.f32.mrf.mxu0
    %2607 = vdwg.mxu0
    %2608 = vmatprep.subr.bf16.mxu0 %v2324
    %2609 = vmatpush1.bf16.msra.mxu0 %v2323
    %2610 = vmatprep.subr.bf16.mxu0 %v2320
    %2611 = vmatpush1.bf16.msra.mxu0 %v2319
    %2612 = vmatprep.subr.bf16.mxu0 %v2316
    %2613 = vmatpush1.bf16.msra.mxu0 %v2315
    %2614 = vmatprep.subr.bf16.mxu0 %v2312
    %2615 = vmatpush1.bf16.msra.mxu0 %v2311
    %2616 = vmatprep.subr.bf16.mxu0 %v2308
    %2617 = vmatpush1.bf16.msra.mxu0 %v2307
    %2618 = vmatprep.subr.bf16.mxu0 %v2304
    %2619 = vmatpush1.bf16.msra.mxu0 %v2303
    %2620 = vmatprep.subr.bf16.mxu0 %v2300
    %2621 = vmatpush1.bf16.msra.mxu0 %v2299
    %2622 = vmatprep.subr.bf16.mxu0 %v2296
    %2623 = vmatpush1.bf16.msra.mxu0 %v2295
    %2624 = vmatprep.subr.bf16.mxu0 %v2356
    %2625 = vmatpush2.bf16.msra.mxu0 %v2355
    %2626 = vmatprep.subr.bf16.mxu0 %v2352
    %2627 = vmatpush2.bf16.msra.mxu0 %v2351
    %2628 = vmatprep.subr.bf16.mxu0 %v2348
    %2629 = vmatpush2.bf16.msra.mxu0 %v2347
    %2630 = vmatprep.subr.bf16.mxu0 %v2344
    %2631 = vmatpush2.bf16.msra.mxu0 %v2343
    %2632 = vmatprep.subr.bf16.mxu0 %v2340
    %2633 = vmatpush2.bf16.msra.mxu0 %v2339
    %2634 = vmatprep.subr.bf16.mxu0 %v2336
    %2635 = vmatpush2.bf16.msra.mxu0 %v2335
    %2636 = vmatprep.subr.bf16.mxu0 %v2332
    %2637 = vmatpush2.bf16.msra.mxu0 %v2331
    %2638 = vmatprep.subr.bf16.mxu0 %v2328
    %2639 = vmatpush2.bf16.msra.mxu0 %v2327
    %2640 = vmatprep.mubr.bf16.mxu0 %v1694
    %2641 = vmatmul.mubr.bf16.gmra.mxu0 %v1693
    %v2642 = vpop.f32.mrf.mxu0
    %v2643 = vadd.f32 %v2602, %v2642
    %v2644 = vpop.f32.mrf.mxu0
    %v2645 = vadd.f32 %v2604, %v2644
    %v2646 = vpop.f32.mrf.mxu0
    %v2647 = vpop.f32.mrf.mxu0
    %2648 = vdwg.mxu0
    %v2649 = vmin.f32 %v2561, 20.0
    %v2650 = vmin.f32 %v2563, 20.0
    %v2651 = vmin.f32 %v2643, 20.0
    %v2652 = vmin.f32 %v2645, 20.0
    %v2653 = vmul.f32 %v2649, 1.442695
    %v2654 = vpow.pop %v2653
    %v2655 = vmul.f32 %v2650, 1.442695
    %v2656 = vpow.pop %v2655
    %v2657 = vmul.f32 %v2651, 1.442695
    %v2658 = vpow.pop %v2657
    %v2659 = vmul.f32 %v2652, 1.442695
    %v2660 = vpow.pop %v2659
    %v2661 = vadd.f32 %v2654, 1.0
    %v2662 = vadd.f32 %v2656, 1.0
    %v2663 = vadd.f32 %v2658, 1.0
    %v2664 = vadd.f32 %v2660, 1.0
    %v2665 = vmul.f32 %v2661, %v2661
    %v2666 = vmul.f32 %v2662, %v2662
    %v2667 = vmul.f32 %v2663, %v2663
    %v2668 = vmul.f32 %v2664, %v2664
    %v2669 = vsub.f32 %v2665, 1.0
    %v2670 = vsub.f32 %v2666, 1.0
    %v2671 = vsub.f32 %v2667, 1.0
    %v2672 = vsub.f32 %v2668, 1.0
    %v2673 = vadd.f32 %v2665, 1.0
    %v2674 = vadd.f32 %v2666, 1.0
    %v2675 = vadd.f32 %v2667, 1.0
    %v2676 = vadd.f32 %v2668, 1.0
    %v2677 = vrcp.pop %v2673
    %v2678 = vrcp.pop %v2674
    %v2679 = vrcp.pop %v2675
    %v2680 = vrcp.pop %v2676
    %v2681 = vmul.f32 %v2669, %v2677
    %v2682 = vmul.f32 %v2670, %v2678
    %v2683 = vmul.f32 %v2671, %v2679
    %v2684 = vmul.f32 %v2672, %v2680
    %v2685 = vmul.f32 %v2561, %v2681
    %v2686 = vmul.f32 %v2563, %v2682
    %v2687 = vmul.f32 %v2643, %v2683
    %v2688 = vmul.f32 %v2645, %v2684
    %v2689 = vadd.f32 %v2685, %v689
    %v2690 = vadd.f32 %v2686, %v690
    %v2691 = vadd.f32 %v2687, %v691
    %v2692 = vadd.f32 %v2688, %v692
    %v2693 = vld [vmem:[%s9] sm:$0xf]
    %v2695 = vlaneseq
    %v2696 = vshrl.u32 %v2695, 7
    %v2697 = vsub.s32 0, %v2696
    %v2698 = vrot.slane %v2693, %v2697
    %v2699 = vlaneseq
    %v2700 = vshrl.u32 %v2699, 7
    %v2701 = vsub.s32 1, %v2700
    %v2702 = vrot.slane %v2693, %v2701
    %v2703 = vlaneseq
    %v2704 = vshrl.u32 %v2703, 7
    %v2705 = vsub.s32 2, %v2704
    %v2706 = vrot.slane %v2693, %v2705
    %v2707 = vlaneseq
    %v2708 = vshrl.u32 %v2707, 7
    %v2709 = vsub.s32 3, %v2708
    %v2710 = vrot.slane %v2693, %v2709
    %v2715 = vmul.f32 %v2689, %v2698
    %v2716 = vmul.f32 %v2690, %v2702
    %v2717 = vmul.f32 %v2691, %v2706
    %v2718 = vmul.f32 %v2692, %v2710
    %v2719 = vadd.f32 %v2715, %v2716
    %v2720 = vadd.f32 %v2719, %v2717
    %v2721 = vadd.f32 %v2720, %v2718
    %2722 = vadd.xlane.f32.xlu0 %v2721
    %v2723 = vpop.xlane.xlu0 %2722
    %v2724 = vld [vmem:[#allocation2] sm:$0x1]
    %v2726 = vlaneseq
    %v2727 = vshrl.u32 %v2726, 7
    %v2728 = vsub.s32 0, %v2727
    %v2729 = vrot.slane %v2724, %v2728
    %v2731 = vadd.f32 %v2723, %v2729
    %vm2732 = vcmask 7168
    %2733 = vst.msk [vmem:[%s17] sm:$0xff] %vm2732, %v2731
    %v2734 = vmin.f32 %v649, 20.0
    %v2735 = vmin.f32 %v650, 20.0
    %v2736 = vmin.f32 %v651, 20.0
    %v2737 = vmin.f32 %v652, 20.0
    %v2738 = vmul.f32 %v2734, 1.442695
    %v2739 = vpow.pop %v2738
    %v2740 = vmul.f32 %v2735, 1.442695
    %v2741 = vpow.pop %v2740
    %v2742 = vmul.f32 %v2736, 1.442695
    %v2743 = vpow.pop %v2742
    %v2744 = vmul.f32 %v2737, 1.442695
    %v2745 = vpow.pop %v2744
    %v2746 = vadd.f32 %v2739, 1.0
    %v2747 = vadd.f32 %v2741, 1.0
    %v2748 = vadd.f32 %v2743, 1.0
    %v2749 = vadd.f32 %v2745, 1.0
    %v2750 = vmul.f32 %v2746, %v2746
    %v2751 = vmul.f32 %v2747, %v2747
    %v2752 = vmul.f32 %v2748, %v2748
    %v2753 = vmul.f32 %v2749, %v2749
    %v2754 = vsub.f32 %v2750, 1.0
    %v2755 = vsub.f32 %v2751, 1.0
    %v2756 = vsub.f32 %v2752, 1.0
    %v2757 = vsub.f32 %v2753, 1.0
    %v2758 = vadd.f32 %v2750, 1.0
    %v2759 = vadd.f32 %v2751, 1.0
    %v2760 = vadd.f32 %v2752, 1.0
    %v2761 = vadd.f32 %v2753, 1.0
    %v2762 = vrcp.pop %v2758
    %v2763 = vrcp.pop %v2759
    %v2764 = vrcp.pop %v2760
    %v2765 = vrcp.pop %v2761
    %v2766 = vmul.f32 %v2754, %v2762
    %v2767 = vmul.f32 %v2755, %v2763
    %v2768 = vmul.f32 %v2756, %v2764
    %v2769 = vmul.f32 %v2757, %v2765
    %v2770 = vmul.f32 %v649, %v2766
    %v2771 = vmul.f32 %v650, %v2767
    %v2772 = vmul.f32 %v651, %v2768
    %v2773 = vmul.f32 %v652, %v2769
    %v2774 = vpack.c.bf16 %v2770, %v2770
    %v2775 = vpack.c.bf16 %v2771, %v2771
    %v2776 = vpack.c.bf16 %v2772, %v2772
    %v2777 = vpack.c.bf16 %v2773, %v2773
    %v2778 = vld [vmem:[#allocation12] sm:$0xff]
    %v2779 = vld [vmem:[#allocation12 + $0x8] sm:$0xff]
    %v2780 = vld [vmem:[#allocation12 + $0x10] sm:$0xff]
    %v2781 = vld [vmem:[#allocation12 + $0x18] sm:$0xff]
    %v2782 = vld [vmem:[#allocation12 + $0x20] sm:$0xff]
    %v2783 = vld [vmem:[#allocation12 + $0x28] sm:$0xff]
    %v2784 = vld [vmem:[#allocation12 + $0x30] sm:$0xff]
    %v2785 = vld [vmem:[#allocation12 + $0x38] sm:$0xff]
    %v2786 = vld [vmem:[#allocation12 + $0x40] sm:$0xff]
    %v2787 = vld [vmem:[#allocation12 + $0x48] sm:$0xff]
    %v2788 = vld [vmem:[#allocation12 + $0x50] sm:$0xff]
    %v2789 = vld [vmem:[#allocation12 + $0x58] sm:$0xff]
    %v2790 = vld [vmem:[#allocation12 + $0x60] sm:$0xff]
    %v2791 = vld [vmem:[#allocation12 + $0x68] sm:$0xff]
    %v2792 = vld [vmem:[#allocation12 + $0x70] sm:$0xff]
    %v2793 = vld [vmem:[#allocation12 + $0x78] sm:$0xff]
    %v2794 = vld [vmem:[#allocation12 + $0x80] sm:$0xff]
    %v2795 = vld [vmem:[#allocation12 + $0x88] sm:$0xff]
    %v2796 = vld [vmem:[#allocation12 + $0x90] sm:$0xff]
    %v2797 = vld [vmem:[#allocation12 + $0x98] sm:$0xff]
    %v2798 = vld [vmem:[#allocation12 + $0xa0] sm:$0xff]
    %v2799 = vld [vmem:[#allocation12 + $0xa8] sm:$0xff]
    %v2800 = vld [vmem:[#allocation12 + $0xb0] sm:$0xff]
    %v2801 = vld [vmem:[#allocation12 + $0xb8] sm:$0xff]
    %v2802 = vld [vmem:[#allocation12 + $0xc0] sm:$0xff]
    %v2803 = vld [vmem:[#allocation12 + $0xc8] sm:$0xff]
    %v2804 = vld [vmem:[#allocation12 + $0xd0] sm:$0xff]
    %v2805 = vld [vmem:[#allocation12 + $0xd8] sm:$0xff]
    %v2806 = vld [vmem:[#allocation12 + $0xe0] sm:$0xff]
    %v2807 = vld [vmem:[#allocation12 + $0xe8] sm:$0xff]
    %v2808 = vld [vmem:[#allocation12 + $0xf0] sm:$0xff]
    %v2809 = vld [vmem:[#allocation12 + $0xf8] sm:$0xff]
    %v2810 = vld [vmem:[#allocation12 + $0x100] sm:$0xff]
    %v2811 = vld [vmem:[#allocation12 + $0x108] sm:$0xff]
    %v2812 = vld [vmem:[#allocation12 + $0x110] sm:$0xff]
    %v2813 = vld [vmem:[#allocation12 + $0x118] sm:$0xff]
    %v2814 = vld [vmem:[#allocation12 + $0x120] sm:$0xff]
    %v2815 = vld [vmem:[#allocation12 + $0x128] sm:$0xff]
    %v2816 = vld [vmem:[#allocation12 + $0x130] sm:$0xff]
    %v2817 = vld [vmem:[#allocation12 + $0x138] sm:$0xff]
    %v2818 = vld [vmem:[#allocation12 + $0x140] sm:$0xff]
    %v2819 = vld [vmem:[#allocation12 + $0x148] sm:$0xff]
    %v2820 = vld [vmem:[#allocation12 + $0x150] sm:$0xff]
    %v2821 = vld [vmem:[#allocation12 + $0x158] sm:$0xff]
    %v2822 = vld [vmem:[#allocation12 + $0x160] sm:$0xff]
    %v2823 = vld [vmem:[#allocation12 + $0x168] sm:$0xff]
    %v2824 = vld [vmem:[#allocation12 + $0x170] sm:$0xff]
    %v2825 = vld [vmem:[#allocation12 + $0x178] sm:$0xff]
    %v2826 = vld [vmem:[#allocation12 + $0x180] sm:$0xff]
    %v2827 = vld [vmem:[#allocation12 + $0x188] sm:$0xff]
    %v2828 = vld [vmem:[#allocation12 + $0x190] sm:$0xff]
    %v2829 = vld [vmem:[#allocation12 + $0x198] sm:$0xff]
    %v2830 = vld [vmem:[#allocation12 + $0x1a0] sm:$0xff]
    %v2831 = vld [vmem:[#allocation12 + $0x1a8] sm:$0xff]
    %v2832 = vld [vmem:[#allocation12 + $0x1b0] sm:$0xff]
    %v2833 = vld [vmem:[#allocation12 + $0x1b8] sm:$0xff]
    %v2834 = vld [vmem:[#allocation12 + $0x1c0] sm:$0xff]
    %v2835 = vld [vmem:[#allocation12 + $0x1c8] sm:$0xff]
    %v2836 = vld [vmem:[#allocation12 + $0x1d0] sm:$0xff]
    %v2837 = vld [vmem:[#allocation12 + $0x1d8] sm:$0xff]
    %v2838 = vld [vmem:[#allocation12 + $0x1e0] sm:$0xff]
    %v2839 = vld [vmem:[#allocation12 + $0x1e8] sm:$0xff]
    %v2840 = vld [vmem:[#allocation12 + $0x1f0] sm:$0xff]
    %v2841 = vld [vmem:[#allocation12 + $0x1f8] sm:$0xff]
    %v2842 = vld [vmem:[#allocation12 + $0x200] sm:$0xff]
    %v2843 = vld [vmem:[#allocation12 + $0x208] sm:$0xff]
    %v2844 = vld [vmem:[#allocation12 + $0x210] sm:$0xff]
    %v2845 = vld [vmem:[#allocation12 + $0x218] sm:$0xff]
    %v2846 = vld [vmem:[#allocation12 + $0x220] sm:$0xff]
    %v2847 = vld [vmem:[#allocation12 + $0x228] sm:$0xff]
    %v2848 = vld [vmem:[#allocation12 + $0x230] sm:$0xff]
    %v2849 = vld [vmem:[#allocation12 + $0x238] sm:$0xff]
    %v2850 = vld [vmem:[#allocation12 + $0x240] sm:$0xff]
    %v2851 = vld [vmem:[#allocation12 + $0x248] sm:$0xff]
    %v2852 = vld [vmem:[#allocation12 + $0x250] sm:$0xff]
    %v2853 = vld [vmem:[#allocation12 + $0x258] sm:$0xff]
    %v2854 = vld [vmem:[#allocation12 + $0x260] sm:$0xff]
    %v2855 = vld [vmem:[#allocation12 + $0x268] sm:$0xff]
    %v2856 = vld [vmem:[#allocation12 + $0x270] sm:$0xff]
    %v2857 = vld [vmem:[#allocation12 + $0x278] sm:$0xff]
    %v2858 = vld [vmem:[#allocation12 + $0x280] sm:$0xff]
    %v2859 = vld [vmem:[#allocation12 + $0x288] sm:$0xff]
    %v2860 = vld [vmem:[#allocation12 + $0x290] sm:$0xff]
    %v2861 = vld [vmem:[#allocation12 + $0x298] sm:$0xff]
    %v2862 = vld [vmem:[#allocation12 + $0x2a0] sm:$0xff]
    %v2863 = vld [vmem:[#allocation12 + $0x2a8] sm:$0xff]
    %v2864 = vld [vmem:[#allocation12 + $0x2b0] sm:$0xff]
    %v2865 = vld [vmem:[#allocation12 + $0x2b8] sm:$0xff]
    %v2866 = vld [vmem:[#allocation12 + $0x2c0] sm:$0xff]
    %v2867 = vld [vmem:[#allocation12 + $0x2c8] sm:$0xff]
    %v2868 = vld [vmem:[#allocation12 + $0x2d0] sm:$0xff]
    %v2869 = vld [vmem:[#allocation12 + $0x2d8] sm:$0xff]
    %v2870 = vld [vmem:[#allocation12 + $0x2e0] sm:$0xff]
    %v2871 = vld [vmem:[#allocation12 + $0x2e8] sm:$0xff]
    %v2872 = vld [vmem:[#allocation12 + $0x2f0] sm:$0xff]
    %v2873 = vld [vmem:[#allocation12 + $0x2f8] sm:$0xff]
    %v2874 = vld [vmem:[#allocation12 + $0x300] sm:$0xff]
    %v2875 = vld [vmem:[#allocation12 + $0x308] sm:$0xff]
    %v2876 = vld [vmem:[#allocation12 + $0x310] sm:$0xff]
    %v2877 = vld [vmem:[#allocation12 + $0x318] sm:$0xff]
    %v2878 = vld [vmem:[#allocation12 + $0x320] sm:$0xff]
    %v2879 = vld [vmem:[#allocation12 + $0x328] sm:$0xff]
    %v2880 = vld [vmem:[#allocation12 + $0x330] sm:$0xff]
    %v2881 = vld [vmem:[#allocation12 + $0x338] sm:$0xff]
    %v2882 = vld [vmem:[#allocation12 + $0x340] sm:$0xff]
    %v2883 = vld [vmem:[#allocation12 + $0x348] sm:$0xff]
    %v2884 = vld [vmem:[#allocation12 + $0x350] sm:$0xff]
    %v2885 = vld [vmem:[#allocation12 + $0x358] sm:$0xff]
    %v2886 = vld [vmem:[#allocation12 + $0x360] sm:$0xff]
    %v2887 = vld [vmem:[#allocation12 + $0x368] sm:$0xff]
    %v2888 = vld [vmem:[#allocation12 + $0x370] sm:$0xff]
    %v2889 = vld [vmem:[#allocation12 + $0x378] sm:$0xff]
    %v2890 = vld [vmem:[#allocation12 + $0x380] sm:$0xff]
    %v2891 = vld [vmem:[#allocation12 + $0x388] sm:$0xff]
    %v2892 = vld [vmem:[#allocation12 + $0x390] sm:$0xff]
    %v2893 = vld [vmem:[#allocation12 + $0x398] sm:$0xff]
    %v2894 = vld [vmem:[#allocation12 + $0x3a0] sm:$0xff]
    %v2895 = vld [vmem:[#allocation12 + $0x3a8] sm:$0xff]
    %v2896 = vld [vmem:[#allocation12 + $0x3b0] sm:$0xff]
    %v2897 = vld [vmem:[#allocation12 + $0x3b8] sm:$0xff]
    %v2898 = vld [vmem:[#allocation12 + $0x3c0] sm:$0xff]
    %v2899 = vld [vmem:[#allocation12 + $0x3c8] sm:$0xff]
    %v2900 = vld [vmem:[#allocation12 + $0x3d0] sm:$0xff]
    %v2901 = vld [vmem:[#allocation12 + $0x3d8] sm:$0xff]
    %v2902 = vld [vmem:[#allocation12 + $0x3e0] sm:$0xff]
    %v2903 = vld [vmem:[#allocation12 + $0x3e8] sm:$0xff]
    %v2904 = vld [vmem:[#allocation12 + $0x3f0] sm:$0xff]
    %v2905 = vld [vmem:[#allocation12 + $0x3f8] sm:$0xff]
    %v2906 = vld [vmem:[%s12] sm:$0xf]
    %v2908 = vlaneseq
    %v2909 = vshrl.u32 %v2908, 7
    %v2910 = vsub.s32 0, %v2909
    %v2911 = vrot.slane %v2906, %v2910
    %v2912 = vlaneseq
    %v2913 = vshrl.u32 %v2912, 7
    %v2914 = vsub.s32 1, %v2913
    %v2915 = vrot.slane %v2906, %v2914
    %v2916 = vlaneseq
    %v2917 = vshrl.u32 %v2916, 7
    %v2918 = vsub.s32 2, %v2917
    %v2919 = vrot.slane %v2906, %v2918
    %v2920 = vlaneseq
    %v2921 = vshrl.u32 %v2920, 7
    %v2922 = vsub.s32 3, %v2921
    %v2923 = vrot.slane %v2906, %v2922
    %v3056 = vunpack.c.l.b16 %v2778
    %v3057 = vunpack.c.h.b16 %v2778
    %v3058 = vunpack.c.l.b16 %v2779
    %v3059 = vunpack.c.h.b16 %v2779
    %v3060 = vunpack.c.l.b16 %v2780
    %v3061 = vunpack.c.h.b16 %v2780
    %v3062 = vunpack.c.l.b16 %v2781
    %v3063 = vunpack.c.h.b16 %v2781
    %v3064 = vunpack.c.l.b16 %v2782
    %v3065 = vunpack.c.h.b16 %v2782
    %v3066 = vunpack.c.l.b16 %v2783
    %v3067 = vunpack.c.h.b16 %v2783
    %v3068 = vunpack.c.l.b16 %v2784
    %v3069 = vunpack.c.h.b16 %v2784
    %v3070 = vunpack.c.l.b16 %v2785
    %v3071 = vunpack.c.h.b16 %v2785
    %v3072 = vunpack.c.l.b16 %v2786
    %v3073 = vunpack.c.h.b16 %v2786
    %v3074 = vunpack.c.l.b16 %v2787
    %v3075 = vunpack.c.h.b16 %v2787
    %v3076 = vunpack.c.l.b16 %v2788
    %v3077 = vunpack.c.h.b16 %v2788
    %v3078 = vunpack.c.l.b16 %v2789
    %v3079 = vunpack.c.h.b16 %v2789
    %v3080 = vunpack.c.l.b16 %v2790
    %v3081 = vunpack.c.h.b16 %v2790
    %v3082 = vunpack.c.l.b16 %v2791
    %v3083 = vunpack.c.h.b16 %v2791
    %v3084 = vunpack.c.l.b16 %v2792
    %v3085 = vunpack.c.h.b16 %v2792
    %v3086 = vunpack.c.l.b16 %v2793
    %v3087 = vunpack.c.h.b16 %v2793
    %v3088 = vunpack.c.l.b16 %v2794
    %v3089 = vunpack.c.h.b16 %v2794
    %v3090 = vunpack.c.l.b16 %v2795
    %v3091 = vunpack.c.h.b16 %v2795
    %v3092 = vunpack.c.l.b16 %v2796
    %v3093 = vunpack.c.h.b16 %v2796
    %v3094 = vunpack.c.l.b16 %v2797
    %v3095 = vunpack.c.h.b16 %v2797
    %v3096 = vunpack.c.l.b16 %v2798
    %v3097 = vunpack.c.h.b16 %v2798
    %v3098 = vunpack.c.l.b16 %v2799
    %v3099 = vunpack.c.h.b16 %v2799
    %v3100 = vunpack.c.l.b16 %v2800
    %v3101 = vunpack.c.h.b16 %v2800
    %v3102 = vunpack.c.l.b16 %v2801
    %v3103 = vunpack.c.h.b16 %v2801
    %v3104 = vunpack.c.l.b16 %v2802
    %v3105 = vunpack.c.h.b16 %v2802
    %v3106 = vunpack.c.l.b16 %v2803
    %v3107 = vunpack.c.h.b16 %v2803
    %v3108 = vunpack.c.l.b16 %v2804
    %v3109 = vunpack.c.h.b16 %v2804
    %v3110 = vunpack.c.l.b16 %v2805
    %v3111 = vunpack.c.h.b16 %v2805
    %v3112 = vunpack.c.l.b16 %v2806
    %v3113 = vunpack.c.h.b16 %v2806
    %v3114 = vunpack.c.l.b16 %v2807
    %v3115 = vunpack.c.h.b16 %v2807
    %v3116 = vunpack.c.l.b16 %v2808
    %v3117 = vunpack.c.h.b16 %v2808
    %v3118 = vunpack.c.l.b16 %v2809
    %v3119 = vunpack.c.h.b16 %v2809
    %v3120 = vunpack.c.l.b16 %v2810
    %v3121 = vunpack.c.h.b16 %v2810
    %v3122 = vunpack.c.l.b16 %v2811
    %v3123 = vunpack.c.h.b16 %v2811
    %v3124 = vunpack.c.l.b16 %v2812
    %v3125 = vunpack.c.h.b16 %v2812
    %v3126 = vunpack.c.l.b16 %v2813
    %v3127 = vunpack.c.h.b16 %v2813
    %v3128 = vunpack.c.l.b16 %v2814
    %v3129 = vunpack.c.h.b16 %v2814
    %v3130 = vunpack.c.l.b16 %v2815
    %v3131 = vunpack.c.h.b16 %v2815
    %v3132 = vunpack.c.l.b16 %v2816
    %v3133 = vunpack.c.h.b16 %v2816
    %v3134 = vunpack.c.l.b16 %v2817
    %v3135 = vunpack.c.h.b16 %v2817
    %v3136 = vunpack.c.l.b16 %v2818
    %v3137 = vunpack.c.h.b16 %v2818
    %v3138 = vunpack.c.l.b16 %v2819
    %v3139 = vunpack.c.h.b16 %v2819
    %v3140 = vunpack.c.l.b16 %v2820
    %v3141 = vunpack.c.h.b16 %v2820
    %v3142 = vunpack.c.l.b16 %v2821
    %v3143 = vunpack.c.h.b16 %v2821
    %v3144 = vunpack.c.l.b16 %v2822
    %v3145 = vunpack.c.h.b16 %v2822
    %v3146 = vunpack.c.l.b16 %v2823
    %v3147 = vunpack.c.h.b16 %v2823
    %v3148 = vunpack.c.l.b16 %v2824
    %v3149 = vunpack.c.h.b16 %v2824
    %v3150 = vunpack.c.l.b16 %v2825
    %v3151 = vunpack.c.h.b16 %v2825
    %v3152 = vunpack.c.l.b16 %v2826
    %v3153 = vunpack.c.h.b16 %v2826
    %v3154 = vunpack.c.l.b16 %v2827
    %v3155 = vunpack.c.h.b16 %v2827
    %v3156 = vunpack.c.l.b16 %v2828
    %v3157 = vunpack.c.h.b16 %v2828
    %v3158 = vunpack.c.l.b16 %v2829
    %v3159 = vunpack.c.h.b16 %v2829
    %v3160 = vunpack.c.l.b16 %v2830
    %v3161 = vunpack.c.h.b16 %v2830
    %v3162 = vunpack.c.l.b16 %v2831
    %v3163 = vunpack.c.h.b16 %v2831
    %v3164 = vunpack.c.l.b16 %v2832
    %v3165 = vunpack.c.h.b16 %v2832
    %v3166 = vunpack.c.l.b16 %v2833
    %v3167 = vunpack.c.h.b16 %v2833
    %v3168 = vunpack.c.l.b16 %v2834
    %v3169 = vunpack.c.h.b16 %v2834
    %v3170 = vunpack.c.l.b16 %v2835
    %v3171 = vunpack.c.h.b16 %v2835
    %v3172 = vunpack.c.l.b16 %v2836
    %v3173 = vunpack.c.h.b16 %v2836
    %v3174 = vunpack.c.l.b16 %v2837
    %v3175 = vunpack.c.h.b16 %v2837
    %v3176 = vunpack.c.l.b16 %v2838
    %v3177 = vunpack.c.h.b16 %v2838
    %v3178 = vunpack.c.l.b16 %v2839
    %v3179 = vunpack.c.h.b16 %v2839
    %v3180 = vunpack.c.l.b16 %v2840
    %v3181 = vunpack.c.h.b16 %v2840
    %v3182 = vunpack.c.l.b16 %v2841
    %v3183 = vunpack.c.h.b16 %v2841
    %v3184 = vunpack.c.l.b16 %v2842
    %v3185 = vunpack.c.h.b16 %v2842
    %v3186 = vunpack.c.l.b16 %v2843
    %v3187 = vunpack.c.h.b16 %v2843
    %v3188 = vunpack.c.l.b16 %v2844
    %v3189 = vunpack.c.h.b16 %v2844
    %v3190 = vunpack.c.l.b16 %v2845
    %v3191 = vunpack.c.h.b16 %v2845
    %v3192 = vunpack.c.l.b16 %v2846
    %v3193 = vunpack.c.h.b16 %v2846
    %v3194 = vunpack.c.l.b16 %v2847
    %v3195 = vunpack.c.h.b16 %v2847
    %v3196 = vunpack.c.l.b16 %v2848
    %v3197 = vunpack.c.h.b16 %v2848
    %v3198 = vunpack.c.l.b16 %v2849
    %v3199 = vunpack.c.h.b16 %v2849
    %v3200 = vunpack.c.l.b16 %v2850
    %v3201 = vunpack.c.h.b16 %v2850
    %v3202 = vunpack.c.l.b16 %v2851
    %v3203 = vunpack.c.h.b16 %v2851
    %v3204 = vunpack.c.l.b16 %v2852
    %v3205 = vunpack.c.h.b16 %v2852
    %v3206 = vunpack.c.l.b16 %v2853
    %v3207 = vunpack.c.h.b16 %v2853
    %v3208 = vunpack.c.l.b16 %v2854
    %v3209 = vunpack.c.h.b16 %v2854
    %v3210 = vunpack.c.l.b16 %v2855
    %v3211 = vunpack.c.h.b16 %v2855
    %v3212 = vunpack.c.l.b16 %v2856
    %v3213 = vunpack.c.h.b16 %v2856
    %v3214 = vunpack.c.l.b16 %v2857
    %v3215 = vunpack.c.h.b16 %v2857
    %v3216 = vunpack.c.l.b16 %v2858
    %v3217 = vunpack.c.h.b16 %v2858
    %v3218 = vunpack.c.l.b16 %v2859
    %v3219 = vunpack.c.h.b16 %v2859
    %v3220 = vunpack.c.l.b16 %v2860
    %v3221 = vunpack.c.h.b16 %v2860
    %v3222 = vunpack.c.l.b16 %v2861
    %v3223 = vunpack.c.h.b16 %v2861
    %v3224 = vunpack.c.l.b16 %v2862
    %v3225 = vunpack.c.h.b16 %v2862
    %v3226 = vunpack.c.l.b16 %v2863
    %v3227 = vunpack.c.h.b16 %v2863
    %v3228 = vunpack.c.l.b16 %v2864
    %v3229 = vunpack.c.h.b16 %v2864
    %v3230 = vunpack.c.l.b16 %v2865
    %v3231 = vunpack.c.h.b16 %v2865
    %v3232 = vunpack.c.l.b16 %v2866
    %v3233 = vunpack.c.h.b16 %v2866
    %v3234 = vunpack.c.l.b16 %v2867
    %v3235 = vunpack.c.h.b16 %v2867
    %v3236 = vunpack.c.l.b16 %v2868
    %v3237 = vunpack.c.h.b16 %v2868
    %v3238 = vunpack.c.l.b16 %v2869
    %v3239 = vunpack.c.h.b16 %v2869
    %v3240 = vunpack.c.l.b16 %v2870
    %v3241 = vunpack.c.h.b16 %v2870
    %v3242 = vunpack.c.l.b16 %v2871
    %v3243 = vunpack.c.h.b16 %v2871
    %v3244 = vunpack.c.l.b16 %v2872
    %v3245 = vunpack.c.h.b16 %v2872
    %v3246 = vunpack.c.l.b16 %v2873
    %v3247 = vunpack.c.h.b16 %v2873
    %v3248 = vunpack.c.l.b16 %v2874
    %v3249 = vunpack.c.h.b16 %v2874
    %v3250 = vunpack.c.l.b16 %v2875
    %v3251 = vunpack.c.h.b16 %v2875
    %v3252 = vunpack.c.l.b16 %v2876
    %v3253 = vunpack.c.h.b16 %v2876
    %v3254 = vunpack.c.l.b16 %v2877
    %v3255 = vunpack.c.h.b16 %v2877
    %v3256 = vunpack.c.l.b16 %v2878
    %v3257 = vunpack.c.h.b16 %v2878
    %v3258 = vunpack.c.l.b16 %v2879
    %v3259 = vunpack.c.h.b16 %v2879
    %v3260 = vunpack.c.l.b16 %v2880
    %v3261 = vunpack.c.h.b16 %v2880
    %v3262 = vunpack.c.l.b16 %v2881
    %v3263 = vunpack.c.h.b16 %v2881
    %v3264 = vunpack.c.l.b16 %v2882
    %v3265 = vunpack.c.h.b16 %v2882
    %v3266 = vunpack.c.l.b16 %v2883
    %v3267 = vunpack.c.h.b16 %v2883
    %v3268 = vunpack.c.l.b16 %v2884
    %v3269 = vunpack.c.h.b16 %v2884
    %v3270 = vunpack.c.l.b16 %v2885
    %v3271 = vunpack.c.h.b16 %v2885
    %v3272 = vunpack.c.l.b16 %v2886
    %v3273 = vunpack.c.h.b16 %v2886
    %v3274 = vunpack.c.l.b16 %v2887
    %v3275 = vunpack.c.h.b16 %v2887
    %v3276 = vunpack.c.l.b16 %v2888
    %v3277 = vunpack.c.h.b16 %v2888
    %v3278 = vunpack.c.l.b16 %v2889
    %v3279 = vunpack.c.h.b16 %v2889
    %v3280 = vunpack.c.l.b16 %v2890
    %v3281 = vunpack.c.h.b16 %v2890
    %v3282 = vunpack.c.l.b16 %v2891
    %v3283 = vunpack.c.h.b16 %v2891
    %v3284 = vunpack.c.l.b16 %v2892
    %v3285 = vunpack.c.h.b16 %v2892
    %v3286 = vunpack.c.l.b16 %v2893
    %v3287 = vunpack.c.h.b16 %v2893
    %v3288 = vunpack.c.l.b16 %v2894
    %v3289 = vunpack.c.h.b16 %v2894
    %v3290 = vunpack.c.l.b16 %v2895
    %v3291 = vunpack.c.h.b16 %v2895
    %v3292 = vunpack.c.l.b16 %v2896
    %v3293 = vunpack.c.h.b16 %v2896
    %v3294 = vunpack.c.l.b16 %v2897
    %v3295 = vunpack.c.h.b16 %v2897
    %v3296 = vunpack.c.l.b16 %v2898
    %v3297 = vunpack.c.h.b16 %v2898
    %v3298 = vunpack.c.l.b16 %v2899
    %v3299 = vunpack.c.h.b16 %v2899
    %v3300 = vunpack.c.l.b16 %v2900
    %v3301 = vunpack.c.h.b16 %v2900
    %v3302 = vunpack.c.l.b16 %v2901
    %v3303 = vunpack.c.h.b16 %v2901
    %v3304 = vunpack.c.l.b16 %v2902
    %v3305 = vunpack.c.h.b16 %v2902
    %v3306 = vunpack.c.l.b16 %v2903
    %v3307 = vunpack.c.h.b16 %v2903
    %v3308 = vunpack.c.l.b16 %v2904
    %v3309 = vunpack.c.h.b16 %v2904
    %v3310 = vunpack.c.l.b16 %v2905
    %v3311 = vunpack.c.h.b16 %v2905
    %v3312 = vpack.c.b16 %v3060, %v3056
    %v3313 = vpack.c.b16 %v3061, %v3057
    %v3314 = vpack.c.b16 %v3062, %v3058
    %v3315 = vpack.c.b16 %v3063, %v3059
    %v3316 = vpack.c.b16 %v3068, %v3064
    %v3317 = vpack.c.b16 %v3069, %v3065
    %v3318 = vpack.c.b16 %v3070, %v3066
    %v3319 = vpack.c.b16 %v3071, %v3067
    %v3320 = vpack.c.b16 %v3076, %v3072
    %v3321 = vpack.c.b16 %v3077, %v3073
    %v3322 = vpack.c.b16 %v3078, %v3074
    %v3323 = vpack.c.b16 %v3079, %v3075
    %v3324 = vpack.c.b16 %v3084, %v3080
    %v3325 = vpack.c.b16 %v3085, %v3081
    %v3326 = vpack.c.b16 %v3086, %v3082
    %v3327 = vpack.c.b16 %v3087, %v3083
    %v3328 = vpack.c.b16 %v3092, %v3088
    %v3329 = vpack.c.b16 %v3093, %v3089
    %v3330 = vpack.c.b16 %v3094, %v3090
    %v3331 = vpack.c.b16 %v3095, %v3091
    %v3332 = vpack.c.b16 %v3100, %v3096
    %v3333 = vpack.c.b16 %v3101, %v3097
    %v3334 = vpack.c.b16 %v3102, %v3098
    %v3335 = vpack.c.b16 %v3103, %v3099
    %v3336 = vpack.c.b16 %v3108, %v3104
    %v3337 = vpack.c.b16 %v3109, %v3105
    %v3338 = vpack.c.b16 %v3110, %v3106
    %v3339 = vpack.c.b16 %v3111, %v3107
    %v3340 = vpack.c.b16 %v3116, %v3112
    %v3341 = vpack.c.b16 %v3117, %v3113
    %v3342 = vpack.c.b16 %v3118, %v3114
    %v3343 = vpack.c.b16 %v3119, %v3115
    %v3344 = vpack.c.b16 %v3124, %v3120
    %v3345 = vpack.c.b16 %v3125, %v3121
    %v3346 = vpack.c.b16 %v3126, %v3122
    %v3347 = vpack.c.b16 %v3127, %v3123
    %v3348 = vpack.c.b16 %v3132, %v3128
    %v3349 = vpack.c.b16 %v3133, %v3129
    %v3350 = vpack.c.b16 %v3134, %v3130
    %v3351 = vpack.c.b16 %v3135, %v3131
    %v3352 = vpack.c.b16 %v3140, %v3136
    %v3353 = vpack.c.b16 %v3141, %v3137
    %v3354 = vpack.c.b16 %v3142, %v3138
    %v3355 = vpack.c.b16 %v3143, %v3139
    %v3356 = vpack.c.b16 %v3148, %v3144
    %v3357 = vpack.c.b16 %v3149, %v3145
    %v3358 = vpack.c.b16 %v3150, %v3146
    %v3359 = vpack.c.b16 %v3151, %v3147
    %v3360 = vpack.c.b16 %v3156, %v3152
    %v3361 = vpack.c.b16 %v3157, %v3153
    %v3362 = vpack.c.b16 %v3158, %v3154
    %v3363 = vpack.c.b16 %v3159, %v3155
    %v3364 = vpack.c.b16 %v3164, %v3160
    %v3365 = vpack.c.b16 %v3165, %v3161
    %v3366 = vpack.c.b16 %v3166, %v3162
    %v3367 = vpack.c.b16 %v3167, %v3163
    %v3368 = vpack.c.b16 %v3172, %v3168
    %v3369 = vpack.c.b16 %v3173, %v3169
    %v3370 = vpack.c.b16 %v3174, %v3170
    %v3371 = vpack.c.b16 %v3175, %v3171
    %v3372 = vpack.c.b16 %v3180, %v3176
    %v3373 = vpack.c.b16 %v3181, %v3177
    %v3374 = vpack.c.b16 %v3182, %v3178
    %v3375 = vpack.c.b16 %v3183, %v3179
    %v3376 = vpack.c.b16 %v3188, %v3184
    %v3377 = vpack.c.b16 %v3189, %v3185
    %v3378 = vpack.c.b16 %v3190, %v3186
    %v3379 = vpack.c.b16 %v3191, %v3187
    %v3380 = vpack.c.b16 %v3196, %v3192
    %v3381 = vpack.c.b16 %v3197, %v3193
    %v3382 = vpack.c.b16 %v3198, %v3194
    %v3383 = vpack.c.b16 %v3199, %v3195
    %v3384 = vpack.c.b16 %v3204, %v3200
    %v3385 = vpack.c.b16 %v3205, %v3201
    %v3386 = vpack.c.b16 %v3206, %v3202
    %v3387 = vpack.c.b16 %v3207, %v3203
    %v3388 = vpack.c.b16 %v3212, %v3208
    %v3389 = vpack.c.b16 %v3213, %v3209
    %v3390 = vpack.c.b16 %v3214, %v3210
    %v3391 = vpack.c.b16 %v3215, %v3211
    %v3392 = vpack.c.b16 %v3220, %v3216
    %v3393 = vpack.c.b16 %v3221, %v3217
    %v3394 = vpack.c.b16 %v3222, %v3218
    %v3395 = vpack.c.b16 %v3223, %v3219
    %v3396 = vpack.c.b16 %v3228, %v3224
    %v3397 = vpack.c.b16 %v3229, %v3225
    %v3398 = vpack.c.b16 %v3230, %v3226
    %v3399 = vpack.c.b16 %v3231, %v3227
    %v3400 = vpack.c.b16 %v3236, %v3232
    %v3401 = vpack.c.b16 %v3237, %v3233
    %v3402 = vpack.c.b16 %v3238, %v3234
    %v3403 = vpack.c.b16 %v3239, %v3235
    %v3404 = vpack.c.b16 %v3244, %v3240
    %v3405 = vpack.c.b16 %v3245, %v3241
    %v3406 = vpack.c.b16 %v3246, %v3242
    %v3407 = vpack.c.b16 %v3247, %v3243
    %v3408 = vpack.c.b16 %v3252, %v3248
    %v3409 = vpack.c.b16 %v3253, %v3249
    %v3410 = vpack.c.b16 %v3254, %v3250
    %v3411 = vpack.c.b16 %v3255, %v3251
    %v3412 = vpack.c.b16 %v3260, %v3256
    %v3413 = vpack.c.b16 %v3261, %v3257
    %v3414 = vpack.c.b16 %v3262, %v3258
    %v3415 = vpack.c.b16 %v3263, %v3259
    %v3416 = vpack.c.b16 %v3268, %v3264
    %v3417 = vpack.c.b16 %v3269, %v3265
    %v3418 = vpack.c.b16 %v3270, %v3266
    %v3419 = vpack.c.b16 %v3271, %v3267
    %v3420 = vpack.c.b16 %v3276, %v3272
    %v3421 = vpack.c.b16 %v3277, %v3273
    %v3422 = vpack.c.b16 %v3278, %v3274
    %v3423 = vpack.c.b16 %v3279, %v3275
    %v3424 = vpack.c.b16 %v3284, %v3280
    %v3425 = vpack.c.b16 %v3285, %v3281
    %v3426 = vpack.c.b16 %v3286, %v3282
    %v3427 = vpack.c.b16 %v3287, %v3283
    %v3428 = vpack.c.b16 %v3292, %v3288
    %v3429 = vpack.c.b16 %v3293, %v3289
    %v3430 = vpack.c.b16 %v3294, %v3290
    %v3431 = vpack.c.b16 %v3295, %v3291
    %v3432 = vpack.c.b16 %v3300, %v3296
    %v3433 = vpack.c.b16 %v3301, %v3297
    %v3434 = vpack.c.b16 %v3302, %v3298
    %v3435 = vpack.c.b16 %v3303, %v3299
    %v3436 = vpack.c.b16 %v3308, %v3304
    %v3437 = vpack.c.b16 %v3309, %v3305
    %v3438 = vpack.c.b16 %v3310, %v3306
    %v3439 = vpack.c.b16 %v3311, %v3307
    %3568 = vmatprep.subr.bf16.mxu0 %v3341
    %3569 = vmatpush1.bf16.msra.mxu0 %v3340
    %3570 = vmatprep.subr.bf16.mxu0 %v3337
    %3571 = vmatpush1.bf16.msra.mxu0 %v3336
    %3572 = vmatprep.subr.bf16.mxu0 %v3333
    %3573 = vmatpush1.bf16.msra.mxu0 %v3332
    %3574 = vmatprep.subr.bf16.mxu0 %v3329
    %3575 = vmatpush1.bf16.msra.mxu0 %v3328
    %3576 = vmatprep.subr.bf16.mxu0 %v3325
    %3577 = vmatpush1.bf16.msra.mxu0 %v3324
    %3578 = vmatprep.subr.bf16.mxu0 %v3321
    %3579 = vmatpush1.bf16.msra.mxu0 %v3320
    %3580 = vmatprep.subr.bf16.mxu0 %v3317
    %3581 = vmatpush1.bf16.msra.mxu0 %v3316
    %3582 = vmatprep.subr.bf16.mxu0 %v3313
    %3583 = vmatpush1.bf16.msra.mxu0 %v3312
    %3584 = vmatprep.subr.bf16.mxu0 %v3373
    %3585 = vmatpush2.bf16.msra.mxu0 %v3372
    %3586 = vmatprep.subr.bf16.mxu0 %v3369
    %3587 = vmatpush2.bf16.msra.mxu0 %v3368
    %3588 = vmatprep.subr.bf16.mxu0 %v3365
    %3589 = vmatpush2.bf16.msra.mxu0 %v3364
    %3590 = vmatprep.subr.bf16.mxu0 %v3361
    %3591 = vmatpush2.bf16.msra.mxu0 %v3360
    %3592 = vmatprep.subr.bf16.mxu0 %v3357
    %3593 = vmatpush2.bf16.msra.mxu0 %v3356
    %3594 = vmatprep.subr.bf16.mxu0 %v3353
    %3595 = vmatpush2.bf16.msra.mxu0 %v3352
    %3596 = vmatprep.subr.bf16.mxu0 %v3349
    %3597 = vmatpush2.bf16.msra.mxu0 %v3348
    %3598 = vmatprep.subr.bf16.mxu0 %v3345
    %3599 = vmatpush2.bf16.msra.mxu0 %v3344
    %3600 = vmatprep.mubr.bf16.mxu0 %v2775
    %3601 = vmatmul.mubr.bf16.gmra.mxu0 %v2774
    %v3602 = vpop.f32.mrf.mxu0
    %v3603 = vadd.f32 %v2911, %v3602
    %v3604 = vpop.f32.mrf.mxu0
    %v3605 = vadd.f32 %v2915, %v3604
    %v3606 = vpop.f32.mrf.mxu0
    %v3607 = vpop.f32.mrf.mxu0
    %3608 = vdwg.mxu0
    %3609 = vmatprep.subr.bf16.mxu0 %v3405
    %3610 = vmatpush1.bf16.msra.mxu0 %v3404
    %3611 = vmatprep.subr.bf16.mxu0 %v3401
    %3612 = vmatpush1.bf16.msra.mxu0 %v3400
    %3613 = vmatprep.subr.bf16.mxu0 %v3397
    %3614 = vmatpush1.bf16.msra.mxu0 %v3396
    %3615 = vmatprep.subr.bf16.mxu0 %v3393
    %3616 = vmatpush1.bf16.msra.mxu0 %v3392
    %3617 = vmatprep.subr.bf16.mxu0 %v3389
    %3618 = vmatpush1.bf16.msra.mxu0 %v3388
    %3619 = vmatprep.subr.bf16.mxu0 %v3385
    %3620 = vmatpush1.bf16.msra.mxu0 %v3384
    %3621 = vmatprep.subr.bf16.mxu0 %v3381
    %3622 = vmatpush1.bf16.msra.mxu0 %v3380
    %3623 = vmatprep.subr.bf16.mxu0 %v3377
    %3624 = vmatpush1.bf16.msra.mxu0 %v3376
    %3625 = vmatprep.subr.bf16.mxu0 %v3437
    %3626 = vmatpush2.bf16.msra.mxu0 %v3436
    %3627 = vmatprep.subr.bf16.mxu0 %v3433
    %3628 = vmatpush2.bf16.msra.mxu0 %v3432
    %3629 = vmatprep.subr.bf16.mxu0 %v3429
    %3630 = vmatpush2.bf16.msra.mxu0 %v3428
    %3631 = vmatprep.subr.bf16.mxu0 %v3425
    %3632 = vmatpush2.bf16.msra.mxu0 %v3424
    %3633 = vmatprep.subr.bf16.mxu0 %v3421
    %3634 = vmatpush2.bf16.msra.mxu0 %v3420
    %3635 = vmatprep.subr.bf16.mxu0 %v3417
    %3636 = vmatpush2.bf16.msra.mxu0 %v3416
    %3637 = vmatprep.subr.bf16.mxu0 %v3413
    %3638 = vmatpush2.bf16.msra.mxu0 %v3412
    %3639 = vmatprep.subr.bf16.mxu0 %v3409
    %3640 = vmatpush2.bf16.msra.mxu0 %v3408
    %3641 = vmatprep.mubr.bf16.mxu0 %v2777
    %3642 = vmatmul.mubr.bf16.gmra.mxu0 %v2776
    %v3643 = vpop.f32.mrf.mxu0
    %v3644 = vadd.f32 %v3603, %v3643
    %v3645 = vpop.f32.mrf.mxu0
    %v3646 = vadd.f32 %v3605, %v3645
    %v3647 = vpop.f32.mrf.mxu0
    %v3648 = vpop.f32.mrf.mxu0
    %3649 = vdwg.mxu0
    %3650 = vmatprep.subr.bf16.mxu0 %v3343
    %3651 = vmatpush1.bf16.msra.mxu0 %v3342
    %3652 = vmatprep.subr.bf16.mxu0 %v3339
    %3653 = vmatpush1.bf16.msra.mxu0 %v3338
    %3654 = vmatprep.subr.bf16.mxu0 %v3335
    %3655 = vmatpush1.bf16.msra.mxu0 %v3334
    %3656 = vmatprep.subr.bf16.mxu0 %v3331
    %3657 = vmatpush1.bf16.msra.mxu0 %v3330
    %3658 = vmatprep.subr.bf16.mxu0 %v3327
    %3659 = vmatpush1.bf16.msra.mxu0 %v3326
    %3660 = vmatprep.subr.bf16.mxu0 %v3323
    %3661 = vmatpush1.bf16.msra.mxu0 %v3322
    %3662 = vmatprep.subr.bf16.mxu0 %v3319
    %3663 = vmatpush1.bf16.msra.mxu0 %v3318
    %3664 = vmatprep.subr.bf16.mxu0 %v3315
    %3665 = vmatpush1.bf16.msra.mxu0 %v3314
    %3666 = vmatprep.subr.bf16.mxu0 %v3375
    %3667 = vmatpush2.bf16.msra.mxu0 %v3374
    %3668 = vmatprep.subr.bf16.mxu0 %v3371
    %3669 = vmatpush2.bf16.msra.mxu0 %v3370
    %3670 = vmatprep.subr.bf16.mxu0 %v3367
    %3671 = vmatpush2.bf16.msra.mxu0 %v3366
    %3672 = vmatprep.subr.bf16.mxu0 %v3363
    %3673 = vmatpush2.bf16.msra.mxu0 %v3362
    %3674 = vmatprep.subr.bf16.mxu0 %v3359
    %3675 = vmatpush2.bf16.msra.mxu0 %v3358
    %3676 = vmatprep.subr.bf16.mxu0 %v3355
    %3677 = vmatpush2.bf16.msra.mxu0 %v3354
    %3678 = vmatprep.subr.bf16.mxu0 %v3351
    %3679 = vmatpush2.bf16.msra.mxu0 %v3350
    %3680 = vmatprep.subr.bf16.mxu0 %v3347
    %3681 = vmatpush2.bf16.msra.mxu0 %v3346
    %3682 = vmatprep.mubr.bf16.mxu0 %v2775
    %3683 = vmatmul.mubr.bf16.gmra.mxu0 %v2774
    %v3684 = vpop.f32.mrf.mxu0
    %v3685 = vadd.f32 %v2919, %v3684
    %v3686 = vpop.f32.mrf.mxu0
    %v3687 = vadd.f32 %v2923, %v3686
    %v3688 = vpop.f32.mrf.mxu0
    %v3689 = vpop.f32.mrf.mxu0
    %3690 = vdwg.mxu0
    %3691 = vmatprep.subr.bf16.mxu0 %v3407
    %3692 = vmatpush1.bf16.msra.mxu0 %v3406
    %3693 = vmatprep.subr.bf16.mxu0 %v3403
    %3694 = vmatpush1.bf16.msra.mxu0 %v3402
    %3695 = vmatprep.subr.bf16.mxu0 %v3399
    %3696 = vmatpush1.bf16.msra.mxu0 %v3398
    %3697 = vmatprep.subr.bf16.mxu0 %v3395
    %3698 = vmatpush1.bf16.msra.mxu0 %v3394
    %3699 = vmatprep.subr.bf16.mxu0 %v3391
    %3700 = vmatpush1.bf16.msra.mxu0 %v3390
    %3701 = vmatprep.subr.bf16.mxu0 %v3387
    %3702 = vmatpush1.bf16.msra.mxu0 %v3386
    %3703 = vmatprep.subr.bf16.mxu0 %v3383
    %3704 = vmatpush1.bf16.msra.mxu0 %v3382
    %3705 = vmatprep.subr.bf16.mxu0 %v3379
    %3706 = vmatpush1.bf16.msra.mxu0 %v3378
    %3707 = vmatprep.subr.bf16.mxu0 %v3439
    %3708 = vmatpush2.bf16.msra.mxu0 %v3438
    %3709 = vmatprep.subr.bf16.mxu0 %v3435
    %3710 = vmatpush2.bf16.msra.mxu0 %v3434
    %3711 = vmatprep.subr.bf16.mxu0 %v3431
    %3712 = vmatpush2.bf16.msra.mxu0 %v3430
    %3713 = vmatprep.subr.bf16.mxu0 %v3427
    %3714 = vmatpush2.bf16.msra.mxu0 %v3426
    %3715 = vmatprep.subr.bf16.mxu0 %v3423
    %3716 = vmatpush2.bf16.msra.mxu0 %v3422
    %3717 = vmatprep.subr.bf16.mxu0 %v3419
    %3718 = vmatpush2.bf16.msra.mxu0 %v3418
    %3719 = vmatprep.subr.bf16.mxu0 %v3415
    %3720 = vmatpush2.bf16.msra.mxu0 %v3414
    %3721 = vmatprep.subr.bf16.mxu0 %v3411
    %3722 = vmatpush2.bf16.msra.mxu0 %v3410
    %3723 = vmatprep.mubr.bf16.mxu0 %v2777
    %3724 = vmatmul.mubr.bf16.gmra.mxu0 %v2776
    %v3725 = vpop.f32.mrf.mxu0
    %v3726 = vadd.f32 %v3685, %v3725
    %v3727 = vpop.f32.mrf.mxu0
    %v3728 = vadd.f32 %v3687, %v3727
    %v3729 = vpop.f32.mrf.mxu0
    %v3730 = vpop.f32.mrf.mxu0
    %3731 = vdwg.mxu0
    %v3732 = vmin.f32 %v3644, 20.0
    %v3733 = vmin.f32 %v3646, 20.0
    %v3734 = vmin.f32 %v3726, 20.0
    %v3735 = vmin.f32 %v3728, 20.0
    %v3736 = vmul.f32 %v3732, 1.442695
    %v3737 = vpow.pop %v3736
    %v3738 = vmul.f32 %v3733, 1.442695
    %v3739 = vpow.pop %v3738
    %v3740 = vmul.f32 %v3734, 1.442695
    %v3741 = vpow.pop %v3740
    %v3742 = vmul.f32 %v3735, 1.442695
    %v3743 = vpow.pop %v3742
    %v3744 = vadd.f32 %v3737, 1.0
    %v3745 = vadd.f32 %v3739, 1.0
    %v3746 = vadd.f32 %v3741, 1.0
    %v3747 = vadd.f32 %v3743, 1.0
    %v3748 = vmul.f32 %v3744, %v3744
    %v3749 = vmul.f32 %v3745, %v3745
    %v3750 = vmul.f32 %v3746, %v3746
    %v3751 = vmul.f32 %v3747, %v3747
    %v3752 = vsub.f32 %v3748, 1.0
    %v3753 = vsub.f32 %v3749, 1.0
    %v3754 = vsub.f32 %v3750, 1.0
    %v3755 = vsub.f32 %v3751, 1.0
    %v3756 = vadd.f32 %v3748, 1.0
    %v3757 = vadd.f32 %v3749, 1.0
    %v3758 = vadd.f32 %v3750, 1.0
    %v3759 = vadd.f32 %v3751, 1.0
    %v3760 = vrcp.pop %v3756
    %v3761 = vrcp.pop %v3757
    %v3762 = vrcp.pop %v3758
    %v3763 = vrcp.pop %v3759
    %v3764 = vmul.f32 %v3752, %v3760
    %v3765 = vmul.f32 %v3753, %v3761
    %v3766 = vmul.f32 %v3754, %v3762
    %v3767 = vmul.f32 %v3755, %v3763
    %v3768 = vmul.f32 %v3644, %v3764
    %v3769 = vmul.f32 %v3646, %v3765
    %v3770 = vmul.f32 %v3726, %v3766
    %v3771 = vmul.f32 %v3728, %v3767
    %v3772 = vpack.c.bf16 %v3768, %v3768
    %v3773 = vpack.c.bf16 %v3769, %v3769
    %v3774 = vpack.c.bf16 %v3770, %v3770
    %v3775 = vpack.c.bf16 %v3771, %v3771
    %v3776 = vld [vmem:[#allocation14] sm:$0xff]
    %v3777 = vld [vmem:[#allocation14 + $0x8] sm:$0xff]
    %v3778 = vld [vmem:[#allocation14 + $0x10] sm:$0xff]
    %v3779 = vld [vmem:[#allocation14 + $0x18] sm:$0xff]
    %v3780 = vld [vmem:[#allocation14 + $0x20] sm:$0xff]
    %v3781 = vld [vmem:[#allocation14 + $0x28] sm:$0xff]
    %v3782 = vld [vmem:[#allocation14 + $0x30] sm:$0xff]
    %v3783 = vld [vmem:[#allocation14 + $0x38] sm:$0xff]
    %v3784 = vld [vmem:[#allocation14 + $0x40] sm:$0xff]
    %v3785 = vld [vmem:[#allocation14 + $0x48] sm:$0xff]
    %v3786 = vld [vmem:[#allocation14 + $0x50] sm:$0xff]
    %v3787 = vld [vmem:[#allocation14 + $0x58] sm:$0xff]
    %v3788 = vld [vmem:[#allocation14 + $0x60] sm:$0xff]
    %v3789 = vld [vmem:[#allocation14 + $0x68] sm:$0xff]
    %v3790 = vld [vmem:[#allocation14 + $0x70] sm:$0xff]
    %v3791 = vld [vmem:[#allocation14 + $0x78] sm:$0xff]
    %v3792 = vld [vmem:[#allocation14 + $0x80] sm:$0xff]
    %v3793 = vld [vmem:[#allocation14 + $0x88] sm:$0xff]
    %v3794 = vld [vmem:[#allocation14 + $0x90] sm:$0xff]
    %v3795 = vld [vmem:[#allocation14 + $0x98] sm:$0xff]
    %v3796 = vld [vmem:[#allocation14 + $0xa0] sm:$0xff]
    %v3797 = vld [vmem:[#allocation14 + $0xa8] sm:$0xff]
    %v3798 = vld [vmem:[#allocation14 + $0xb0] sm:$0xff]
    %v3799 = vld [vmem:[#allocation14 + $0xb8] sm:$0xff]
    %v3800 = vld [vmem:[#allocation14 + $0xc0] sm:$0xff]
    %v3801 = vld [vmem:[#allocation14 + $0xc8] sm:$0xff]
    %v3802 = vld [vmem:[#allocation14 + $0xd0] sm:$0xff]
    %v3803 = vld [vmem:[#allocation14 + $0xd8] sm:$0xff]
    %v3804 = vld [vmem:[#allocation14 + $0xe0] sm:$0xff]
    %v3805 = vld [vmem:[#allocation14 + $0xe8] sm:$0xff]
    %v3806 = vld [vmem:[#allocation14 + $0xf0] sm:$0xff]
    %v3807 = vld [vmem:[#allocation14 + $0xf8] sm:$0xff]
    %v3808 = vld [vmem:[#allocation14 + $0x100] sm:$0xff]
    %v3809 = vld [vmem:[#allocation14 + $0x108] sm:$0xff]
    %v3810 = vld [vmem:[#allocation14 + $0x110] sm:$0xff]
    %v3811 = vld [vmem:[#allocation14 + $0x118] sm:$0xff]
    %v3812 = vld [vmem:[#allocation14 + $0x120] sm:$0xff]
    %v3813 = vld [vmem:[#allocation14 + $0x128] sm:$0xff]
    %v3814 = vld [vmem:[#allocation14 + $0x130] sm:$0xff]
    %v3815 = vld [vmem:[#allocation14 + $0x138] sm:$0xff]
    %v3816 = vld [vmem:[#allocation14 + $0x140] sm:$0xff]
    %v3817 = vld [vmem:[#allocation14 + $0x148] sm:$0xff]
    %v3818 = vld [vmem:[#allocation14 + $0x150] sm:$0xff]
    %v3819 = vld [vmem:[#allocation14 + $0x158] sm:$0xff]
    %v3820 = vld [vmem:[#allocation14 + $0x160] sm:$0xff]
    %v3821 = vld [vmem:[#allocation14 + $0x168] sm:$0xff]
    %v3822 = vld [vmem:[#allocation14 + $0x170] sm:$0xff]
    %v3823 = vld [vmem:[#allocation14 + $0x178] sm:$0xff]
    %v3824 = vld [vmem:[#allocation14 + $0x180] sm:$0xff]
    %v3825 = vld [vmem:[#allocation14 + $0x188] sm:$0xff]
    %v3826 = vld [vmem:[#allocation14 + $0x190] sm:$0xff]
    %v3827 = vld [vmem:[#allocation14 + $0x198] sm:$0xff]
    %v3828 = vld [vmem:[#allocation14 + $0x1a0] sm:$0xff]
    %v3829 = vld [vmem:[#allocation14 + $0x1a8] sm:$0xff]
    %v3830 = vld [vmem:[#allocation14 + $0x1b0] sm:$0xff]
    %v3831 = vld [vmem:[#allocation14 + $0x1b8] sm:$0xff]
    %v3832 = vld [vmem:[#allocation14 + $0x1c0] sm:$0xff]
    %v3833 = vld [vmem:[#allocation14 + $0x1c8] sm:$0xff]
    %v3834 = vld [vmem:[#allocation14 + $0x1d0] sm:$0xff]
    %v3835 = vld [vmem:[#allocation14 + $0x1d8] sm:$0xff]
    %v3836 = vld [vmem:[#allocation14 + $0x1e0] sm:$0xff]
    %v3837 = vld [vmem:[#allocation14 + $0x1e8] sm:$0xff]
    %v3838 = vld [vmem:[#allocation14 + $0x1f0] sm:$0xff]
    %v3839 = vld [vmem:[#allocation14 + $0x1f8] sm:$0xff]
    %v3840 = vld [vmem:[#allocation14 + $0x200] sm:$0xff]
    %v3841 = vld [vmem:[#allocation14 + $0x208] sm:$0xff]
    %v3842 = vld [vmem:[#allocation14 + $0x210] sm:$0xff]
    %v3843 = vld [vmem:[#allocation14 + $0x218] sm:$0xff]
    %v3844 = vld [vmem:[#allocation14 + $0x220] sm:$0xff]
    %v3845 = vld [vmem:[#allocation14 + $0x228] sm:$0xff]
    %v3846 = vld [vmem:[#allocation14 + $0x230] sm:$0xff]
    %v3847 = vld [vmem:[#allocation14 + $0x238] sm:$0xff]
    %v3848 = vld [vmem:[#allocation14 + $0x240] sm:$0xff]
    %v3849 = vld [vmem:[#allocation14 + $0x248] sm:$0xff]
    %v3850 = vld [vmem:[#allocation14 + $0x250] sm:$0xff]
    %v3851 = vld [vmem:[#allocation14 + $0x258] sm:$0xff]
    %v3852 = vld [vmem:[#allocation14 + $0x260] sm:$0xff]
    %v3853 = vld [vmem:[#allocation14 + $0x268] sm:$0xff]
    %v3854 = vld [vmem:[#allocation14 + $0x270] sm:$0xff]
    %v3855 = vld [vmem:[#allocation14 + $0x278] sm:$0xff]
    %v3856 = vld [vmem:[#allocation14 + $0x280] sm:$0xff]
    %v3857 = vld [vmem:[#allocation14 + $0x288] sm:$0xff]
    %v3858 = vld [vmem:[#allocation14 + $0x290] sm:$0xff]
    %v3859 = vld [vmem:[#allocation14 + $0x298] sm:$0xff]
    %v3860 = vld [vmem:[#allocation14 + $0x2a0] sm:$0xff]
    %v3861 = vld [vmem:[#allocation14 + $0x2a8] sm:$0xff]
    %v3862 = vld [vmem:[#allocation14 + $0x2b0] sm:$0xff]
    %v3863 = vld [vmem:[#allocation14 + $0x2b8] sm:$0xff]
    %v3864 = vld [vmem:[#allocation14 + $0x2c0] sm:$0xff]
    %v3865 = vld [vmem:[#allocation14 + $0x2c8] sm:$0xff]
    %v3866 = vld [vmem:[#allocation14 + $0x2d0] sm:$0xff]
    %v3867 = vld [vmem:[#allocation14 + $0x2d8] sm:$0xff]
    %v3868 = vld [vmem:[#allocation14 + $0x2e0] sm:$0xff]
    %v3869 = vld [vmem:[#allocation14 + $0x2e8] sm:$0xff]
    %v3870 = vld [vmem:[#allocation14 + $0x2f0] sm:$0xff]
    %v3871 = vld [vmem:[#allocation14 + $0x2f8] sm:$0xff]
    %v3872 = vld [vmem:[#allocation14 + $0x300] sm:$0xff]
    %v3873 = vld [vmem:[#allocation14 + $0x308] sm:$0xff]
    %v3874 = vld [vmem:[#allocation14 + $0x310] sm:$0xff]
    %v3875 = vld [vmem:[#allocation14 + $0x318] sm:$0xff]
    %v3876 = vld [vmem:[#allocation14 + $0x320] sm:$0xff]
    %v3877 = vld [vmem:[#allocation14 + $0x328] sm:$0xff]
    %v3878 = vld [vmem:[#allocation14 + $0x330] sm:$0xff]
    %v3879 = vld [vmem:[#allocation14 + $0x338] sm:$0xff]
    %v3880 = vld [vmem:[#allocation14 + $0x340] sm:$0xff]
    %v3881 = vld [vmem:[#allocation14 + $0x348] sm:$0xff]
    %v3882 = vld [vmem:[#allocation14 + $0x350] sm:$0xff]
    %v3883 = vld [vmem:[#allocation14 + $0x358] sm:$0xff]
    %v3884 = vld [vmem:[#allocation14 + $0x360] sm:$0xff]
    %v3885 = vld [vmem:[#allocation14 + $0x368] sm:$0xff]
    %v3886 = vld [vmem:[#allocation14 + $0x370] sm:$0xff]
    %v3887 = vld [vmem:[#allocation14 + $0x378] sm:$0xff]
    %v3888 = vld [vmem:[#allocation14 + $0x380] sm:$0xff]
    %v3889 = vld [vmem:[#allocation14 + $0x388] sm:$0xff]
    %v3890 = vld [vmem:[#allocation14 + $0x390] sm:$0xff]
    %v3891 = vld [vmem:[#allocation14 + $0x398] sm:$0xff]
    %v3892 = vld [vmem:[#allocation14 + $0x3a0] sm:$0xff]
    %v3893 = vld [vmem:[#allocation14 + $0x3a8] sm:$0xff]
    %v3894 = vld [vmem:[#allocation14 + $0x3b0] sm:$0xff]
    %v3895 = vld [vmem:[#allocation14 + $0x3b8] sm:$0xff]
    %v3896 = vld [vmem:[#allocation14 + $0x3c0] sm:$0xff]
    %v3897 = vld [vmem:[#allocation14 + $0x3c8] sm:$0xff]
    %v3898 = vld [vmem:[#allocation14 + $0x3d0] sm:$0xff]
    %v3899 = vld [vmem:[#allocation14 + $0x3d8] sm:$0xff]
    %v3900 = vld [vmem:[#allocation14 + $0x3e0] sm:$0xff]
    %v3901 = vld [vmem:[#allocation14 + $0x3e8] sm:$0xff]
    %v3902 = vld [vmem:[#allocation14 + $0x3f0] sm:$0xff]
    %v3903 = vld [vmem:[#allocation14 + $0x3f8] sm:$0xff]
    %v3904 = vld [vmem:[%s14] sm:$0xf]
    %v3906 = vlaneseq
    %v3907 = vshrl.u32 %v3906, 7
    %v3908 = vsub.s32 0, %v3907
    %v3909 = vrot.slane %v3904, %v3908
    %v3910 = vlaneseq
    %v3911 = vshrl.u32 %v3910, 7
    %v3912 = vsub.s32 1, %v3911
    %v3913 = vrot.slane %v3904, %v3912
    %v3914 = vlaneseq
    %v3915 = vshrl.u32 %v3914, 7
    %v3916 = vsub.s32 2, %v3915
    %v3917 = vrot.slane %v3904, %v3916
    %v3918 = vlaneseq
    %v3919 = vshrl.u32 %v3918, 7
    %v3920 = vsub.s32 3, %v3919
    %v3921 = vrot.slane %v3904, %v3920
    %v4054 = vunpack.c.l.b16 %v3776
    %v4055 = vunpack.c.h.b16 %v3776
    %v4056 = vunpack.c.l.b16 %v3777
    %v4057 = vunpack.c.h.b16 %v3777
    %v4058 = vunpack.c.l.b16 %v3778
    %v4059 = vunpack.c.h.b16 %v3778
    %v4060 = vunpack.c.l.b16 %v3779
    %v4061 = vunpack.c.h.b16 %v3779
    %v4062 = vunpack.c.l.b16 %v3780
    %v4063 = vunpack.c.h.b16 %v3780
    %v4064 = vunpack.c.l.b16 %v3781
    %v4065 = vunpack.c.h.b16 %v3781
    %v4066 = vunpack.c.l.b16 %v3782
    %v4067 = vunpack.c.h.b16 %v3782
    %v4068 = vunpack.c.l.b16 %v3783
    %v4069 = vunpack.c.h.b16 %v3783
    %v4070 = vunpack.c.l.b16 %v3784
    %v4071 = vunpack.c.h.b16 %v3784
    %v4072 = vunpack.c.l.b16 %v3785
    %v4073 = vunpack.c.h.b16 %v3785
    %v4074 = vunpack.c.l.b16 %v3786
    %v4075 = vunpack.c.h.b16 %v3786
    %v4076 = vunpack.c.l.b16 %v3787
    %v4077 = vunpack.c.h.b16 %v3787
    %v4078 = vunpack.c.l.b16 %v3788
    %v4079 = vunpack.c.h.b16 %v3788
    %v4080 = vunpack.c.l.b16 %v3789
    %v4081 = vunpack.c.h.b16 %v3789
    %v4082 = vunpack.c.l.b16 %v3790
    %v4083 = vunpack.c.h.b16 %v3790
    %v4084 = vunpack.c.l.b16 %v3791
    %v4085 = vunpack.c.h.b16 %v3791
    %v4086 = vunpack.c.l.b16 %v3792
    %v4087 = vunpack.c.h.b16 %v3792
    %v4088 = vunpack.c.l.b16 %v3793
    %v4089 = vunpack.c.h.b16 %v3793
    %v4090 = vunpack.c.l.b16 %v3794
    %v4091 = vunpack.c.h.b16 %v3794
    %v4092 = vunpack.c.l.b16 %v3795
    %v4093 = vunpack.c.h.b16 %v3795
    %v4094 = vunpack.c.l.b16 %v3796
    %v4095 = vunpack.c.h.b16 %v3796
    %v4096 = vunpack.c.l.b16 %v3797
    %v4097 = vunpack.c.h.b16 %v3797
    %v4098 = vunpack.c.l.b16 %v3798
    %v4099 = vunpack.c.h.b16 %v3798
    %v4100 = vunpack.c.l.b16 %v3799
    %v4101 = vunpack.c.h.b16 %v3799
    %v4102 = vunpack.c.l.b16 %v3800
    %v4103 = vunpack.c.h.b16 %v3800
    %v4104 = vunpack.c.l.b16 %v3801
    %v4105 = vunpack.c.h.b16 %v3801
    %v4106 = vunpack.c.l.b16 %v3802
    %v4107 = vunpack.c.h.b16 %v3802
    %v4108 = vunpack.c.l.b16 %v3803
    %v4109 = vunpack.c.h.b16 %v3803
    %v4110 = vunpack.c.l.b16 %v3804
    %v4111 = vunpack.c.h.b16 %v3804
    %v4112 = vunpack.c.l.b16 %v3805
    %v4113 = vunpack.c.h.b16 %v3805
    %v4114 = vunpack.c.l.b16 %v3806
    %v4115 = vunpack.c.h.b16 %v3806
    %v4116 = vunpack.c.l.b16 %v3807
    %v4117 = vunpack.c.h.b16 %v3807
    %v4118 = vunpack.c.l.b16 %v3808
    %v4119 = vunpack.c.h.b16 %v3808
    %v4120 = vunpack.c.l.b16 %v3809
    %v4121 = vunpack.c.h.b16 %v3809
    %v4122 = vunpack.c.l.b16 %v3810
    %v4123 = vunpack.c.h.b16 %v3810
    %v4124 = vunpack.c.l.b16 %v3811
    %v4125 = vunpack.c.h.b16 %v3811
    %v4126 = vunpack.c.l.b16 %v3812
    %v4127 = vunpack.c.h.b16 %v3812
    %v4128 = vunpack.c.l.b16 %v3813
    %v4129 = vunpack.c.h.b16 %v3813
    %v4130 = vunpack.c.l.b16 %v3814
    %v4131 = vunpack.c.h.b16 %v3814
    %v4132 = vunpack.c.l.b16 %v3815
    %v4133 = vunpack.c.h.b16 %v3815
    %v4134 = vunpack.c.l.b16 %v3816
    %v4135 = vunpack.c.h.b16 %v3816
    %v4136 = vunpack.c.l.b16 %v3817
    %v4137 = vunpack.c.h.b16 %v3817
    %v4138 = vunpack.c.l.b16 %v3818
    %v4139 = vunpack.c.h.b16 %v3818
    %v4140 = vunpack.c.l.b16 %v3819
    %v4141 = vunpack.c.h.b16 %v3819
    %v4142 = vunpack.c.l.b16 %v3820
    %v4143 = vunpack.c.h.b16 %v3820
    %v4144 = vunpack.c.l.b16 %v3821
    %v4145 = vunpack.c.h.b16 %v3821
    %v4146 = vunpack.c.l.b16 %v3822
    %v4147 = vunpack.c.h.b16 %v3822
    %v4148 = vunpack.c.l.b16 %v3823
    %v4149 = vunpack.c.h.b16 %v3823
    %v4150 = vunpack.c.l.b16 %v3824
    %v4151 = vunpack.c.h.b16 %v3824
    %v4152 = vunpack.c.l.b16 %v3825
    %v4153 = vunpack.c.h.b16 %v3825
    %v4154 = vunpack.c.l.b16 %v3826
    %v4155 = vunpack.c.h.b16 %v3826
    %v4156 = vunpack.c.l.b16 %v3827
    %v4157 = vunpack.c.h.b16 %v3827
    %v4158 = vunpack.c.l.b16 %v3828
    %v4159 = vunpack.c.h.b16 %v3828
    %v4160 = vunpack.c.l.b16 %v3829
    %v4161 = vunpack.c.h.b16 %v3829
    %v4162 = vunpack.c.l.b16 %v3830
    %v4163 = vunpack.c.h.b16 %v3830
    %v4164 = vunpack.c.l.b16 %v3831
    %v4165 = vunpack.c.h.b16 %v3831
    %v4166 = vunpack.c.l.b16 %v3832
    %v4167 = vunpack.c.h.b16 %v3832
    %v4168 = vunpack.c.l.b16 %v3833
    %v4169 = vunpack.c.h.b16 %v3833
    %v4170 = vunpack.c.l.b16 %v3834
    %v4171 = vunpack.c.h.b16 %v3834
    %v4172 = vunpack.c.l.b16 %v3835
    %v4173 = vunpack.c.h.b16 %v3835
    %v4174 = vunpack.c.l.b16 %v3836
    %v4175 = vunpack.c.h.b16 %v3836
    %v4176 = vunpack.c.l.b16 %v3837
    %v4177 = vunpack.c.h.b16 %v3837
    %v4178 = vunpack.c.l.b16 %v3838
    %v4179 = vunpack.c.h.b16 %v3838
    %v4180 = vunpack.c.l.b16 %v3839
    %v4181 = vunpack.c.h.b16 %v3839
    %v4182 = vunpack.c.l.b16 %v3840
    %v4183 = vunpack.c.h.b16 %v3840
    %v4184 = vunpack.c.l.b16 %v3841
    %v4185 = vunpack.c.h.b16 %v3841
    %v4186 = vunpack.c.l.b16 %v3842
    %v4187 = vunpack.c.h.b16 %v3842
    %v4188 = vunpack.c.l.b16 %v3843
    %v4189 = vunpack.c.h.b16 %v3843
    %v4190 = vunpack.c.l.b16 %v3844
    %v4191 = vunpack.c.h.b16 %v3844
    %v4192 = vunpack.c.l.b16 %v3845
    %v4193 = vunpack.c.h.b16 %v3845
    %v4194 = vunpack.c.l.b16 %v3846
    %v4195 = vunpack.c.h.b16 %v3846
    %v4196 = vunpack.c.l.b16 %v3847
    %v4197 = vunpack.c.h.b16 %v3847
    %v4198 = vunpack.c.l.b16 %v3848
    %v4199 = vunpack.c.h.b16 %v3848
    %v4200 = vunpack.c.l.b16 %v3849
    %v4201 = vunpack.c.h.b16 %v3849
    %v4202 = vunpack.c.l.b16 %v3850
    %v4203 = vunpack.c.h.b16 %v3850
    %v4204 = vunpack.c.l.b16 %v3851
    %v4205 = vunpack.c.h.b16 %v3851
    %v4206 = vunpack.c.l.b16 %v3852
    %v4207 = vunpack.c.h.b16 %v3852
    %v4208 = vunpack.c.l.b16 %v3853
    %v4209 = vunpack.c.h.b16 %v3853
    %v4210 = vunpack.c.l.b16 %v3854
    %v4211 = vunpack.c.h.b16 %v3854
    %v4212 = vunpack.c.l.b16 %v3855
    %v4213 = vunpack.c.h.b16 %v3855
    %v4214 = vunpack.c.l.b16 %v3856
    %v4215 = vunpack.c.h.b16 %v3856
    %v4216 = vunpack.c.l.b16 %v3857
    %v4217 = vunpack.c.h.b16 %v3857
    %v4218 = vunpack.c.l.b16 %v3858
    %v4219 = vunpack.c.h.b16 %v3858
    %v4220 = vunpack.c.l.b16 %v3859
    %v4221 = vunpack.c.h.b16 %v3859
    %v4222 = vunpack.c.l.b16 %v3860
    %v4223 = vunpack.c.h.b16 %v3860
    %v4224 = vunpack.c.l.b16 %v3861
    %v4225 = vunpack.c.h.b16 %v3861
    %v4226 = vunpack.c.l.b16 %v3862
    %v4227 = vunpack.c.h.b16 %v3862
    %v4228 = vunpack.c.l.b16 %v3863
    %v4229 = vunpack.c.h.b16 %v3863
    %v4230 = vunpack.c.l.b16 %v3864
    %v4231 = vunpack.c.h.b16 %v3864
    %v4232 = vunpack.c.l.b16 %v3865
    %v4233 = vunpack.c.h.b16 %v3865
    %v4234 = vunpack.c.l.b16 %v3866
    %v4235 = vunpack.c.h.b16 %v3866
    %v4236 = vunpack.c.l.b16 %v3867
    %v4237 = vunpack.c.h.b16 %v3867
    %v4238 = vunpack.c.l.b16 %v3868
    %v4239 = vunpack.c.h.b16 %v3868
    %v4240 = vunpack.c.l.b16 %v3869
    %v4241 = vunpack.c.h.b16 %v3869
    %v4242 = vunpack.c.l.b16 %v3870
    %v4243 = vunpack.c.h.b16 %v3870
    %v4244 = vunpack.c.l.b16 %v3871
    %v4245 = vunpack.c.h.b16 %v3871
    %v4246 = vunpack.c.l.b16 %v3872
    %v4247 = vunpack.c.h.b16 %v3872
    %v4248 = vunpack.c.l.b16 %v3873
    %v4249 = vunpack.c.h.b16 %v3873
    %v4250 = vunpack.c.l.b16 %v3874
    %v4251 = vunpack.c.h.b16 %v3874
    %v4252 = vunpack.c.l.b16 %v3875
    %v4253 = vunpack.c.h.b16 %v3875
    %v4254 = vunpack.c.l.b16 %v3876
    %v4255 = vunpack.c.h.b16 %v3876
    %v4256 = vunpack.c.l.b16 %v3877
    %v4257 = vunpack.c.h.b16 %v3877
    %v4258 = vunpack.c.l.b16 %v3878
    %v4259 = vunpack.c.h.b16 %v3878
    %v4260 = vunpack.c.l.b16 %v3879
    %v4261 = vunpack.c.h.b16 %v3879
    %v4262 = vunpack.c.l.b16 %v3880
    %v4263 = vunpack.c.h.b16 %v3880
    %v4264 = vunpack.c.l.b16 %v3881
    %v4265 = vunpack.c.h.b16 %v3881
    %v4266 = vunpack.c.l.b16 %v3882
    %v4267 = vunpack.c.h.b16 %v3882
    %v4268 = vunpack.c.l.b16 %v3883
    %v4269 = vunpack.c.h.b16 %v3883
    %v4270 = vunpack.c.l.b16 %v3884
    %v4271 = vunpack.c.h.b16 %v3884
    %v4272 = vunpack.c.l.b16 %v3885
    %v4273 = vunpack.c.h.b16 %v3885
    %v4274 = vunpack.c.l.b16 %v3886
    %v4275 = vunpack.c.h.b16 %v3886
    %v4276 = vunpack.c.l.b16 %v3887
    %v4277 = vunpack.c.h.b16 %v3887
    %v4278 = vunpack.c.l.b16 %v3888
    %v4279 = vunpack.c.h.b16 %v3888
    %v4280 = vunpack.c.l.b16 %v3889
    %v4281 = vunpack.c.h.b16 %v3889
    %v4282 = vunpack.c.l.b16 %v3890
    %v4283 = vunpack.c.h.b16 %v3890
    %v4284 = vunpack.c.l.b16 %v3891
    %v4285 = vunpack.c.h.b16 %v3891
    %v4286 = vunpack.c.l.b16 %v3892
    %v4287 = vunpack.c.h.b16 %v3892
    %v4288 = vunpack.c.l.b16 %v3893
    %v4289 = vunpack.c.h.b16 %v3893
    %v4290 = vunpack.c.l.b16 %v3894
    %v4291 = vunpack.c.h.b16 %v3894
    %v4292 = vunpack.c.l.b16 %v3895
    %v4293 = vunpack.c.h.b16 %v3895
    %v4294 = vunpack.c.l.b16 %v3896
    %v4295 = vunpack.c.h.b16 %v3896
    %v4296 = vunpack.c.l.b16 %v3897
    %v4297 = vunpack.c.h.b16 %v3897
    %v4298 = vunpack.c.l.b16 %v3898
    %v4299 = vunpack.c.h.b16 %v3898
    %v4300 = vunpack.c.l.b16 %v3899
    %v4301 = vunpack.c.h.b16 %v3899
    %v4302 = vunpack.c.l.b16 %v3900
    %v4303 = vunpack.c.h.b16 %v3900
    %v4304 = vunpack.c.l.b16 %v3901
    %v4305 = vunpack.c.h.b16 %v3901
    %v4306 = vunpack.c.l.b16 %v3902
    %v4307 = vunpack.c.h.b16 %v3902
    %v4308 = vunpack.c.l.b16 %v3903
    %v4309 = vunpack.c.h.b16 %v3903
    %v4310 = vpack.c.b16 %v4058, %v4054
    %v4311 = vpack.c.b16 %v4059, %v4055
    %v4312 = vpack.c.b16 %v4060, %v4056
    %v4313 = vpack.c.b16 %v4061, %v4057
    %v4314 = vpack.c.b16 %v4066, %v4062
    %v4315 = vpack.c.b16 %v4067, %v4063
    %v4316 = vpack.c.b16 %v4068, %v4064
    %v4317 = vpack.c.b16 %v4069, %v4065
    %v4318 = vpack.c.b16 %v4074, %v4070
    %v4319 = vpack.c.b16 %v4075, %v4071
    %v4320 = vpack.c.b16 %v4076, %v4072
    %v4321 = vpack.c.b16 %v4077, %v4073
    %v4322 = vpack.c.b16 %v4082, %v4078
    %v4323 = vpack.c.b16 %v4083, %v4079
    %v4324 = vpack.c.b16 %v4084, %v4080
    %v4325 = vpack.c.b16 %v4085, %v4081
    %v4326 = vpack.c.b16 %v4090, %v4086
    %v4327 = vpack.c.b16 %v4091, %v4087
    %v4328 = vpack.c.b16 %v4092, %v4088
    %v4329 = vpack.c.b16 %v4093, %v4089
    %v4330 = vpack.c.b16 %v4098, %v4094
    %v4331 = vpack.c.b16 %v4099, %v4095
    %v4332 = vpack.c.b16 %v4100, %v4096
    %v4333 = vpack.c.b16 %v4101, %v4097
    %v4334 = vpack.c.b16 %v4106, %v4102
    %v4335 = vpack.c.b16 %v4107, %v4103
    %v4336 = vpack.c.b16 %v4108, %v4104
    %v4337 = vpack.c.b16 %v4109, %v4105
    %v4338 = vpack.c.b16 %v4114, %v4110
    %v4339 = vpack.c.b16 %v4115, %v4111
    %v4340 = vpack.c.b16 %v4116, %v4112
    %v4341 = vpack.c.b16 %v4117, %v4113
    %v4342 = vpack.c.b16 %v4122, %v4118
    %v4343 = vpack.c.b16 %v4123, %v4119
    %v4344 = vpack.c.b16 %v4124, %v4120
    %v4345 = vpack.c.b16 %v4125, %v4121
    %v4346 = vpack.c.b16 %v4130, %v4126
    %v4347 = vpack.c.b16 %v4131, %v4127
    %v4348 = vpack.c.b16 %v4132, %v4128
    %v4349 = vpack.c.b16 %v4133, %v4129
    %v4350 = vpack.c.b16 %v4138, %v4134
    %v4351 = vpack.c.b16 %v4139, %v4135
    %v4352 = vpack.c.b16 %v4140, %v4136
    %v4353 = vpack.c.b16 %v4141, %v4137
    %v4354 = vpack.c.b16 %v4146, %v4142
    %v4355 = vpack.c.b16 %v4147, %v4143
    %v4356 = vpack.c.b16 %v4148, %v4144
    %v4357 = vpack.c.b16 %v4149, %v4145
    %v4358 = vpack.c.b16 %v4154, %v4150
    %v4359 = vpack.c.b16 %v4155, %v4151
    %v4360 = vpack.c.b16 %v4156, %v4152
    %v4361 = vpack.c.b16 %v4157, %v4153
    %v4362 = vpack.c.b16 %v4162, %v4158
    %v4363 = vpack.c.b16 %v4163, %v4159
    %v4364 = vpack.c.b16 %v4164, %v4160
    %v4365 = vpack.c.b16 %v4165, %v4161
    %v4366 = vpack.c.b16 %v4170, %v4166
    %v4367 = vpack.c.b16 %v4171, %v4167
    %v4368 = vpack.c.b16 %v4172, %v4168
    %v4369 = vpack.c.b16 %v4173, %v4169
    %v4370 = vpack.c.b16 %v4178, %v4174
    %v4371 = vpack.c.b16 %v4179, %v4175
    %v4372 = vpack.c.b16 %v4180, %v4176
    %v4373 = vpack.c.b16 %v4181, %v4177
    %v4374 = vpack.c.b16 %v4186, %v4182
    %v4375 = vpack.c.b16 %v4187, %v4183
    %v4376 = vpack.c.b16 %v4188, %v4184
    %v4377 = vpack.c.b16 %v4189, %v4185
    %v4378 = vpack.c.b16 %v4194, %v4190
    %v4379 = vpack.c.b16 %v4195, %v4191
    %v4380 = vpack.c.b16 %v4196, %v4192
    %v4381 = vpack.c.b16 %v4197, %v4193
    %v4382 = vpack.c.b16 %v4202, %v4198
    %v4383 = vpack.c.b16 %v4203, %v4199
    %v4384 = vpack.c.b16 %v4204, %v4200
    %v4385 = vpack.c.b16 %v4205, %v4201
    %v4386 = vpack.c.b16 %v4210, %v4206
    %v4387 = vpack.c.b16 %v4211, %v4207
    %v4388 = vpack.c.b16 %v4212, %v4208
    %v4389 = vpack.c.b16 %v4213, %v4209
    %v4390 = vpack.c.b16 %v4218, %v4214
    %v4391 = vpack.c.b16 %v4219, %v4215
    %v4392 = vpack.c.b16 %v4220, %v4216
    %v4393 = vpack.c.b16 %v4221, %v4217
    %v4394 = vpack.c.b16 %v4226, %v4222
    %v4395 = vpack.c.b16 %v4227, %v4223
    %v4396 = vpack.c.b16 %v4228, %v4224
    %v4397 = vpack.c.b16 %v4229, %v4225
    %v4398 = vpack.c.b16 %v4234, %v4230
    %v4399 = vpack.c.b16 %v4235, %v4231
    %v4400 = vpack.c.b16 %v4236, %v4232
    %v4401 = vpack.c.b16 %v4237, %v4233
    %v4402 = vpack.c.b16 %v4242, %v4238
    %v4403 = vpack.c.b16 %v4243, %v4239
    %v4404 = vpack.c.b16 %v4244, %v4240
    %v4405 = vpack.c.b16 %v4245, %v4241
    %v4406 = vpack.c.b16 %v4250, %v4246
    %v4407 = vpack.c.b16 %v4251, %v4247
    %v4408 = vpack.c.b16 %v4252, %v4248
    %v4409 = vpack.c.b16 %v4253, %v4249
    %v4410 = vpack.c.b16 %v4258, %v4254
    %v4411 = vpack.c.b16 %v4259, %v4255
    %v4412 = vpack.c.b16 %v4260, %v4256
    %v4413 = vpack.c.b16 %v4261, %v4257
    %v4414 = vpack.c.b16 %v4266, %v4262
    %v4415 = vpack.c.b16 %v4267, %v4263
    %v4416 = vpack.c.b16 %v4268, %v4264
    %v4417 = vpack.c.b16 %v4269, %v4265
    %v4418 = vpack.c.b16 %v4274, %v4270
    %v4419 = vpack.c.b16 %v4275, %v4271
    %v4420 = vpack.c.b16 %v4276, %v4272
    %v4421 = vpack.c.b16 %v4277, %v4273
    %v4422 = vpack.c.b16 %v4282, %v4278
    %v4423 = vpack.c.b16 %v4283, %v4279
    %v4424 = vpack.c.b16 %v4284, %v4280
    %v4425 = vpack.c.b16 %v4285, %v4281
    %v4426 = vpack.c.b16 %v4290, %v4286
    %v4427 = vpack.c.b16 %v4291, %v4287
    %v4428 = vpack.c.b16 %v4292, %v4288
    %v4429 = vpack.c.b16 %v4293, %v4289
    %v4430 = vpack.c.b16 %v4298, %v4294
    %v4431 = vpack.c.b16 %v4299, %v4295
    %v4432 = vpack.c.b16 %v4300, %v4296
    %v4433 = vpack.c.b16 %v4301, %v4297
    %v4434 = vpack.c.b16 %v4306, %v4302
    %v4435 = vpack.c.b16 %v4307, %v4303
    %v4436 = vpack.c.b16 %v4308, %v4304
    %v4437 = vpack.c.b16 %v4309, %v4305
    %4566 = vmatprep.subr.bf16.mxu0 %v4339
    %4567 = vmatpush1.bf16.msra.mxu0 %v4338
    %4568 = vmatprep.subr.bf16.mxu0 %v4335
    %4569 = vmatpush1.bf16.msra.mxu0 %v4334
    %4570 = vmatprep.subr.bf16.mxu0 %v4331
    %4571 = vmatpush1.bf16.msra.mxu0 %v4330
    %4572 = vmatprep.subr.bf16.mxu0 %v4327
    %4573 = vmatpush1.bf16.msra.mxu0 %v4326
    %4574 = vmatprep.subr.bf16.mxu0 %v4323
    %4575 = vmatpush1.bf16.msra.mxu0 %v4322
    %4576 = vmatprep.subr.bf16.mxu0 %v4319
    %4577 = vmatpush1.bf16.msra.mxu0 %v4318
    %4578 = vmatprep.subr.bf16.mxu0 %v4315
    %4579 = vmatpush1.bf16.msra.mxu0 %v4314
    %4580 = vmatprep.subr.bf16.mxu0 %v4311
    %4581 = vmatpush1.bf16.msra.mxu0 %v4310
    %4582 = vmatprep.subr.bf16.mxu0 %v4371
    %4583 = vmatpush2.bf16.msra.mxu0 %v4370
    %4584 = vmatprep.subr.bf16.mxu0 %v4367
    %4585 = vmatpush2.bf16.msra.mxu0 %v4366
    %4586 = vmatprep.subr.bf16.mxu0 %v4363
    %4587 = vmatpush2.bf16.msra.mxu0 %v4362
    %4588 = vmatprep.subr.bf16.mxu0 %v4359
    %4589 = vmatpush2.bf16.msra.mxu0 %v4358
    %4590 = vmatprep.subr.bf16.mxu0 %v4355
    %4591 = vmatpush2.bf16.msra.mxu0 %v4354
    %4592 = vmatprep.subr.bf16.mxu0 %v4351
    %4593 = vmatpush2.bf16.msra.mxu0 %v4350
    %4594 = vmatprep.subr.bf16.mxu0 %v4347
    %4595 = vmatpush2.bf16.msra.mxu0 %v4346
    %4596 = vmatprep.subr.bf16.mxu0 %v4343
    %4597 = vmatpush2.bf16.msra.mxu0 %v4342
    %4598 = vmatprep.mubr.bf16.mxu0 %v3773
    %4599 = vmatmul.mubr.bf16.gmra.mxu0 %v3772
    %v4600 = vpop.f32.mrf.mxu0
    %v4601 = vadd.f32 %v3909, %v4600
    %v4602 = vpop.f32.mrf.mxu0
    %v4603 = vadd.f32 %v3913, %v4602
    %v4604 = vpop.f32.mrf.mxu0
    %v4605 = vpop.f32.mrf.mxu0
    %4606 = vdwg.mxu0
    %4607 = vmatprep.subr.bf16.mxu0 %v4403
    %4608 = vmatpush1.bf16.msra.mxu0 %v4402
    %4609 = vmatprep.subr.bf16.mxu0 %v4399
    %4610 = vmatpush1.bf16.msra.mxu0 %v4398
    %4611 = vmatprep.subr.bf16.mxu0 %v4395
    %4612 = vmatpush1.bf16.msra.mxu0 %v4394
    %4613 = vmatprep.subr.bf16.mxu0 %v4391
    %4614 = vmatpush1.bf16.msra.mxu0 %v4390
    %4615 = vmatprep.subr.bf16.mxu0 %v4387
    %4616 = vmatpush1.bf16.msra.mxu0 %v4386
    %4617 = vmatprep.subr.bf16.mxu0 %v4383
    %4618 = vmatpush1.bf16.msra.mxu0 %v4382
    %4619 = vmatprep.subr.bf16.mxu0 %v4379
    %4620 = vmatpush1.bf16.msra.mxu0 %v4378
    %4621 = vmatprep.subr.bf16.mxu0 %v4375
    %4622 = vmatpush1.bf16.msra.mxu0 %v4374
    %4623 = vmatprep.subr.bf16.mxu0 %v4435
    %4624 = vmatpush2.bf16.msra.mxu0 %v4434
    %4625 = vmatprep.subr.bf16.mxu0 %v4431
    %4626 = vmatpush2.bf16.msra.mxu0 %v4430
    %4627 = vmatprep.subr.bf16.mxu0 %v4427
    %4628 = vmatpush2.bf16.msra.mxu0 %v4426
    %4629 = vmatprep.subr.bf16.mxu0 %v4423
    %4630 = vmatpush2.bf16.msra.mxu0 %v4422
    %4631 = vmatprep.subr.bf16.mxu0 %v4419
    %4632 = vmatpush2.bf16.msra.mxu0 %v4418
    %4633 = vmatprep.subr.bf16.mxu0 %v4415
    %4634 = vmatpush2.bf16.msra.mxu0 %v4414
    %4635 = vmatprep.subr.bf16.mxu0 %v4411
    %4636 = vmatpush2.bf16.msra.mxu0 %v4410
    %4637 = vmatprep.subr.bf16.mxu0 %v4407
    %4638 = vmatpush2.bf16.msra.mxu0 %v4406
    %4639 = vmatprep.mubr.bf16.mxu0 %v3775
    %4640 = vmatmul.mubr.bf16.gmra.mxu0 %v3774
    %v4641 = vpop.f32.mrf.mxu0
    %v4642 = vadd.f32 %v4601, %v4641
    %v4643 = vpop.f32.mrf.mxu0
    %v4644 = vadd.f32 %v4603, %v4643
    %v4645 = vpop.f32.mrf.mxu0
    %v4646 = vpop.f32.mrf.mxu0
    %4647 = vdwg.mxu0
    %4648 = vmatprep.subr.bf16.mxu0 %v4341
    %4649 = vmatpush1.bf16.msra.mxu0 %v4340
    %4650 = vmatprep.subr.bf16.mxu0 %v4337
    %4651 = vmatpush1.bf16.msra.mxu0 %v4336
    %4652 = vmatprep.subr.bf16.mxu0 %v4333
    %4653 = vmatpush1.bf16.msra.mxu0 %v4332
    %4654 = vmatprep.subr.bf16.mxu0 %v4329
    %4655 = vmatpush1.bf16.msra.mxu0 %v4328
    %4656 = vmatprep.subr.bf16.mxu0 %v4325
    %4657 = vmatpush1.bf16.msra.mxu0 %v4324
    %4658 = vmatprep.subr.bf16.mxu0 %v4321
    %4659 = vmatpush1.bf16.msra.mxu0 %v4320
    %4660 = vmatprep.subr.bf16.mxu0 %v4317
    %4661 = vmatpush1.bf16.msra.mxu0 %v4316
    %4662 = vmatprep.subr.bf16.mxu0 %v4313
    %4663 = vmatpush1.bf16.msra.mxu0 %v4312
    %4664 = vmatprep.subr.bf16.mxu0 %v4373
    %4665 = vmatpush2.bf16.msra.mxu0 %v4372
    %4666 = vmatprep.subr.bf16.mxu0 %v4369
    %4667 = vmatpush2.bf16.msra.mxu0 %v4368
    %4668 = vmatprep.subr.bf16.mxu0 %v4365
    %4669 = vmatpush2.bf16.msra.mxu0 %v4364
    %4670 = vmatprep.subr.bf16.mxu0 %v4361
    %4671 = vmatpush2.bf16.msra.mxu0 %v4360
    %4672 = vmatprep.subr.bf16.mxu0 %v4357
    %4673 = vmatpush2.bf16.msra.mxu0 %v4356
    %4674 = vmatprep.subr.bf16.mxu0 %v4353
    %4675 = vmatpush2.bf16.msra.mxu0 %v4352
    %4676 = vmatprep.subr.bf16.mxu0 %v4349
    %4677 = vmatpush2.bf16.msra.mxu0 %v4348
    %4678 = vmatprep.subr.bf16.mxu0 %v4345
    %4679 = vmatpush2.bf16.msra.mxu0 %v4344
    %4680 = vmatprep.mubr.bf16.mxu0 %v3773
    %4681 = vmatmul.mubr.bf16.gmra.mxu0 %v3772
    %v4682 = vpop.f32.mrf.mxu0
    %v4683 = vadd.f32 %v3917, %v4682
    %v4684 = vpop.f32.mrf.mxu0
    %v4685 = vadd.f32 %v3921, %v4684
    %v4686 = vpop.f32.mrf.mxu0
    %v4687 = vpop.f32.mrf.mxu0
    %4688 = vdwg.mxu0
    %4689 = vmatprep.subr.bf16.mxu0 %v4405
    %4690 = vmatpush1.bf16.msra.mxu0 %v4404
    %4691 = vmatprep.subr.bf16.mxu0 %v4401
    %4692 = vmatpush1.bf16.msra.mxu0 %v4400
    %4693 = vmatprep.subr.bf16.mxu0 %v4397
    %4694 = vmatpush1.bf16.msra.mxu0 %v4396
    %4695 = vmatprep.subr.bf16.mxu0 %v4393
    %4696 = vmatpush1.bf16.msra.mxu0 %v4392
    %4697 = vmatprep.subr.bf16.mxu0 %v4389
    %4698 = vmatpush1.bf16.msra.mxu0 %v4388
    %4699 = vmatprep.subr.bf16.mxu0 %v4385
    %4700 = vmatpush1.bf16.msra.mxu0 %v4384
    %4701 = vmatprep.subr.bf16.mxu0 %v4381
    %4702 = vmatpush1.bf16.msra.mxu0 %v4380
    %4703 = vmatprep.subr.bf16.mxu0 %v4377
    %4704 = vmatpush1.bf16.msra.mxu0 %v4376
    %4705 = vmatprep.subr.bf16.mxu0 %v4437
    %4706 = vmatpush2.bf16.msra.mxu0 %v4436
    %4707 = vmatprep.subr.bf16.mxu0 %v4433
    %4708 = vmatpush2.bf16.msra.mxu0 %v4432
    %4709 = vmatprep.subr.bf16.mxu0 %v4429
    %4710 = vmatpush2.bf16.msra.mxu0 %v4428
    %4711 = vmatprep.subr.bf16.mxu0 %v4425
    %4712 = vmatpush2.bf16.msra.mxu0 %v4424
    %4713 = vmatprep.subr.bf16.mxu0 %v4421
    %4714 = vmatpush2.bf16.msra.mxu0 %v4420
    %4715 = vmatprep.subr.bf16.mxu0 %v4417
    %4716 = vmatpush2.bf16.msra.mxu0 %v4416
    %4717 = vmatprep.subr.bf16.mxu0 %v4413
    %4718 = vmatpush2.bf16.msra.mxu0 %v4412
    %4719 = vmatprep.subr.bf16.mxu0 %v4409
    %4720 = vmatpush2.bf16.msra.mxu0 %v4408
    %4721 = vmatprep.mubr.bf16.mxu0 %v3775
    %4722 = vmatmul.mubr.bf16.gmra.mxu0 %v3774
    %v4723 = vpop.f32.mrf.mxu0
    %v4724 = vadd.f32 %v4683, %v4723
    %v4725 = vpop.f32.mrf.mxu0
    %v4726 = vadd.f32 %v4685, %v4725
    %v4727 = vpop.f32.mrf.mxu0
    %v4728 = vpop.f32.mrf.mxu0
    %4729 = vdwg.mxu0
    %v4730 = vmin.f32 %v4642, 20.0
    %v4731 = vmin.f32 %v4644, 20.0
    %v4732 = vmin.f32 %v4724, 20.0
    %v4733 = vmin.f32 %v4726, 20.0
    %v4734 = vmul.f32 %v4730, 1.442695
    %v4735 = vpow.pop %v4734
    %v4736 = vmul.f32 %v4731, 1.442695
    %v4737 = vpow.pop %v4736
    %v4738 = vmul.f32 %v4732, 1.442695
    %v4739 = vpow.pop %v4738
    %v4740 = vmul.f32 %v4733, 1.442695
    %v4741 = vpow.pop %v4740
    %v4742 = vadd.f32 %v4735, 1.0
    %v4743 = vadd.f32 %v4737, 1.0
    %v4744 = vadd.f32 %v4739, 1.0
    %v4745 = vadd.f32 %v4741, 1.0
    %v4746 = vmul.f32 %v4742, %v4742
    %v4747 = vmul.f32 %v4743, %v4743
    %v4748 = vmul.f32 %v4744, %v4744
    %v4749 = vmul.f32 %v4745, %v4745
    %v4750 = vsub.f32 %v4746, 1.0
    %v4751 = vsub.f32 %v4747, 1.0
    %v4752 = vsub.f32 %v4748, 1.0
    %v4753 = vsub.f32 %v4749, 1.0
    %v4754 = vadd.f32 %v4746, 1.0
    %v4755 = vadd.f32 %v4747, 1.0
    %v4756 = vadd.f32 %v4748, 1.0
    %v4757 = vadd.f32 %v4749, 1.0
    %v4758 = vrcp.pop %v4754
    %v4759 = vrcp.pop %v4755
    %v4760 = vrcp.pop %v4756
    %v4761 = vrcp.pop %v4757
    %v4762 = vmul.f32 %v4750, %v4758
    %v4763 = vmul.f32 %v4751, %v4759
    %v4764 = vmul.f32 %v4752, %v4760
    %v4765 = vmul.f32 %v4753, %v4761
    %v4766 = vmul.f32 %v4642, %v4762
    %v4767 = vmul.f32 %v4644, %v4763
    %v4768 = vmul.f32 %v4724, %v4764
    %v4769 = vmul.f32 %v4726, %v4765
    %v4770 = vadd.f32 %v4766, %v2770
    %v4771 = vadd.f32 %v4767, %v2771
    %v4772 = vadd.f32 %v4768, %v2772
    %v4773 = vadd.f32 %v4769, %v2773
    %v4774 = vld [vmem:[%s15] sm:$0xf]
    %v4776 = vlaneseq
    %v4777 = vshrl.u32 %v4776, 7
    %v4778 = vsub.s32 0, %v4777
    %v4779 = vrot.slane %v4774, %v4778
    %v4780 = vlaneseq
    %v4781 = vshrl.u32 %v4780, 7
    %v4782 = vsub.s32 1, %v4781
    %v4783 = vrot.slane %v4774, %v4782
    %v4784 = vlaneseq
    %v4785 = vshrl.u32 %v4784, 7
    %v4786 = vsub.s32 2, %v4785
    %v4787 = vrot.slane %v4774, %v4786
    %v4788 = vlaneseq
    %v4789 = vshrl.u32 %v4788, 7
    %v4790 = vsub.s32 3, %v4789
    %v4791 = vrot.slane %v4774, %v4790
    %v4796 = vmul.f32 %v4770, %v4779
    %v4797 = vmul.f32 %v4771, %v4783
    %v4798 = vmul.f32 %v4772, %v4787
    %v4799 = vmul.f32 %v4773, %v4791
    %v4800 = vadd.f32 %v4796, %v4797
    %v4801 = vadd.f32 %v4800, %v4798
    %v4802 = vadd.f32 %v4801, %v4799
    %4803 = vadd.xlane.f32.xlu0 %v4802
    %v4804 = vpop.xlane.xlu0 %4803
    %v4805 = vld [vmem:[#allocation3] sm:$0x1]
    %v4807 = vlaneseq
    %v4808 = vshrl.u32 %v4807, 7
    %v4809 = vsub.s32 0, %v4808
    %v4810 = vrot.slane %v4805, %v4809
    %v4812 = vadd.f32 %v4804, %v4810
    %4814 = vrot.lane.b32.xlu0 %v4812, 1
    %v4815 = vpop.permute.xlu0 %4814
    %vm4817 = vcmask 15368
    %4818 = vst.msk [vmem:[%s17] sm:$0xff] %vm4817, %v4815
    // Predicated region
    $region98: #{tpu_custom_call.1} parent=1 // pred_check
      _
    $region99: #{tpu_custom_call.1} parent=1 // pred_check_branch
      %4820 = sbr.rel (0) target = $region101
    $region100: #{tpu_custom_call.1} parent=1 // pred_region
      _
    $region101: #{tpu_custom_call.1} parent=1 // pred_fallthru
      _
    // Predicated region
    $region102: #{tpu_custom_call.1} parent=1 // pred_check
      _
    $region103: #{tpu_custom_call.1} parent=1 // pred_check_branch
      %4822 = sbr.rel (0) target = $region105
    $region104: #{tpu_custom_call.1} parent=1 // pred_region
      _
    $region105: #{tpu_custom_call.1} parent=1 // pred_fallthru
      _
    %4823 = vsyncpa [#allocation5], 1
    %4824 = vsyncpa [#allocation7], 1
    %4825 = vsyncpa [#allocation10], 1
    %4826 = vsyncpa [#allocation13], 1

</llo_original>
